<compile_context>
chip_gen: v7x
topology: tpu7x:2x2x1
jax: 0.10.0
libtpu: 0.0.40
codegen_flags: <defaults>
</compile_context>

<pallas_src>
import functools

import numpy as np

import jax
import jax.numpy as jnp
from jax import lax
from jax.experimental import pallas as pl
from jax.experimental.pallas import tpu as pltpu


# ----------------------------------------------------------------------------
# Fused Pallas kernel (one grid step == BT samples)
# ----------------------------------------------------------------------------

def _lenet_kernel(x_ref, w1_ref, b1_ref, sh1a_ref, sh1b_ref, sv1e_ref, sv1o_ref,
                  w2_ref, b2_ref, sh2a_ref, sh2b_ref, sv2e_ref, sv2o_ref,
                  wf1_ref, bf1_ref, wf2_ref, bf2_ref, wf3_ref, bf3_ref,
                  out_ref, x1_ref, x2_ref):
    f32 = jnp.float32
    bt = x_ref.shape[0]            # samples per grid step
    wc = x_ref.shape[2]            # 28 * c_in
    wa1 = sh1a_ref.shape[1]        # 12 * 6  (pool1 row width)
    wa2 = sh2a_ref.shape[1]        # 4 * 16  (pool2 row width)

    def mm(a, b):
        return jnp.dot(a, b, preferred_element_type=f32)

    # ---- conv1 (5x5, c_in -> 6) + ReLU: stack 5 kernel-row-shifted copies of
    # ---- the input, then ONE banded-weight matmul for the whole batch tile.
    for i in range(5):
        x1_ref[:, :, i * wc:(i + 1) * wc] = x_ref[:, i:i + 24, :]
    y1 = mm(x1_ref[...].reshape(bt * 24, 5 * wc), w1_ref[...]) + b1_ref[...]
    y1 = jnp.maximum(y1, 0.0)                                      # (bt*24, 144)

    # ---- pool1 (2x2 max) as exact 0/1 selection matmuls (precomputed) -------
    h1 = jnp.maximum(mm(y1, sh1a_ref[...]), mm(y1, sh1b_ref[...]))  # (bt*24, 72)
    a1 = jnp.maximum(mm(sv1e_ref[...], h1), mm(sv1o_ref[...], h1))  # (bt*12, 72)
    a1 = a1.reshape(bt, 12, wa1)

    # ---- conv2 (5x5, 6 -> 16) + ReLU: same banded-matmul structure ----------
    for i in range(5):
        x2_ref[:, :, i * wa1:(i + 1) * wa1] = a1[:, i:i + 8, :]
    y2 = mm(x2_ref[...].reshape(bt * 8, 5 * wa1), w2_ref[...]) + b2_ref[...]
    y2 = jnp.maximum(y2, 0.0)                                      # (bt*8, 128)

    # ---- pool2 (2x2 max) -----------------------------------------------------
    h2 = jnp.maximum(mm(y2, sh2a_ref[...]), mm(y2, sh2b_ref[...]))  # (bt*8, 64)
    p2 = jnp.maximum(mm(sv2e_ref[...], h2), mm(sv2o_ref[...], h2))  # (bt*4, 64)
    p2 = p2.reshape(bt, 4, wa2)

    # ---- FC stack, batched over bt; fc1 = 4 accumulating matmuls (no concat)
    z = bf1_ref[...] + mm(p2[:, 0, :], wf1_ref[0])
    for h in range(1, 4):
        z = z + mm(p2[:, h, :], wf1_ref[h])
    z = jnp.maximum(z, 0.0)                                        # (bt, 120)
    z = jnp.maximum(mm(z, wf2_ref[...]) + bf2_ref[...], 0.0)       # (bt, 84)
    out_ref[...] = mm(z, wf3_ref[...]) + bf3_ref[...]              # (bt, 128)


# ----------------------------------------------------------------------------
# Parameters (PyTorch layout) + one-time preprocessing
# ----------------------------------------------------------------------------

def init_lenet_params(key, in_channels=1, num_classes=10):
    def uniform(k, shape, fan_in):
        bound = 1.0 / jnp.sqrt(jnp.asarray(fan_in, jnp.float32))
        return jax.random.uniform(k, shape, jnp.float32, -bound, bound)

    ks = jax.random.split(key, 10)
    p = {}
    p["conv1_w"] = uniform(ks[0], (6, in_channels, 5, 5), in_channels * 25)
    p["conv1_b"] = uniform(ks[1], (6,), in_channels * 25)
    p["conv2_w"] = uniform(ks[2], (16, 6, 5, 5), 6 * 25)
    p["conv2_b"] = uniform(ks[3], (16,), 6 * 25)
    p["fc1_w"] = uniform(ks[4], (120, 256), 256)
    p["fc1_b"] = uniform(ks[5], (120,), 256)
    p["fc2_w"] = uniform(ks[6], (84, 120), 120)
    p["fc2_b"] = uniform(ks[7], (84,), 120)
    p["fc_w"] = uniform(ks[8], (num_classes, 84), 84)
    p["fc_b"] = uniform(ks[9], (num_classes,), 84)
    return p


def prepare_lenet_params(params, batch_tile=8):
    """One-time weight preprocessing (call once at init, not per forward).

    Builds banded conv weight matrices, pooling selection matrices, and
    reordered/padded FC weights for the fused kernel.  batch_tile is the
    number of samples processed per grid step (multiple of 8 recommended).
    """
    conv1_w = np.asarray(params["conv1_w"], np.float32)   # (6, c_in, 5, 5)
    conv1_b = np.asarray(params["conv1_b"], np.float32)
    conv2_w = np.asarray(params["conv2_w"], np.float32)   # (16, 6, 5, 5)
    conv2_b = np.asarray(params["conv2_b"], np.float32)
    fc1_w = np.asarray(params["fc1_w"], np.float32)       # (120, 256)
    fc1_b = np.asarray(params["fc1_b"], np.float32)
    fc2_w = np.asarray(params["fc2_w"], np.float32)       # (84, 120)
    fc2_b = np.asarray(params["fc2_b"], np.float32)
    fc_w = np.asarray(params["fc_w"], np.float32)         # (nc, 84)
    fc_b = np.asarray(params["fc_b"], np.float32)

    oc1, c_in, kh, kw = conv1_w.shape
    oc2 = conv2_w.shape[0]
    n_fc1 = fc1_w.shape[0]
    n_fc2 = fc2_w.shape[0]
    num_classes = fc_w.shape[0]
    assert (kh, kw) == (5, 5) and conv2_w.shape[1:] == (oc1, 5, 5)
    assert fc1_w.shape[1] == oc2 * 16, "fc1 expects a 4x4 spatial map (28x28 input)"
    bt = int(batch_tile)
    n_pad = int(pl.cdiv(max(num_classes, 1), 128) * 128)

    # conv1 as one banded (Toeplitz-over-width) matmul:
    #   w1[i*28*c + (ow+j)*c + cc, ow*6 + oc] = conv1_w[oc, cc, i, j]
    w1 = np.zeros((5 * 28 * c_in, 24 * oc1), np.float32)
    for i in range(5):
        for j in range(5):
            blk = conv1_w[:, :, i, j].T            # (c_in, oc1)
            for ow in range(24):
                r0 = i * 28 * c_in + (ow + j) * c_in
                w1[r0:r0 + c_in, ow * oc1:(ow + 1) * oc1] = blk
    b1 = np.tile(conv1_b, 24).reshape(1, 24 * oc1)

    # conv2 likewise:  input rows are pool1 rows laid out as (w*6 + c) lanes.
    w2 = np.zeros((5 * 12 * oc1, 8 * oc2), np.float32)
    for i in range(5):
        for j in range(5):
            blk = conv2_w[:, :, i, j].T            # (oc1, oc2)
            for ow in range(8):
                r0 = i * 12 * oc1 + (ow + j) * oc1
                w2[r0:r0 + oc1, ow * oc2:(ow + 1) * oc2] = blk
    b2 = np.tile(conv2_b, 8).reshape(1, 8 * oc2)

    # Horizontal-pool selection matrices (lane pairs), exact 0/1 in f32.
    def h_sel(w_out, c):
        q = np.arange(w_out * c)
        src = 2 * (q // c) * c + (q % c)
        a = np.zeros((2 * w_out * c, w_out * c), np.float32)
        b = np.zeros_like(a)
        a[src, q] = 1.0
        b[src + c, q] = 1.0
        return a, b

    # Vertical-pool selection matrices (row pairs within each sample of a tile).
    def v_sel(h_out, tile):
        r = np.arange(tile * h_out)
        src = (r // h_out) * (2 * h_out) + 2 * (r % h_out)
        a = np.zeros((tile * h_out, tile * 2 * h_out), np.float32)
        b = np.zeros_like(a)
        a[r, src] = 1.0
        b[r, src + 1] = 1.0
        return a, b

    sh1a, sh1b = h_sel(12, oc1)      # (144, 72)
    sh2a, sh2b = h_sel(4, oc2)       # (128, 64)
    sv1e, sv1o = v_sel(12, bt)       # (bt*12, bt*24)
    sv2e, sv2o = v_sel(4, bt)        # (bt*4,  bt*8)

    # fc1 reordered for the kernel's (h, w, c) traversal and split per h so the
    # kernel can accumulate 4 matmuls: wf1[h, w*oc2 + c, n] = fc1_w[n, c*16 + h*4 + w].
    wf1 = (fc1_w.reshape(n_fc1, oc2, 4, 4)
           .transpose(2, 3, 1, 0).reshape(4, 4 * oc2, n_fc1))
    bf1 = fc1_b.reshape(1, n_fc1)
    wf2 = fc2_w.T
    bf2 = fc2_b.reshape(1, n_fc2)
    # Head: transpose + zero-pad to 128 lanes so the only HBM store is lane-dense.
    wf3 = np.zeros((fc_w.shape[1], n_pad), np.float32)
    wf3[:, :num_classes] = fc_w.T
    bf3 = np.zeros((1, n_pad), np.float32)
    bf3[0, :num_classes] = fc_b

    prepared = dict(w1=w1, b1=b1, sh1a=sh1a, sh1b=sh1b, sv1e=sv1e, sv1o=sv1o,
                    w2=w2, b2=b2, sh2a=sh2a, sh2b=sh2b, sv2e=sv2e, sv2o=sv2o,
                    wf1=wf1, bf1=bf1, wf2=wf2, bf2=bf2, wf3=wf3, bf3=bf3)
    return {k: jnp.asarray(v) for k, v in prepared.items()}


# ----------------------------------------------------------------------------
# Forward pass
# ----------------------------------------------------------------------------

@functools.partial(jax.jit, static_argnames=("num_classes",))
def lenet_forward(prepared, x, *, num_classes=10):
    """x: (B, in_channels, 28, 28) NCHW float32 -> (B, num_classes)."""
    B, c_in, H, W = x.shape
    assert (H, W) == (28, 28), "LeNet fc1 expects a 28x28 input"
    assert prepared["w1"].shape[0] == 5 * 28 * c_in, "channel mismatch with prepared weights"
    bt = prepared["sv1e"].shape[0] // 12          # batch tile baked into prepared params
    n_pad = prepared["wf3"].shape[1]
    k1 = prepared["w1"].shape[0]                  # 5 * 28 * c_in
    k2 = prepared["w2"].shape[0]                  # 5 * 12 * 6

    # NCHW -> (B, 28, 28*c_in): width(+channel) on lanes.
    x_r = jnp.transpose(x, (0, 2, 3, 1)).reshape(B, 28, 28 * c_in).astype(jnp.float32)
    b_pad = int(pl.cdiv(B, bt) * bt)
    if b_pad != B:
        x_r = jnp.pad(x_r, ((0, b_pad - B), (0, 0), (0, 0)))

    const_names = ("w1", "b1", "sh1a", "sh1b", "sv1e", "sv1o",
                   "w2", "b2", "sh2a", "sh2b", "sv2e", "sv2o",
                   "wf1", "bf1", "wf2", "bf2", "wf3", "bf3")
    consts = [prepared[k] for k in const_names]

    def const_spec(a):
        return pl.BlockSpec(a.shape, lambda g, _n=a.ndim: (0,) * _n)

    out = pl.pallas_call(
        _lenet_kernel,
        out_shape=jax.ShapeDtypeStruct((b_pad, n_pad), jnp.float32),
        grid=(b_pad // bt,),
        in_specs=[pl.BlockSpec((bt, 28, 28 * c_in), lambda g: (g, 0, 0))]
                 + [const_spec(a) for a in consts],
        out_specs=pl.BlockSpec((bt, n_pad), lambda g: (g, 0)),
        scratch_shapes=[
            pltpu.VMEM((bt, 24, k1), jnp.float32),   # conv1 row-stacked input
            pltpu.VMEM((bt, 8, k2), jnp.float32),    # conv2 row-stacked input
        ],
        compiler_params=pltpu.CompilerParams(
            dimension_semantics=("parallel",)),
    )(x_r, *consts)
    return out[:B, :num_classes]


# ----------------------------------------------------------------------------
# Pure-JAX reference (for correctness check only)
# ----------------------------------------------------------------------------

def lenet_reference(params, x):
    def conv(x, w, b):
        y = lax.conv_general_dilated(
            x, w, window_strides=(1, 1), padding="VALID",
            dimension_numbers=("NCHW", "OIHW", "NCHW"))
        return y + b[None, :, None, None]

    def pool(x):
        B, C, H, W = x.shape
        return x.reshape(B, C, H // 2, 2, W // 2, 2).max(axis=(3, 5))

    out = jax.nn.relu(conv(x, params["conv1_w"], params["conv1_b"]))
    out = pool(out)
    out = jax.nn.relu(conv(out, params["conv2_w"], params["conv2_b"]))
    out = pool(out)
    out = out.reshape(out.shape[0], -1)
    out = jax.nn.relu(out @ params["fc1_w"].T + params["fc1_b"])
    out = jax.nn.relu(out @ params["fc2_w"].T + params["fc2_b"])
    return out @ params["fc_w"].T + params["fc_b"]


if __name__ == "__main__":
    key = jax.random.PRNGKey(0)
    pkey, xkey = jax.random.split(key)

    params = init_lenet_params(pkey, in_channels=1, num_classes=10)
    prepared = prepare_lenet_params(params, batch_tile=8)   # one-time weight prep

    # MNIST-like input implied by the module (fc1 expects 16*4*4 = 256 feats).
    # B=16 with batch_tile=8 -> grid of 2 (even), so v7x's two TCs split it.
    x = jax.random.normal(xkey, (16, 1, 28, 28), dtype=jnp.float32)

    out = jax.block_until_ready(lenet_forward(prepared, x, num_classes=10))
    ref = jax.block_until_ready(lenet_reference(params, x))

    assert out.shape == (16, 10), out.shape
    assert jnp.allclose(out, ref, rtol=1e-4, atol=1e-4), (
        "mismatch vs reference: max abs err "
        f"{float(jnp.max(jnp.abs(out - ref)))}")

    print("KERNEL_OK")
</pallas_src>

<mosaic_0001>
module attributes {stable_mosaic.version = 11 : i64} {
  func.func @_lenet_kernel(%arg0: i32, %arg1: memref<8x28x28xf32, #tpu.memory_space<vmem>>, %arg2: memref<140x144xf32, #tpu.memory_space<vmem>>, %arg3: memref<1x144xf32, #tpu.memory_space<vmem>>, %arg4: memref<144x72xf32, #tpu.memory_space<vmem>>, %arg5: memref<144x72xf32, #tpu.memory_space<vmem>>, %arg6: memref<96x192xf32, #tpu.memory_space<vmem>>, %arg7: memref<96x192xf32, #tpu.memory_space<vmem>>, %arg8: memref<360x128xf32, #tpu.memory_space<vmem>>, %arg9: memref<1x128xf32, #tpu.memory_space<vmem>>, %arg10: memref<128x64xf32, #tpu.memory_space<vmem>>, %arg11: memref<128x64xf32, #tpu.memory_space<vmem>>, %arg12: memref<32x64xf32, #tpu.memory_space<vmem>>, %arg13: memref<32x64xf32, #tpu.memory_space<vmem>>, %arg14: memref<4x64x120xf32, #tpu.memory_space<vmem>>, %arg15: memref<1x120xf32, #tpu.memory_space<vmem>>, %arg16: memref<120x84xf32, #tpu.memory_space<vmem>>, %arg17: memref<1x84xf32, #tpu.memory_space<vmem>>, %arg18: memref<84x128xf32, #tpu.memory_space<vmem>>, %arg19: memref<1x128xf32, #tpu.memory_space<vmem>>, %arg20: memref<8x128xf32, #tpu.memory_space<vmem>>, %arg21: memref<8x24x140xf32, #tpu.memory_space<vmem>>, %arg22: memref<8x8x360xf32, #tpu.memory_space<vmem>>) attributes {dimension_semantics = [#tpu.dimension_semantics<parallel>], iteration_bounds = array<i64: 2>, scalar_prefetch = 0 : i64, scratch_operands = 2 : i64, tpu.core_type = #tpu.core_type<tc>, window_params = [{transform_indices = @transform_0, window_bounds = array<i64: 8, 28, 28>}, {pipeline_mode = #tpu.pipeline_mode<synchronous>, transform_indices = @transform_1, window_bounds = array<i64: 140, 144>}, {pipeline_mode = #tpu.pipeline_mode<synchronous>, transform_indices = @transform_2, window_bounds = array<i64: 1, 144>}, {pipeline_mode = #tpu.pipeline_mode<synchronous>, transform_indices = @transform_3, window_bounds = array<i64: 144, 72>}, {pipeline_mode = #tpu.pipeline_mode<synchronous>, transform_indices = @transform_4, window_bounds = array<i64: 144, 72>}, {pipeline_mode = #tpu.pipeline_mode<synchronous>, transform_indices = @transform_5, window_bounds = array<i64: 96, 192>}, {pipeline_mode = #tpu.pipeline_mode<synchronous>, transform_indices = @transform_6, window_bounds = array<i64: 96, 192>}, {pipeline_mode = #tpu.pipeline_mode<synchronous>, transform_indices = @transform_7, window_bounds = array<i64: 360, 128>}, {pipeline_mode = #tpu.pipeline_mode<synchronous>, transform_indices = @transform_8, window_bounds = array<i64: 1, 128>}, {pipeline_mode = #tpu.pipeline_mode<synchronous>, transform_indices = @transform_9, window_bounds = array<i64: 128, 64>}, {pipeline_mode = #tpu.pipeline_mode<synchronous>, transform_indices = @transform_10, window_bounds = array<i64: 128, 64>}, {pipeline_mode = #tpu.pipeline_mode<synchronous>, transform_indices = @transform_11, window_bounds = array<i64: 32, 64>}, {pipeline_mode = #tpu.pipeline_mode<synchronous>, transform_indices = @transform_12, window_bounds = array<i64: 32, 64>}, {pipeline_mode = #tpu.pipeline_mode<synchronous>, transform_indices = @transform_13, window_bounds = array<i64: 4, 64, 120>}, {pipeline_mode = #tpu.pipeline_mode<synchronous>, transform_indices = @transform_14, window_bounds = array<i64: 1, 120>}, {pipeline_mode = #tpu.pipeline_mode<synchronous>, transform_indices = @transform_15, window_bounds = array<i64: 120, 84>}, {pipeline_mode = #tpu.pipeline_mode<synchronous>, transform_indices = @transform_16, window_bounds = array<i64: 1, 84>}, {pipeline_mode = #tpu.pipeline_mode<synchronous>, transform_indices = @transform_17, window_bounds = array<i64: 84, 128>}, {pipeline_mode = #tpu.pipeline_mode<synchronous>, transform_indices = @transform_18, window_bounds = array<i64: 1, 128>}, {transform_indices = @transform_19, window_bounds = array<i64: 8, 128>}]} {
    %c0 = arith.constant 0 : index
    %c0_0 = arith.constant 0 : index
    %c0_1 = arith.constant 0 : index
    %0 = vector.load %arg1[%c0, %c0_0, %c0_1] : memref<8x28x28xf32, #tpu.memory_space<vmem>>, vector<8x24x28xf32>
    %c0_2 = arith.constant 0 : index
    %c0_3 = arith.constant 0 : index
    %c0_4 = arith.constant 0 : index
    %1 = vector.load %arg21[%c0_2, %c0_3, %c0_4] : memref<8x24x140xf32, #tpu.memory_space<vmem>>, vector<8x24x28xf32>
    tpu.vector_store %arg21[%c0_2, %c0_3, %c0_4], %0 {strides = array<i32>} : memref<8x24x140xf32, #tpu.memory_space<vmem>>, vector<8x24x28xf32>,
    %c0_5 = arith.constant 0 : index
    %c1 = arith.constant 1 : index
    %c0_6 = arith.constant 0 : index
    %2 = vector.load %arg1[%c0_5, %c1, %c0_6] : memref<8x28x28xf32, #tpu.memory_space<vmem>>, vector<8x24x28xf32>
    %c0_7 = arith.constant 0 : index
    %c0_8 = arith.constant 0 : index
    %c28 = arith.constant 28 : index
    %3 = vector.load %arg21[%c0_7, %c0_8, %c28] : memref<8x24x140xf32, #tpu.memory_space<vmem>>, vector<8x24x28xf32>
    tpu.vector_store %arg21[%c0_7, %c0_8, %c28], %2 {strides = array<i32>} : memref<8x24x140xf32, #tpu.memory_space<vmem>>, vector<8x24x28xf32>,
    %c0_9 = arith.constant 0 : index
    %c2 = arith.constant 2 : index
    %c0_10 = arith.constant 0 : index
    %4 = vector.load %arg1[%c0_9, %c2, %c0_10] : memref<8x28x28xf32, #tpu.memory_space<vmem>>, vector<8x24x28xf32>
    %c0_11 = arith.constant 0 : index
    %c0_12 = arith.constant 0 : index
    %c56 = arith.constant 56 : index
    %5 = vector.load %arg21[%c0_11, %c0_12, %c56] : memref<8x24x140xf32, #tpu.memory_space<vmem>>, vector<8x24x28xf32>
    tpu.vector_store %arg21[%c0_11, %c0_12, %c56], %4 {strides = array<i32>} : memref<8x24x140xf32, #tpu.memory_space<vmem>>, vector<8x24x28xf32>,
    %c0_13 = arith.constant 0 : index
    %c3 = arith.constant 3 : index
    %c0_14 = arith.constant 0 : index
    %6 = vector.load %arg1[%c0_13, %c3, %c0_14] : memref<8x28x28xf32, #tpu.memory_space<vmem>>, vector<8x24x28xf32>
    %c0_15 = arith.constant 0 : index
    %c0_16 = arith.constant 0 : index
    %c84 = arith.constant 84 : index
    %7 = vector.load %arg21[%c0_15, %c0_16, %c84] : memref<8x24x140xf32, #tpu.memory_space<vmem>>, vector<8x24x28xf32>
    tpu.vector_store %arg21[%c0_15, %c0_16, %c84], %6 {strides = array<i32>} : memref<8x24x140xf32, #tpu.memory_space<vmem>>, vector<8x24x28xf32>,
    %c0_17 = arith.constant 0 : index
    %c4 = arith.constant 4 : index
    %c0_18 = arith.constant 0 : index
    %8 = vector.load %arg1[%c0_17, %c4, %c0_18] : memref<8x28x28xf32, #tpu.memory_space<vmem>>, vector<8x24x28xf32>
    %c0_19 = arith.constant 0 : index
    %c0_20 = arith.constant 0 : index
    %c112 = arith.constant 112 : index
    %9 = vector.load %arg21[%c0_19, %c0_20, %c112] : memref<8x24x140xf32, #tpu.memory_space<vmem>>, vector<8x24x28xf32>
    tpu.vector_store %arg21[%c0_19, %c0_20, %c112], %8 {strides = array<i32>} : memref<8x24x140xf32, #tpu.memory_space<vmem>>, vector<8x24x28xf32>,
    %c0_21 = arith.constant 0 : index
    %c0_22 = arith.constant 0 : index
    %c0_23 = arith.constant 0 : index
    %10 = vector.load %arg21[%c0_21, %c0_22, %c0_23] : memref<8x24x140xf32, #tpu.memory_space<vmem>>, vector<8x24x140xf32>
    %11 = vector.shape_cast %10 : vector<8x24x140xf32> to vector<192x140xf32>
    %c0_24 = arith.constant 0 : index
    %c0_25 = arith.constant 0 : index
    %12 = vector.load %arg2[%c0_24, %c0_25] : memref<140x144xf32, #tpu.memory_space<vmem>>, vector<140x144xf32>
    %cst = arith.constant dense<0.000000e+00> : vector<192x144xf32>
    %13 = tpu.matmul %11, %12, %cst {dimension_numbers = #tpu.dot_dimension_numbers<[1], [0], [0], [1], [0, 0, 1, 1], [], []>} : vector<192x140xf32>, vector<140x144xf32>, vector<192x144xf32> -> vector<192x144xf32>
    %c0_26 = arith.constant 0 : index
    %c0_27 = arith.constant 0 : index
    %14 = vector.load %arg3[%c0_26, %c0_27] : memref<1x144xf32, #tpu.memory_space<vmem>>, vector<1x144xf32>
    %15 = vector.broadcast %14 : vector<1x144xf32> to vector<192x144xf32>
    %16 = arith.addf %13, %15 : vector<192x144xf32>
    %cst_28 = arith.constant 0.000000e+00 : f32
    %17 = vector.broadcast %cst_28 : f32 to vector<192x144xf32>
    %18 = arith.maximumf %16, %17 : vector<192x144xf32>
    %c0_29 = arith.constant 0 : index
    %c0_30 = arith.constant 0 : index
    %19 = vector.load %arg4[%c0_29, %c0_30] : memref<144x72xf32, #tpu.memory_space<vmem>>, vector<144x72xf32>
    %cst_31 = arith.constant dense<0.000000e+00> : vector<192x72xf32>
    %20 = tpu.matmul %18, %19, %cst_31 {dimension_numbers = #tpu.dot_dimension_numbers<[1], [0], [0], [1], [0, 0, 1, 1], [], []>} : vector<192x144xf32>, vector<144x72xf32>, vector<192x72xf32> -> vector<192x72xf32>
    %c0_32 = arith.constant 0 : index
    %c0_33 = arith.constant 0 : index
    %21 = vector.load %arg5[%c0_32, %c0_33] : memref<144x72xf32, #tpu.memory_space<vmem>>, vector<144x72xf32>
    %cst_34 = arith.constant dense<0.000000e+00> : vector<192x72xf32>
    %22 = tpu.matmul %18, %21, %cst_34 {dimension_numbers = #tpu.dot_dimension_numbers<[1], [0], [0], [1], [0, 0, 1, 1], [], []>} : vector<192x144xf32>, vector<144x72xf32>, vector<192x72xf32> -> vector<192x72xf32>
    %23 = arith.maximumf %20, %22 : vector<192x72xf32>
    %c0_35 = arith.constant 0 : index
    %c0_36 = arith.constant 0 : index
    %24 = vector.load %arg6[%c0_35, %c0_36] : memref<96x192xf32, #tpu.memory_space<vmem>>, vector<96x192xf32>
    %cst_37 = arith.constant dense<0.000000e+00> : vector<96x72xf32>
    %25 = tpu.matmul %24, %23, %cst_37 {dimension_numbers = #tpu.dot_dimension_numbers<[1], [0], [0], [1], [0, 0, 1, 1], [], []>} : vector<96x192xf32>, vector<192x72xf32>, vector<96x72xf32> -> vector<96x72xf32>
    %c0_38 = arith.constant 0 : index
    %c0_39 = arith.constant 0 : index
    %26 = vector.load %arg7[%c0_38, %c0_39] : memref<96x192xf32, #tpu.memory_space<vmem>>, vector<96x192xf32>
    %cst_40 = arith.constant dense<0.000000e+00> : vector<96x72xf32>
    %27 = tpu.matmul %26, %23, %cst_40 {dimension_numbers = #tpu.dot_dimension_numbers<[1], [0], [0], [1], [0, 0, 1, 1], [], []>} : vector<96x192xf32>, vector<192x72xf32>, vector<96x72xf32> -> vector<96x72xf32>
    %28 = arith.maximumf %25, %27 : vector<96x72xf32>
    %29 = vector.shape_cast %28 : vector<96x72xf32> to vector<8x12x72xf32>
    %30 = vector.extract_strided_slice %29 {offsets = [0, 0, 0], sizes = [8, 8, 72], strides = [1, 1, 1]} : vector<8x12x72xf32> to vector<8x8x72xf32>
    %c0_41 = arith.constant 0 : index
    %c0_42 = arith.constant 0 : index
    %c0_43 = arith.constant 0 : index
    %31 = vector.load %arg22[%c0_41, %c0_42, %c0_43] : memref<8x8x360xf32, #tpu.memory_space<vmem>>, vector<8x8x72xf32>
    tpu.vector_store %arg22[%c0_41, %c0_42, %c0_43], %30 {strides = array<i32>} : memref<8x8x360xf32, #tpu.memory_space<vmem>>, vector<8x8x72xf32>,
    %32 = vector.extract_strided_slice %29 {offsets = [0, 1, 0], sizes = [8, 8, 72], strides = [1, 1, 1]} : vector<8x12x72xf32> to vector<8x8x72xf32>
    %c0_44 = arith.constant 0 : index
    %c0_45 = arith.constant 0 : index
    %c72 = arith.constant 72 : index
    %33 = vector.load %arg22[%c0_44, %c0_45, %c72] : memref<8x8x360xf32, #tpu.memory_space<vmem>>, vector<8x8x72xf32>
    tpu.vector_store %arg22[%c0_44, %c0_45, %c72], %32 {strides = array<i32>} : memref<8x8x360xf32, #tpu.memory_space<vmem>>, vector<8x8x72xf32>,
    %34 = vector.extract_strided_slice %29 {offsets = [0, 2, 0], sizes = [8, 8, 72], strides = [1, 1, 1]} : vector<8x12x72xf32> to vector<8x8x72xf32>
    %c0_46 = arith.constant 0 : index
    %c0_47 = arith.constant 0 : index
    %c144 = arith.constant 144 : index
    %35 = vector.load %arg22[%c0_46, %c0_47, %c144] : memref<8x8x360xf32, #tpu.memory_space<vmem>>, vector<8x8x72xf32>
    tpu.vector_store %arg22[%c0_46, %c0_47, %c144], %34 {strides = array<i32>} : memref<8x8x360xf32, #tpu.memory_space<vmem>>, vector<8x8x72xf32>,
    %36 = vector.extract_strided_slice %29 {offsets = [0, 3, 0], sizes = [8, 8, 72], strides = [1, 1, 1]} : vector<8x12x72xf32> to vector<8x8x72xf32>
    %c0_48 = arith.constant 0 : index
    %c0_49 = arith.constant 0 : index
    %c216 = arith.constant 216 : index
    %37 = vector.load %arg22[%c0_48, %c0_49, %c216] : memref<8x8x360xf32, #tpu.memory_space<vmem>>, vector<8x8x72xf32>
    tpu.vector_store %arg22[%c0_48, %c0_49, %c216], %36 {strides = array<i32>} : memref<8x8x360xf32, #tpu.memory_space<vmem>>, vector<8x8x72xf32>,
    %38 = vector.extract_strided_slice %29 {offsets = [0, 4, 0], sizes = [8, 8, 72], strides = [1, 1, 1]} : vector<8x12x72xf32> to vector<8x8x72xf32>
    %c0_50 = arith.constant 0 : index
    %c0_51 = arith.constant 0 : index
    %c288 = arith.constant 288 : index
    %39 = vector.load %arg22[%c0_50, %c0_51, %c288] : memref<8x8x360xf32, #tpu.memory_space<vmem>>, vector<8x8x72xf32>
    tpu.vector_store %arg22[%c0_50, %c0_51, %c288], %38 {strides = array<i32>} : memref<8x8x360xf32, #tpu.memory_space<vmem>>, vector<8x8x72xf32>,
    %c0_52 = arith.constant 0 : index
    %c0_53 = arith.constant 0 : index
    %c0_54 = arith.constant 0 : index
    %40 = vector.load %arg22[%c0_52, %c0_53, %c0_54] : memref<8x8x360xf32, #tpu.memory_space<vmem>>, vector<8x8x360xf32>
    %41 = vector.shape_cast %40 : vector<8x8x360xf32> to vector<64x360xf32>
    %c0_55 = arith.constant 0 : index
    %c0_56 = arith.constant 0 : index
    %42 = vector.load %arg8[%c0_55, %c0_56] : memref<360x128xf32, #tpu.memory_space<vmem>>, vector<360x128xf32>
    %cst_57 = arith.constant dense<0.000000e+00> : vector<64x128xf32>
    %43 = tpu.matmul %41, %42, %cst_57 {dimension_numbers = #tpu.dot_dimension_numbers<[1], [0], [0], [1], [0, 0, 1, 1], [], []>} : vector<64x360xf32>, vector<360x128xf32>, vector<64x128xf32> -> vector<64x128xf32>
    %c0_58 = arith.constant 0 : index
    %c0_59 = arith.constant 0 : index
    %44 = vector.load %arg9[%c0_58, %c0_59] : memref<1x128xf32, #tpu.memory_space<vmem>>, vector<1x128xf32>
    %45 = vector.broadcast %44 : vector<1x128xf32> to vector<64x128xf32>
    %46 = arith.addf %43, %45 : vector<64x128xf32>
    %cst_60 = arith.constant 0.000000e+00 : f32
    %47 = vector.broadcast %cst_60 : f32 to vector<64x128xf32>
    %48 = arith.maximumf %46, %47 : vector<64x128xf32>
    %c0_61 = arith.constant 0 : index
    %c0_62 = arith.constant 0 : index
    %49 = vector.load %arg10[%c0_61, %c0_62] : memref<128x64xf32, #tpu.memory_space<vmem>>, vector<128x64xf32>
    %cst_63 = arith.constant dense<0.000000e+00> : vector<64x64xf32>
    %50 = tpu.matmul %48, %49, %cst_63 {dimension_numbers = #tpu.dot_dimension_numbers<[1], [0], [0], [1], [0, 0, 1, 1], [], []>} : vector<64x128xf32>, vector<128x64xf32>, vector<64x64xf32> -> vector<64x64xf32>
    %c0_64 = arith.constant 0 : index
    %c0_65 = arith.constant 0 : index
    %51 = vector.load %arg11[%c0_64, %c0_65] : memref<128x64xf32, #tpu.memory_space<vmem>>, vector<128x64xf32>
    %cst_66 = arith.constant dense<0.000000e+00> : vector<64x64xf32>
    %52 = tpu.matmul %48, %51, %cst_66 {dimension_numbers = #tpu.dot_dimension_numbers<[1], [0], [0], [1], [0, 0, 1, 1], [], []>} : vector<64x128xf32>, vector<128x64xf32>, vector<64x64xf32> -> vector<64x64xf32>
    %53 = arith.maximumf %50, %52 : vector<64x64xf32>
    %c0_67 = arith.constant 0 : index
    %c0_68 = arith.constant 0 : index
    %54 = vector.load %arg12[%c0_67, %c0_68] : memref<32x64xf32, #tpu.memory_space<vmem>>, vector<32x64xf32>
    %cst_69 = arith.constant dense<0.000000e+00> : vector<32x64xf32>
    %55 = tpu.matmul %54, %53, %cst_69 {dimension_numbers = #tpu.dot_dimension_numbers<[1], [0], [0], [1], [0, 0, 1, 1], [], []>} : vector<32x64xf32>, vector<64x64xf32>, vector<32x64xf32> -> vector<32x64xf32>
    %c0_70 = arith.constant 0 : index
    %c0_71 = arith.constant 0 : index
    %56 = vector.load %arg13[%c0_70, %c0_71] : memref<32x64xf32, #tpu.memory_space<vmem>>, vector<32x64xf32>
    %cst_72 = arith.constant dense<0.000000e+00> : vector<32x64xf32>
    %57 = tpu.matmul %56, %53, %cst_72 {dimension_numbers = #tpu.dot_dimension_numbers<[1], [0], [0], [1], [0, 0, 1, 1], [], []>} : vector<32x64xf32>, vector<64x64xf32>, vector<32x64xf32> -> vector<32x64xf32>
    %58 = arith.maximumf %55, %57 : vector<32x64xf32>
    %59 = vector.shape_cast %58 : vector<32x64xf32> to vector<8x4x64xf32>
    %c0_73 = arith.constant 0 : index
    %c0_74 = arith.constant 0 : index
    %60 = vector.load %arg15[%c0_73, %c0_74] : memref<1x120xf32, #tpu.memory_space<vmem>>, vector<1x120xf32>
    %61 = vector.extract_strided_slice %59 {offsets = [0, 0, 0], sizes = [8, 1, 64], strides = [1, 1, 1]} : vector<8x4x64xf32> to vector<8x1x64xf32>
    %62 = vector.shape_cast %61 : vector<8x1x64xf32> to vector<8x64xf32>
    %c0_75 = arith.constant 0 : index
    %c0_76 = arith.constant 0 : index
    %c0_77 = arith.constant 0 : index
    %63 = vector.load %arg14[%c0_75, %c0_76, %c0_77] : memref<4x64x120xf32, #tpu.memory_space<vmem>>, vector<1x64x120xf32>
    %64 = vector.shape_cast %63 : vector<1x64x120xf32> to vector<64x120xf32>
    %cst_78 = arith.constant dense<0.000000e+00> : vector<8x120xf32>
    %65 = tpu.matmul %62, %64, %cst_78 {dimension_numbers = #tpu.dot_dimension_numbers<[1], [0], [0], [1], [0, 0, 1, 1], [], []>} : vector<8x64xf32>, vector<64x120xf32>, vector<8x120xf32> -> vector<8x120xf32>
    %66 = vector.broadcast %60 : vector<1x120xf32> to vector<8x120xf32>
    %67 = arith.addf %66, %65 : vector<8x120xf32>
    %68 = vector.extract_strided_slice %59 {offsets = [0, 1, 0], sizes = [8, 1, 64], strides = [1, 1, 1]} : vector<8x4x64xf32> to vector<8x1x64xf32>
    %69 = vector.shape_cast %68 : vector<8x1x64xf32> to vector<8x64xf32>
    %c1_79 = arith.constant 1 : index
    %c0_80 = arith.constant 0 : index
    %c0_81 = arith.constant 0 : index
    %70 = vector.load %arg14[%c1_79, %c0_80, %c0_81] : memref<4x64x120xf32, #tpu.memory_space<vmem>>, vector<1x64x120xf32>
    %71 = vector.shape_cast %70 : vector<1x64x120xf32> to vector<64x120xf32>
    %cst_82 = arith.constant dense<0.000000e+00> : vector<8x120xf32>
    %72 = tpu.matmul %69, %71, %cst_82 {dimension_numbers = #tpu.dot_dimension_numbers<[1], [0], [0], [1], [0, 0, 1, 1], [], []>} : vector<8x64xf32>, vector<64x120xf32>, vector<8x120xf32> -> vector<8x120xf32>
    %73 = arith.addf %67, %72 : vector<8x120xf32>
    %74 = vector.extract_strided_slice %59 {offsets = [0, 2, 0], sizes = [8, 1, 64], strides = [1, 1, 1]} : vector<8x4x64xf32> to vector<8x1x64xf32>
    %75 = vector.shape_cast %74 : vector<8x1x64xf32> to vector<8x64xf32>
    %c2_83 = arith.constant 2 : index
    %c0_84 = arith.constant 0 : index
    %c0_85 = arith.constant 0 : index
    %76 = vector.load %arg14[%c2_83, %c0_84, %c0_85] : memref<4x64x120xf32, #tpu.memory_space<vmem>>, vector<1x64x120xf32>
    %77 = vector.shape_cast %76 : vector<1x64x120xf32> to vector<64x120xf32>
    %cst_86 = arith.constant dense<0.000000e+00> : vector<8x120xf32>
    %78 = tpu.matmul %75, %77, %cst_86 {dimension_numbers = #tpu.dot_dimension_numbers<[1], [0], [0], [1], [0, 0, 1, 1], [], []>} : vector<8x64xf32>, vector<64x120xf32>, vector<8x120xf32> -> vector<8x120xf32>
    %79 = arith.addf %73, %78 : vector<8x120xf32>
    %80 = vector.extract_strided_slice %59 {offsets = [0, 3, 0], sizes = [8, 1, 64], strides = [1, 1, 1]} : vector<8x4x64xf32> to vector<8x1x64xf32>
    %81 = vector.shape_cast %80 : vector<8x1x64xf32> to vector<8x64xf32>
    %c3_87 = arith.constant 3 : index
    %c0_88 = arith.constant 0 : index
    %c0_89 = arith.constant 0 : index
    %82 = vector.load %arg14[%c3_87, %c0_88, %c0_89] : memref<4x64x120xf32, #tpu.memory_space<vmem>>, vector<1x64x120xf32>
    %83 = vector.shape_cast %82 : vector<1x64x120xf32> to vector<64x120xf32>
    %cst_90 = arith.constant dense<0.000000e+00> : vector<8x120xf32>
    %84 = tpu.matmul %81, %83, %cst_90 {dimension_numbers = #tpu.dot_dimension_numbers<[1], [0], [0], [1], [0, 0, 1, 1], [], []>} : vector<8x64xf32>, vector<64x120xf32>, vector<8x120xf32> -> vector<8x120xf32>
    %85 = arith.addf %79, %84 : vector<8x120xf32>
    %cst_91 = arith.constant 0.000000e+00 : f32
    %86 = vector.broadcast %cst_91 : f32 to vector<8x120xf32>
    %87 = arith.maximumf %85, %86 : vector<8x120xf32>
    %c0_92 = arith.constant 0 : index
    %c0_93 = arith.constant 0 : index
    %88 = vector.load %arg16[%c0_92, %c0_93] : memref<120x84xf32, #tpu.memory_space<vmem>>, vector<120x84xf32>
    %cst_94 = arith.constant dense<0.000000e+00> : vector<8x84xf32>
    %89 = tpu.matmul %87, %88, %cst_94 {dimension_numbers = #tpu.dot_dimension_numbers<[1], [0], [0], [1], [0, 0, 1, 1], [], []>} : vector<8x120xf32>, vector<120x84xf32>, vector<8x84xf32> -> vector<8x84xf32>
    %c0_95 = arith.constant 0 : index
    %c0_96 = arith.constant 0 : index
    %90 = vector.load %arg17[%c0_95, %c0_96] : memref<1x84xf32, #tpu.memory_space<vmem>>, vector<1x84xf32>
    %91 = vector.broadcast %90 : vector<1x84xf32> to vector<8x84xf32>
    %92 = arith.addf %89, %91 : vector<8x84xf32>
    %cst_97 = arith.constant 0.000000e+00 : f32
    %93 = vector.broadcast %cst_97 : f32 to vector<8x84xf32>
    %94 = arith.maximumf %92, %93 : vector<8x84xf32>
    %c0_98 = arith.constant 0 : index
    %c0_99 = arith.constant 0 : index
    %95 = vector.load %arg18[%c0_98, %c0_99] : memref<84x128xf32, #tpu.memory_space<vmem>>, vector<84x128xf32>
    %cst_100 = arith.constant dense<0.000000e+00> : vector<8x128xf32>
    %96 = tpu.matmul %94, %95, %cst_100 {dimension_numbers = #tpu.dot_dimension_numbers<[1], [0], [0], [1], [0, 0, 1, 1], [], []>} : vector<8x84xf32>, vector<84x128xf32>, vector<8x128xf32> -> vector<8x128xf32>
    %c0_101 = arith.constant 0 : index
    %c0_102 = arith.constant 0 : index
    %97 = vector.load %arg19[%c0_101, %c0_102] : memref<1x128xf32, #tpu.memory_space<vmem>>, vector<1x128xf32>
    %98 = vector.broadcast %97 : vector<1x128xf32> to vector<8x128xf32>
    %99 = arith.addf %96, %98 : vector<8x128xf32>
    %c0_103 = arith.constant 0 : index
    %c0_104 = arith.constant 0 : index
    %100 = vector.load %arg20[%c0_103, %c0_104] : memref<8x128xf32, #tpu.memory_space<vmem>>, vector<8x128xf32>
    tpu.vector_store %arg20[%c0_103, %c0_104], %99 {strides = array<i32>} : memref<8x128xf32, #tpu.memory_space<vmem>>, vector<8x128xf32>,
    return
  }
  func.func @transform_0(%arg0: i32) -> (i32, i32, i32) {
    %c0_i32 = arith.constant 0 : i32
    %c0_i32_0 = arith.constant 0 : i32
    %c0_i32_1 = arith.constant 0 : i32
    return %arg0, %c0_i32, %c0_i32_0 : i32, i32, i32
  }
  func.func @transform_1(%arg0: i32) -> (i32, i32) {
    %c0_i32 = arith.constant 0 : i32
    %c0_i32_0 = arith.constant 0 : i32
    %c0_i32_1 = arith.constant 0 : i32
    return %c0_i32, %c0_i32_0 : i32, i32
  }
  func.func @transform_2(%arg0: i32) -> (i32, i32) {
    %c0_i32 = arith.constant 0 : i32
    %c0_i32_0 = arith.constant 0 : i32
    %c0_i32_1 = arith.constant 0 : i32
    return %c0_i32, %c0_i32_0 : i32, i32
  }
  func.func @transform_3(%arg0: i32) -> (i32, i32) {
    %c0_i32 = arith.constant 0 : i32
    %c0_i32_0 = arith.constant 0 : i32
    %c0_i32_1 = arith.constant 0 : i32
    return %c0_i32, %c0_i32_0 : i32, i32
  }
  func.func @transform_4(%arg0: i32) -> (i32, i32) {
    %c0_i32 = arith.constant 0 : i32
    %c0_i32_0 = arith.constant 0 : i32
    %c0_i32_1 = arith.constant 0 : i32
    return %c0_i32, %c0_i32_0 : i32, i32
  }
  func.func @transform_5(%arg0: i32) -> (i32, i32) {
    %c0_i32 = arith.constant 0 : i32
    %c0_i32_0 = arith.constant 0 : i32
    %c0_i32_1 = arith.constant 0 : i32
    return %c0_i32, %c0_i32_0 : i32, i32
  }
  func.func @transform_6(%arg0: i32) -> (i32, i32) {
    %c0_i32 = arith.constant 0 : i32
    %c0_i32_0 = arith.constant 0 : i32
    %c0_i32_1 = arith.constant 0 : i32
    return %c0_i32, %c0_i32_0 : i32, i32
  }
  func.func @transform_7(%arg0: i32) -> (i32, i32) {
    %c0_i32 = arith.constant 0 : i32
    %c0_i32_0 = arith.constant 0 : i32
    %c0_i32_1 = arith.constant 0 : i32
    return %c0_i32, %c0_i32_0 : i32, i32
  }
  func.func @transform_8(%arg0: i32) -> (i32, i32) {
    %c0_i32 = arith.constant 0 : i32
    %c0_i32_0 = arith.constant 0 : i32
    %c0_i32_1 = arith.constant 0 : i32
    return %c0_i32, %c0_i32_0 : i32, i32
  }
  func.func @transform_9(%arg0: i32) -> (i32, i32) {
    %c0_i32 = arith.constant 0 : i32
    %c0_i32_0 = arith.constant 0 : i32
    %c0_i32_1 = arith.constant 0 : i32
    return %c0_i32, %c0_i32_0 : i32, i32
  }
  func.func @transform_10(%arg0: i32) -> (i32, i32) {
    %c0_i32 = arith.constant 0 : i32
    %c0_i32_0 = arith.constant 0 : i32
    %c0_i32_1 = arith.constant 0 : i32
    return %c0_i32, %c0_i32_0 : i32, i32
  }
  func.func @transform_11(%arg0: i32) -> (i32, i32) {
    %c0_i32 = arith.constant 0 : i32
    %c0_i32_0 = arith.constant 0 : i32
    %c0_i32_1 = arith.constant 0 : i32
    return %c0_i32, %c0_i32_0 : i32, i32
  }
  func.func @transform_12(%arg0: i32) -> (i32, i32) {
    %c0_i32 = arith.constant 0 : i32
    %c0_i32_0 = arith.constant 0 : i32
    %c0_i32_1 = arith.constant 0 : i32
    return %c0_i32, %c0_i32_0 : i32, i32
  }
  func.func @transform_13(%arg0: i32) -> (i32, i32, i32) {
    %c0_i32 = arith.constant 0 : i32
    %c0_i32_0 = arith.constant 0 : i32
    %c0_i32_1 = arith.constant 0 : i32
    %c0_i32_2 = arith.constant 0 : i32
    return %c0_i32, %c0_i32_0, %c0_i32_1 : i32, i32, i32
  }
  func.func @transform_14(%arg0: i32) -> (i32, i32) {
    %c0_i32 = arith.constant 0 : i32
    %c0_i32_0 = arith.constant 0 : i32
    %c0_i32_1 = arith.constant 0 : i32
    return %c0_i32, %c0_i32_0 : i32, i32
  }
  func.func @transform_15(%arg0: i32) -> (i32, i32) {
    %c0_i32 = arith.constant 0 : i32
    %c0_i32_0 = arith.constant 0 : i32
    %c0_i32_1 = arith.constant 0 : i32
    return %c0_i32, %c0_i32_0 : i32, i32
  }
  func.func @transform_16(%arg0: i32) -> (i32, i32) {
    %c0_i32 = arith.constant 0 : i32
    %c0_i32_0 = arith.constant 0 : i32
    %c0_i32_1 = arith.constant 0 : i32
    return %c0_i32, %c0_i32_0 : i32, i32
  }
  func.func @transform_17(%arg0: i32) -> (i32, i32) {
    %c0_i32 = arith.constant 0 : i32
    %c0_i32_0 = arith.constant 0 : i32
    %c0_i32_1 = arith.constant 0 : i32
    return %c0_i32, %c0_i32_0 : i32, i32
  }
  func.func @transform_18(%arg0: i32) -> (i32, i32) {
    %c0_i32 = arith.constant 0 : i32
    %c0_i32_0 = arith.constant 0 : i32
    %c0_i32_1 = arith.constant 0 : i32
    return %c0_i32, %c0_i32_0 : i32, i32
  }
  func.func @transform_19(%arg0: i32) -> (i32, i32) {
    %c0_i32 = arith.constant 0 : i32
    %c0_i32_0 = arith.constant 0 : i32
    return %arg0, %c0_i32 : i32, i32
  }
}

</mosaic_0001>

<llo_original>
// kernel: lenet_forward.1
$region0: #{lenet_forward.1}
  #allocation0 [shape = 'u32[]', space=smem, size = 0x4, offset = 0x4, fixed_abs, tag = 'smem constant byte address 0x4 - core index']
  #allocation1 [shape = 'u32[144,128]{1,0:T(1,128)}', space=vmem, size = 0x12000, scoped, tag = 'internal scratch']
  #allocation2 [shape = 'f32[8,24,140]{2,1,0:T(8,128)}', space=vmem, size = 0x30000, scoped, tag = 'scratch operand']
  #allocation3 [shape = 'f32[8,8,360]{2,1,0:T(8,128)}', space=vmem, size = 0x18000, scoped, tag = 'scratch operand']
  %s0 = inlined_call_operand.vmem [shape: f32[16,28,28], index: 0, kind: input, shape index: {}]
  %s1 = inlined_call_operand.vmem [shape: f32[140,144], index: 1, kind: input, shape index: {}]
  %s2 = inlined_call_operand.vmem [shape: f32[1,144], index: 2, kind: input, shape index: {}]
  %s3 = inlined_call_operand.hbm [shape: f32[144,72], index: 3, kind: input, shape index: {}]
  %s4 = inlined_call_operand.hbm [shape: f32[144,72], index: 4, kind: input, shape index: {}]
  %s5 = inlined_call_operand.vmem [shape: f32[96,192], index: 5, kind: input, shape index: {}]
  %s6 = inlined_call_operand.hbm [shape: f32[96,192], index: 6, kind: input, shape index: {}]
  %s7 = inlined_call_operand.vmem [shape: f32[360,128], index: 7, kind: input, shape index: {}]
  %s8 = inlined_call_operand.vmem [shape: f32[1,128], index: 8, kind: input, shape index: {}]
  %s9 = inlined_call_operand.vmem [shape: f32[128,64], index: 9, kind: input, shape index: {}]
  %s10 = inlined_call_operand.vmem [shape: f32[128,64], index: 10, kind: input, shape index: {}]
  %s11 = inlined_call_operand.vmem [shape: f32[32,64], index: 11, kind: input, shape index: {}]
  %s12 = inlined_call_operand.vmem [shape: f32[32,64], index: 12, kind: input, shape index: {}]
  %s13 = inlined_call_operand.vmem [shape: f32[4,64,120], index: 13, kind: input, shape index: {}]
  %s14 = inlined_call_operand.vmem [shape: f32[1,120], index: 14, kind: input, shape index: {}]
  %s15 = inlined_call_operand.vmem [shape: f32[120,84], index: 15, kind: input, shape index: {}]
  %s16 = inlined_call_operand.vmem [shape: f32[1,84], index: 16, kind: input, shape index: {}]
  %s17 = inlined_call_operand.hbm [shape: f32[84,128], index: 17, kind: input, shape index: {}]
  %s18 = inlined_call_operand.vmem [shape: f32[1,128], index: 18, kind: input, shape index: {}]
  %s19 = inlined_call_operand.hbm [shape: f32[16,128], index: 19, kind: output, shape index: {}]
  %s20 = sld [smem:[#allocation0]]
  $region125: #{lenet_forward.1} parent=0
    _
  %s22 = ssub.s32 1, %s20
  %s23 = scalar_select 0, %s22, %s20
  $region1: #{lenet_forward.1} parent=0
    #allocation4 [shape = 'u8[73728]{0}', space=vmem, size = 0x12000, scoped, tag = 'input window, operand 3, single buffered']
    #allocation5 [shape = 's32[2]{0}', space=sflag, size = 0x8, scoped, tag = 'scoped memory for lenet_forward.1']
    #allocation6 [shape = 's32[2]{0}', space=sflag, size = 0x8, scoped, tag = 'scoped memory for lenet_forward.1']
    #allocation7 [shape = 'u8[73728]{0}', space=vmem, size = 0x12000, scoped, tag = 'input window, operand 4, single buffered']
    #allocation8 [shape = 's32[1]{0}', space=sflag, size = 0x4, scoped, tag = 'scoped memory for lenet_forward.1']
    #allocation9 [shape = 'u8[98304]{0}', space=vmem, size = 0x18000, scoped, tag = 'input window, operand 6, single buffered']
    #allocation10 [shape = 'u8[45056]{0}', space=vmem, size = 0xb000, scoped, tag = 'input window, operand 17, single buffered']
    #allocation11 [shape = 's32[1]{0}', space=sflag, size = 0x4, scoped, tag = 'scoped memory for lenet_forward.1']
    #allocation12 [shape = 'u8[8192]{0}', space=vmem, size = 0x2000, scoped, tag = 'output window, operand 0']
    %24 = vsyncpa [#allocation5], 0
    %25 = vsyncpa [#allocation8], 0
    %26 = vsyncpa [#allocation11], 0
    %27 = vsyncpa [#allocation6], 0
    %s28 = scalar_lea.sflag [#allocation6], 1
    %29 = vsyncpa %s28, 0
    loop: start=0, step=1, limit=4
    $region2: #{lenet_forward.1} parent=1 // loop_pre_header
      _
    $region3: #{lenet_forward.1} parent=1 // loop_header
      %s31 = sphi 0, %s35
      %p32 = scmp.ge.s32.totalorder %s31, 4
      %s41 = sphi 0, %s43
      %s44 = sphi 0, %s41
      %s45 = sphi 0, %s44
      %s61 = sphi 0, %s45
      %s65 = sphi 0, %s65
      %s67 = sphi 0, %s65
      %s68 = sphi 0, %s67
      %s82 = sphi 0, %s68
      %s86 = sphi 0, %s86
      %s88 = sphi 0, %s86
      %s89 = sphi 0, %s88
      %s103 = sphi 0, %s89
      %s107 = sphi 0, %s107
      %s109 = sphi 0, %s107
      %s110 = sphi 0, %s109
      %s124 = sphi 0, %s110
      %s128 = sphi 0, %s128
      %s130 = sphi 0, %s128
      %s131 = sphi 0, %s130
      %s145 = sphi 0, %s131
      %s149 = sphi 0, %s149
      %s151 = sphi 0, %s149
      %s152 = sphi 0, %s151
      %s166 = sphi 0, %s152
      %s170 = sphi 0, %s170
      %s172 = sphi 0, %s170
      %s173 = sphi 0, %s172
      %s187 = sphi 0, %s173
      %s191 = sphi 0, %s191
      %s193 = sphi 0, %s191
      %s194 = sphi 0, %s193
      %s208 = sphi 0, %s194
      %s212 = sphi 0, %s212
      %s214 = sphi 0, %s212
      %s215 = sphi 0, %s214
      %s229 = sphi 0, %s215
      %s233 = sphi 0, %s233
      %s235 = sphi 0, %s233
      %s236 = sphi 0, %s235
      %s250 = sphi 0, %s236
      %s254 = sphi 0, %s254
      %s256 = sphi 0, %s254
      %s257 = sphi 0, %s256
      %s271 = sphi 0, %s257
      %s275 = sphi 0, %s275
      %s277 = sphi 0, %s275
      %s278 = sphi 0, %s277
      %s292 = sphi 0, %s278
      %s296 = sphi 0, %s296
      %s298 = sphi 0, %s296
      %s299 = sphi 0, %s298
      %s313 = sphi 0, %s299
      %s317 = sphi 0, %s317
      %s319 = sphi 0, %s317
      %s320 = sphi 0, %s319
      %s334 = sphi 0, %s320
      %s338 = sphi 0, %s338
      %s340 = sphi 0, %s338
      %s341 = sphi 0, %s340
      %s355 = sphi 0, %s341
      %s359 = sphi 0, %s359
      %s361 = sphi 0, %s359
      %s362 = sphi 0, %s361
      %s376 = sphi 0, %s362
      %s380 = sphi 0, %s380
      %s382 = sphi 0, %s380
      %s383 = sphi 0, %s382
      %s397 = sphi 0, %s383
      %s401 = sphi 0, %s401
      %s403 = sphi 0, %s401
      %s404 = sphi 0, %s403
      %s418 = sphi 0, %s404
      %s422 = sphi 0, %s422
      %s424 = sphi 0, %s422
      %s425 = sphi 0, %s424
      %s439 = sphi 0, %s425
      %s445 = sphi 0, %s447
      %s448 = sphi 0, %s445
      %s449 = sphi 0, %s448
      %s465 = sphi 0, %s449
    $region4: #{lenet_forward.1} parent=1 // loop_header_branch
      %34 = sbr.rel (%p32) target = $region8
    $region5: #{lenet_forward.1} parent=1 // loop_body
      %s36 = ssub.s32 %s31, 1
      %s37 = ssub.s32 %s31, 2
      %s38 = sadd.s32 %s31, 1
      %s39 = ssub.s32 %s31, %s38
      %p40 = scmp.eq.s32.totalorder %s39, 0
      %s42 = sadd.s32 %s41, 1
      %s43 = scalar_select %p40, %s41, %s42
      %p46 = pneg %p40
      %p47 = scmp.eq.s32.totalorder %s31, 1
      %p48 = por %p46, %p47
      %p49 = scmp.ne.s32.totalorder %s41, %s44
      %p50 = scmp.eq.s32.totalorder %s31, 0
      %p51 = por %p49, %p50
      %p52 = scmp.ne.s32.totalorder %s41, %s44
      %p53 = scmp.eq.s32.totalorder %s36, 1
      %p54 = por %p52, %p53
      %p55 = scmp.ne.s32.totalorder %s44, %s45
      %p56 = scmp.eq.s32.totalorder %s36, 0
      %p57 = por %p55, %p56
      %p58 = scmp.ne.s32.totalorder %s44, %s45
      %p59 = scmp.eq.s32.totalorder %s37, 1
      %p60 = por %p58, %p59
      %p62 = scmp.ne.s32.totalorder %s45, %s61
      %p63 = scmp.eq.s32.totalorder %s37, 0
      %p64 = por %p62, %p63
      %s66 = sadd.s32 %s65, 1
      %p69 = scmp.eq.s32.totalorder %s31, 1
      %p70 = scmp.ne.s32.totalorder %s65, %s67
      %p71 = scmp.eq.s32.totalorder %s31, 0
      %p72 = por %p70, %p71
      %p73 = scmp.ne.s32.totalorder %s65, %s67
      %p74 = scmp.eq.s32.totalorder %s36, 1
      %p75 = por %p73, %p74
      %p76 = scmp.ne.s32.totalorder %s67, %s68
      %p77 = scmp.eq.s32.totalorder %s36, 0
      %p78 = por %p76, %p77
      %p79 = scmp.ne.s32.totalorder %s67, %s68
      %p80 = scmp.eq.s32.totalorder %s37, 1
      %p81 = por %p79, %p80
      %p83 = scmp.ne.s32.totalorder %s68, %s82
      %p84 = scmp.eq.s32.totalorder %s37, 0
      %p85 = por %p83, %p84
      %s87 = sadd.s32 %s86, 1
      %p90 = scmp.eq.s32.totalorder %s31, 1
      %p91 = scmp.ne.s32.totalorder %s86, %s88
      %p92 = scmp.eq.s32.totalorder %s31, 0
      %p93 = por %p91, %p92
      %p94 = scmp.ne.s32.totalorder %s86, %s88
      %p95 = scmp.eq.s32.totalorder %s36, 1
      %p96 = por %p94, %p95
      %p97 = scmp.ne.s32.totalorder %s88, %s89
      %p98 = scmp.eq.s32.totalorder %s36, 0
      %p99 = por %p97, %p98
      %p100 = scmp.ne.s32.totalorder %s88, %s89
      %p101 = scmp.eq.s32.totalorder %s37, 1
      %p102 = por %p100, %p101
      %p104 = scmp.ne.s32.totalorder %s89, %s103
      %p105 = scmp.eq.s32.totalorder %s37, 0
      %p106 = por %p104, %p105
      %s108 = sadd.s32 %s107, 1
      %p111 = scmp.eq.s32.totalorder %s31, 1
      %p112 = scmp.ne.s32.totalorder %s107, %s109
      %p113 = scmp.eq.s32.totalorder %s31, 0
      %p114 = por %p112, %p113
      %p115 = scmp.ne.s32.totalorder %s107, %s109
      %p116 = scmp.eq.s32.totalorder %s36, 1
      %p117 = por %p115, %p116
      %p118 = scmp.ne.s32.totalorder %s109, %s110
      %p119 = scmp.eq.s32.totalorder %s36, 0
      %p120 = por %p118, %p119
      %p121 = scmp.ne.s32.totalorder %s109, %s110
      %p122 = scmp.eq.s32.totalorder %s37, 1
      %p123 = por %p121, %p122
      %p125 = scmp.ne.s32.totalorder %s110, %s124
      %p126 = scmp.eq.s32.totalorder %s37, 0
      %p127 = por %p125, %p126
      %s129 = sadd.s32 %s128, 1
      %p132 = scmp.eq.s32.totalorder %s31, 1
      %p133 = scmp.ne.s32.totalorder %s128, %s130
      %p134 = scmp.eq.s32.totalorder %s31, 0
      %p135 = por %p133, %p134
      %p136 = scmp.ne.s32.totalorder %s128, %s130
      %p137 = scmp.eq.s32.totalorder %s36, 1
      %p138 = por %p136, %p137
      %p139 = scmp.ne.s32.totalorder %s130, %s131
      %p140 = scmp.eq.s32.totalorder %s36, 0
      %p141 = por %p139, %p140
      %p142 = scmp.ne.s32.totalorder %s130, %s131
      %p143 = scmp.eq.s32.totalorder %s37, 1
      %p144 = por %p142, %p143
      %p146 = scmp.ne.s32.totalorder %s131, %s145
      %p147 = scmp.eq.s32.totalorder %s37, 0
      %p148 = por %p146, %p147
      %s150 = sadd.s32 %s149, 1
      %p153 = scmp.eq.s32.totalorder %s31, 1
      %p154 = scmp.ne.s32.totalorder %s149, %s151
      %p155 = scmp.eq.s32.totalorder %s31, 0
      %p156 = por %p154, %p155
      %p157 = scmp.ne.s32.totalorder %s149, %s151
      %p158 = scmp.eq.s32.totalorder %s36, 1
      %p159 = por %p157, %p158
      %p160 = scmp.ne.s32.totalorder %s151, %s152
      %p161 = scmp.eq.s32.totalorder %s36, 0
      %p162 = por %p160, %p161
      %p163 = scmp.ne.s32.totalorder %s151, %s152
      %p164 = scmp.eq.s32.totalorder %s37, 1
      %p165 = por %p163, %p164
      %p167 = scmp.ne.s32.totalorder %s152, %s166
      %p168 = scmp.eq.s32.totalorder %s37, 0
      %p169 = por %p167, %p168
      %s171 = sadd.s32 %s170, 1
      %p174 = scmp.eq.s32.totalorder %s31, 1
      %p175 = scmp.ne.s32.totalorder %s170, %s172
      %p176 = scmp.eq.s32.totalorder %s31, 0
      %p177 = por %p175, %p176
      %p178 = scmp.ne.s32.totalorder %s170, %s172
      %p179 = scmp.eq.s32.totalorder %s36, 1
      %p180 = por %p178, %p179
      %p181 = scmp.ne.s32.totalorder %s172, %s173
      %p182 = scmp.eq.s32.totalorder %s36, 0
      %p183 = por %p181, %p182
      %p184 = scmp.ne.s32.totalorder %s172, %s173
      %p185 = scmp.eq.s32.totalorder %s37, 1
      %p186 = por %p184, %p185
      %p188 = scmp.ne.s32.totalorder %s173, %s187
      %p189 = scmp.eq.s32.totalorder %s37, 0
      %p190 = por %p188, %p189
      %s192 = sadd.s32 %s191, 1
      %p195 = scmp.eq.s32.totalorder %s31, 1
      %p196 = scmp.ne.s32.totalorder %s191, %s193
      %p197 = scmp.eq.s32.totalorder %s31, 0
      %p198 = por %p196, %p197
      %p199 = scmp.ne.s32.totalorder %s191, %s193
      %p200 = scmp.eq.s32.totalorder %s36, 1
      %p201 = por %p199, %p200
      %p202 = scmp.ne.s32.totalorder %s193, %s194
      %p203 = scmp.eq.s32.totalorder %s36, 0
      %p204 = por %p202, %p203
      %p205 = scmp.ne.s32.totalorder %s193, %s194
      %p206 = scmp.eq.s32.totalorder %s37, 1
      %p207 = por %p205, %p206
      %p209 = scmp.ne.s32.totalorder %s194, %s208
      %p210 = scmp.eq.s32.totalorder %s37, 0
      %p211 = por %p209, %p210
      %s213 = sadd.s32 %s212, 1
      %p216 = scmp.eq.s32.totalorder %s31, 1
      %p217 = scmp.ne.s32.totalorder %s212, %s214
      %p218 = scmp.eq.s32.totalorder %s31, 0
      %p219 = por %p217, %p218
      %p220 = scmp.ne.s32.totalorder %s212, %s214
      %p221 = scmp.eq.s32.totalorder %s36, 1
      %p222 = por %p220, %p221
      %p223 = scmp.ne.s32.totalorder %s214, %s215
      %p224 = scmp.eq.s32.totalorder %s36, 0
      %p225 = por %p223, %p224
      %p226 = scmp.ne.s32.totalorder %s214, %s215
      %p227 = scmp.eq.s32.totalorder %s37, 1
      %p228 = por %p226, %p227
      %p230 = scmp.ne.s32.totalorder %s215, %s229
      %p231 = scmp.eq.s32.totalorder %s37, 0
      %p232 = por %p230, %p231
      %s234 = sadd.s32 %s233, 1
      %p237 = scmp.eq.s32.totalorder %s31, 1
      %p238 = scmp.ne.s32.totalorder %s233, %s235
      %p239 = scmp.eq.s32.totalorder %s31, 0
      %p240 = por %p238, %p239
      %p241 = scmp.ne.s32.totalorder %s233, %s235
      %p242 = scmp.eq.s32.totalorder %s36, 1
      %p243 = por %p241, %p242
      %p244 = scmp.ne.s32.totalorder %s235, %s236
      %p245 = scmp.eq.s32.totalorder %s36, 0
      %p246 = por %p244, %p245
      %p247 = scmp.ne.s32.totalorder %s235, %s236
      %p248 = scmp.eq.s32.totalorder %s37, 1
      %p249 = por %p247, %p248
      %p251 = scmp.ne.s32.totalorder %s236, %s250
      %p252 = scmp.eq.s32.totalorder %s37, 0
      %p253 = por %p251, %p252
      %s255 = sadd.s32 %s254, 1
      %p258 = scmp.eq.s32.totalorder %s31, 1
      %p259 = scmp.ne.s32.totalorder %s254, %s256
      %p260 = scmp.eq.s32.totalorder %s31, 0
      %p261 = por %p259, %p260
      %p262 = scmp.ne.s32.totalorder %s254, %s256
      %p263 = scmp.eq.s32.totalorder %s36, 1
      %p264 = por %p262, %p263
      %p265 = scmp.ne.s32.totalorder %s256, %s257
      %p266 = scmp.eq.s32.totalorder %s36, 0
      %p267 = por %p265, %p266
      %p268 = scmp.ne.s32.totalorder %s256, %s257
      %p269 = scmp.eq.s32.totalorder %s37, 1
      %p270 = por %p268, %p269
      %p272 = scmp.ne.s32.totalorder %s257, %s271
      %p273 = scmp.eq.s32.totalorder %s37, 0
      %p274 = por %p272, %p273
      %s276 = sadd.s32 %s275, 1
      %p279 = scmp.eq.s32.totalorder %s31, 1
      %p280 = scmp.ne.s32.totalorder %s275, %s277
      %p281 = scmp.eq.s32.totalorder %s31, 0
      %p282 = por %p280, %p281
      %p283 = scmp.ne.s32.totalorder %s275, %s277
      %p284 = scmp.eq.s32.totalorder %s36, 1
      %p285 = por %p283, %p284
      %p286 = scmp.ne.s32.totalorder %s277, %s278
      %p287 = scmp.eq.s32.totalorder %s36, 0
      %p288 = por %p286, %p287
      %p289 = scmp.ne.s32.totalorder %s277, %s278
      %p290 = scmp.eq.s32.totalorder %s37, 1
      %p291 = por %p289, %p290
      %p293 = scmp.ne.s32.totalorder %s278, %s292
      %p294 = scmp.eq.s32.totalorder %s37, 0
      %p295 = por %p293, %p294
      %s297 = sadd.s32 %s296, 1
      %p300 = scmp.eq.s32.totalorder %s31, 1
      %p301 = scmp.ne.s32.totalorder %s296, %s298
      %p302 = scmp.eq.s32.totalorder %s31, 0
      %p303 = por %p301, %p302
      %p304 = scmp.ne.s32.totalorder %s296, %s298
      %p305 = scmp.eq.s32.totalorder %s36, 1
      %p306 = por %p304, %p305
      %p307 = scmp.ne.s32.totalorder %s298, %s299
      %p308 = scmp.eq.s32.totalorder %s36, 0
      %p309 = por %p307, %p308
      %p310 = scmp.ne.s32.totalorder %s298, %s299
      %p311 = scmp.eq.s32.totalorder %s37, 1
      %p312 = por %p310, %p311
      %p314 = scmp.ne.s32.totalorder %s299, %s313
      %p315 = scmp.eq.s32.totalorder %s37, 0
      %p316 = por %p314, %p315
      %s318 = sadd.s32 %s317, 1
      %p321 = scmp.eq.s32.totalorder %s31, 1
      %p322 = scmp.ne.s32.totalorder %s317, %s319
      %p323 = scmp.eq.s32.totalorder %s31, 0
      %p324 = por %p322, %p323
      %p325 = scmp.ne.s32.totalorder %s317, %s319
      %p326 = scmp.eq.s32.totalorder %s36, 1
      %p327 = por %p325, %p326
      %p328 = scmp.ne.s32.totalorder %s319, %s320
      %p329 = scmp.eq.s32.totalorder %s36, 0
      %p330 = por %p328, %p329
      %p331 = scmp.ne.s32.totalorder %s319, %s320
      %p332 = scmp.eq.s32.totalorder %s37, 1
      %p333 = por %p331, %p332
      %p335 = scmp.ne.s32.totalorder %s320, %s334
      %p336 = scmp.eq.s32.totalorder %s37, 0
      %p337 = por %p335, %p336
      %s339 = sadd.s32 %s338, 1
      %p342 = scmp.eq.s32.totalorder %s31, 1
      %p343 = scmp.ne.s32.totalorder %s338, %s340
      %p344 = scmp.eq.s32.totalorder %s31, 0
      %p345 = por %p343, %p344
      %p346 = scmp.ne.s32.totalorder %s338, %s340
      %p347 = scmp.eq.s32.totalorder %s36, 1
      %p348 = por %p346, %p347
      %p349 = scmp.ne.s32.totalorder %s340, %s341
      %p350 = scmp.eq.s32.totalorder %s36, 0
      %p351 = por %p349, %p350
      %p352 = scmp.ne.s32.totalorder %s340, %s341
      %p353 = scmp.eq.s32.totalorder %s37, 1
      %p354 = por %p352, %p353
      %p356 = scmp.ne.s32.totalorder %s341, %s355
      %p357 = scmp.eq.s32.totalorder %s37, 0
      %p358 = por %p356, %p357
      %s360 = sadd.s32 %s359, 1
      %p363 = scmp.eq.s32.totalorder %s31, 1
      %p364 = scmp.ne.s32.totalorder %s359, %s361
      %p365 = scmp.eq.s32.totalorder %s31, 0
      %p366 = por %p364, %p365
      %p367 = scmp.ne.s32.totalorder %s359, %s361
      %p368 = scmp.eq.s32.totalorder %s36, 1
      %p369 = por %p367, %p368
      %p370 = scmp.ne.s32.totalorder %s361, %s362
      %p371 = scmp.eq.s32.totalorder %s36, 0
      %p372 = por %p370, %p371
      %p373 = scmp.ne.s32.totalorder %s361, %s362
      %p374 = scmp.eq.s32.totalorder %s37, 1
      %p375 = por %p373, %p374
      %p377 = scmp.ne.s32.totalorder %s362, %s376
      %p378 = scmp.eq.s32.totalorder %s37, 0
      %p379 = por %p377, %p378
      %s381 = sadd.s32 %s380, 1
      %p384 = scmp.eq.s32.totalorder %s31, 1
      %p385 = scmp.ne.s32.totalorder %s380, %s382
      %p386 = scmp.eq.s32.totalorder %s31, 0
      %p387 = por %p385, %p386
      %p388 = scmp.ne.s32.totalorder %s380, %s382
      %p389 = scmp.eq.s32.totalorder %s36, 1
      %p390 = por %p388, %p389
      %p391 = scmp.ne.s32.totalorder %s382, %s383
      %p392 = scmp.eq.s32.totalorder %s36, 0
      %p393 = por %p391, %p392
      %p394 = scmp.ne.s32.totalorder %s382, %s383
      %p395 = scmp.eq.s32.totalorder %s37, 1
      %p396 = por %p394, %p395
      %p398 = scmp.ne.s32.totalorder %s383, %s397
      %p399 = scmp.eq.s32.totalorder %s37, 0
      %p400 = por %p398, %p399
      %s402 = sadd.s32 %s401, 1
      %p405 = scmp.eq.s32.totalorder %s31, 1
      %p406 = scmp.ne.s32.totalorder %s401, %s403
      %p407 = scmp.eq.s32.totalorder %s31, 0
      %p408 = por %p406, %p407
      %p409 = scmp.ne.s32.totalorder %s401, %s403
      %p410 = scmp.eq.s32.totalorder %s36, 1
      %p411 = por %p409, %p410
      %p412 = scmp.ne.s32.totalorder %s403, %s404
      %p413 = scmp.eq.s32.totalorder %s36, 0
      %p414 = por %p412, %p413
      %p415 = scmp.ne.s32.totalorder %s403, %s404
      %p416 = scmp.eq.s32.totalorder %s37, 1
      %p417 = por %p415, %p416
      %p419 = scmp.ne.s32.totalorder %s404, %s418
      %p420 = scmp.eq.s32.totalorder %s37, 0
      %p421 = por %p419, %p420
      %s423 = sadd.s32 %s422, 1
      %p426 = scmp.eq.s32.totalorder %s31, 1
      %p427 = scmp.ne.s32.totalorder %s422, %s424
      %p428 = scmp.eq.s32.totalorder %s31, 0
      %p429 = por %p427, %p428
      %p430 = scmp.ne.s32.totalorder %s422, %s424
      %p431 = scmp.eq.s32.totalorder %s36, 1
      %p432 = por %p430, %p431
      %p433 = scmp.ne.s32.totalorder %s424, %s425
      %p434 = scmp.eq.s32.totalorder %s36, 0
      %p435 = por %p433, %p434
      %p436 = scmp.ne.s32.totalorder %s424, %s425
      %p437 = scmp.eq.s32.totalorder %s37, 1
      %p438 = por %p436, %p437
      %p440 = scmp.ne.s32.totalorder %s425, %s439
      %p441 = scmp.eq.s32.totalorder %s37, 0
      %p442 = por %p440, %p441
      %s443 = ssub.s32 %s31, %s38
      %p444 = scmp.eq.s32.totalorder %s443, 0
      %s446 = sadd.s32 %s445, 1
      %s447 = scalar_select %p444, %s445, %s446
      %p450 = pneg %p444
      %p451 = scmp.eq.s32.totalorder %s31, 1
      %p452 = por %p450, %p451
      %p453 = scmp.ne.s32.totalorder %s445, %s448
      %p454 = scmp.eq.s32.totalorder %s31, 0
      %p455 = por %p453, %p454
      %p456 = scmp.ne.s32.totalorder %s445, %s448
      %p457 = scmp.eq.s32.totalorder %s36, 1
      %p458 = por %p456, %p457
      %p459 = scmp.ne.s32.totalorder %s448, %s449
      %p460 = scmp.eq.s32.totalorder %s36, 0
      %p461 = por %p459, %p460
      %p462 = scmp.ne.s32.totalorder %s448, %s449
      %p463 = scmp.eq.s32.totalorder %s37, 1
      %p464 = por %p462, %p463
      %p466 = scmp.ne.s32.totalorder %s449, %s465
      %p467 = scmp.eq.s32.totalorder %s37, 0
      %p468 = por %p466, %p467
      %p469 = scmp.le.s32.totalorder 1, %s31
      %p470 = scmp.lt.s32.totalorder %s31, 3
      %p471 = pnand %p469, %p470
      %p472 = pneg %p471
      // Predicated region
      $region9: #{lenet_forward.1} parent=5 // pred_check
        _
      $region10: #{lenet_forward.1} parent=5 // pred_check_branch
        %474 = sbr.rel (%p471) target = $region12
      $region11: #{lenet_forward.1} parent=5 // pred_region
        %s475 = ssub.s32 %s31, 1
        // Predicated region
        $region13: #{lenet_forward.1} parent=11 // pred_check
          %p476 = pneg %p78
        $region14: #{lenet_forward.1} parent=11 // pred_check_branch
          %478 = sbr.rel (%p476) target = $region16
        $region15: #{lenet_forward.1} parent=11 // pred_region
          _
        $region16: #{lenet_forward.1} parent=11 // pred_fallthru
          _
        // Predicated region
        $region17: #{lenet_forward.1} parent=11 // pred_check
          %p479 = pneg %p99
        $region18: #{lenet_forward.1} parent=11 // pred_check_branch
          %481 = sbr.rel (%p479) target = $region20
        $region19: #{lenet_forward.1} parent=11 // pred_region
          _
        $region20: #{lenet_forward.1} parent=11 // pred_fallthru
          _
        // Predicated region
        $region21: #{lenet_forward.1} parent=11 // pred_check
          %p482 = pneg %p120
        $region22: #{lenet_forward.1} parent=11 // pred_check_branch
          %484 = sbr.rel (%p482) target = $region24
        $region23: #{lenet_forward.1} parent=11 // pred_region
          %s486 = ssub.s32 2304, 2304
          %487 = vsyncadd [#allocation5], %s486
          %s488 = sshll.u32 [#allocation4], 4
          %s489 = int_to_ptr.vmem [resolvable:$true] %s488
          %494 = dma.hbm_to_vmem [thread:$0]  %s3, 2304, %s489, [#allocation5], 128, 128, 8
        $region24: #{lenet_forward.1} parent=11 // pred_fallthru
          _
        // Predicated region
        $region25: #{lenet_forward.1} parent=11 // pred_check
          %p495 = pneg %p141
        $region26: #{lenet_forward.1} parent=11 // pred_check_branch
          %497 = sbr.rel (%p495) target = $region28
        $region27: #{lenet_forward.1} parent=11 // pred_region
          %s499 = ssub.s32 2304, 2304
          %500 = vsyncadd [#allocation8], %s499
          %s501 = sshll.u32 [#allocation7], 4
          %s502 = int_to_ptr.vmem [resolvable:$true] %s501
          %507 = dma.hbm_to_vmem [thread:$0]  %s4, 2304, %s502, [#allocation8], 128, 128, 8
        $region28: #{lenet_forward.1} parent=11 // pred_fallthru
          _
        // Predicated region
        $region29: #{lenet_forward.1} parent=11 // pred_check
          %p508 = pneg %p162
        $region30: #{lenet_forward.1} parent=11 // pred_check_branch
          %510 = sbr.rel (%p508) target = $region32
        $region31: #{lenet_forward.1} parent=11 // pred_region
          _
        $region32: #{lenet_forward.1} parent=11 // pred_fallthru
          _
        // Predicated region
        $region33: #{lenet_forward.1} parent=11 // pred_check
          %p511 = pneg %p183
        $region34: #{lenet_forward.1} parent=11 // pred_check_branch
          %513 = sbr.rel (%p511) target = $region36
        $region35: #{lenet_forward.1} parent=11 // pred_region
          %s515 = ssub.s32 3072, 3072
          %516 = vsyncadd [#allocation8], %s515
          %s517 = sshll.u32 [#allocation9], 4
          %s518 = int_to_ptr.vmem [resolvable:$true] %s517
          %523 = dma.hbm_to_vmem [thread:$0]  %s6, 3072, %s518, [#allocation8], 256, 256, 16
        $region36: #{lenet_forward.1} parent=11 // pred_fallthru
          _
        // Predicated region
        $region37: #{lenet_forward.1} parent=11 // pred_check
          %p524 = pneg %p204
        $region38: #{lenet_forward.1} parent=11 // pred_check_branch
          %526 = sbr.rel (%p524) target = $region40
        $region39: #{lenet_forward.1} parent=11 // pred_region
          _
        $region40: #{lenet_forward.1} parent=11 // pred_fallthru
          _
        // Predicated region
        $region41: #{lenet_forward.1} parent=11 // pred_check
          %p527 = pneg %p225
        $region42: #{lenet_forward.1} parent=11 // pred_check_branch
          %529 = sbr.rel (%p527) target = $region44
        $region43: #{lenet_forward.1} parent=11 // pred_region
          _
        $region44: #{lenet_forward.1} parent=11 // pred_fallthru
          _
        // Predicated region
        $region45: #{lenet_forward.1} parent=11 // pred_check
          %p530 = pneg %p246
        $region46: #{lenet_forward.1} parent=11 // pred_check_branch
          %532 = sbr.rel (%p530) target = $region48
        $region47: #{lenet_forward.1} parent=11 // pred_region
          _
        $region48: #{lenet_forward.1} parent=11 // pred_fallthru
          _
        // Predicated region
        $region49: #{lenet_forward.1} parent=11 // pred_check
          %p533 = pneg %p267
        $region50: #{lenet_forward.1} parent=11 // pred_check_branch
          %535 = sbr.rel (%p533) target = $region52
        $region51: #{lenet_forward.1} parent=11 // pred_region
          _
        $region52: #{lenet_forward.1} parent=11 // pred_fallthru
          _
        // Predicated region
        $region53: #{lenet_forward.1} parent=11 // pred_check
          %p536 = pneg %p288
        $region54: #{lenet_forward.1} parent=11 // pred_check_branch
          %538 = sbr.rel (%p536) target = $region56
        $region55: #{lenet_forward.1} parent=11 // pred_region
          _
        $region56: #{lenet_forward.1} parent=11 // pred_fallthru
          _
        // Predicated region
        $region57: #{lenet_forward.1} parent=11 // pred_check
          %p539 = pneg %p309
        $region58: #{lenet_forward.1} parent=11 // pred_check_branch
          %541 = sbr.rel (%p539) target = $region60
        $region59: #{lenet_forward.1} parent=11 // pred_region
          _
        $region60: #{lenet_forward.1} parent=11 // pred_fallthru
          _
        // Predicated region
        $region61: #{lenet_forward.1} parent=11 // pred_check
          %p542 = pneg %p330
        $region62: #{lenet_forward.1} parent=11 // pred_check_branch
          %544 = sbr.rel (%p542) target = $region64
        $region63: #{lenet_forward.1} parent=11 // pred_region
          _
        $region64: #{lenet_forward.1} parent=11 // pred_fallthru
          _
        // Predicated region
        $region65: #{lenet_forward.1} parent=11 // pred_check
          %p545 = pneg %p351
        $region66: #{lenet_forward.1} parent=11 // pred_check_branch
          %547 = sbr.rel (%p545) target = $region68
        $region67: #{lenet_forward.1} parent=11 // pred_region
          _
        $region68: #{lenet_forward.1} parent=11 // pred_fallthru
          _
        // Predicated region
        $region69: #{lenet_forward.1} parent=11 // pred_check
          %p548 = pneg %p372
        $region70: #{lenet_forward.1} parent=11 // pred_check_branch
          %550 = sbr.rel (%p548) target = $region72
        $region71: #{lenet_forward.1} parent=11 // pred_region
          _
        $region72: #{lenet_forward.1} parent=11 // pred_fallthru
          _
        // Predicated region
        $region73: #{lenet_forward.1} parent=11 // pred_check
          %p551 = pneg %p393
        $region74: #{lenet_forward.1} parent=11 // pred_check_branch
          %553 = sbr.rel (%p551) target = $region76
        $region75: #{lenet_forward.1} parent=11 // pred_region
          _
        $region76: #{lenet_forward.1} parent=11 // pred_fallthru
          _
        // Predicated region
        $region77: #{lenet_forward.1} parent=11 // pred_check
          %p554 = pneg %p414
        $region78: #{lenet_forward.1} parent=11 // pred_check_branch
          %556 = sbr.rel (%p554) target = $region80
        $region79: #{lenet_forward.1} parent=11 // pred_region
          %s558 = ssub.s32 1408, 1408
          %559 = vsyncadd [#allocation11], %s558
          %s560 = sshll.u32 [#allocation10], 4
          %s561 = int_to_ptr.vmem [resolvable:$true] %s560
          %566 = dma.hbm_to_vmem [thread:$0]  %s17, 1408, %s561, [#allocation11], 128, 128, 8
        $region80: #{lenet_forward.1} parent=11 // pred_fallthru
          _
        // Predicated region
        $region81: #{lenet_forward.1} parent=11 // pred_check
          %p567 = pneg %p435
        $region82: #{lenet_forward.1} parent=11 // pred_check_branch
          %569 = sbr.rel (%p567) target = $region84
        $region83: #{lenet_forward.1} parent=11 // pred_region
          _
        $region84: #{lenet_forward.1} parent=11 // pred_fallthru
          _
      $region12: #{lenet_forward.1} parent=5 // pred_fallthru
        _
      %p570 = scmp.lt.s32.totalorder %s31, 2
      // Predicated region
      $region85: #{lenet_forward.1} parent=5 // pred_check
        %p571 = pneg %p570
      $region86: #{lenet_forward.1} parent=5 // pred_check_branch
        %573 = sbr.rel (%p571) target = $region88
      $region87: #{lenet_forward.1} parent=5 // pred_region
        // Predicated region
        $region89: #{lenet_forward.1} parent=87 // pred_check
          %p574 = pneg %p51
        $region90: #{lenet_forward.1} parent=87 // pred_check_branch
          %576 = sbr.rel (%p574) target = $region92
        $region91: #{lenet_forward.1} parent=87 // pred_region
          %s577 = smul.u32 8, %s31
          %p578 = scmp.lt.s32.totalorder %s577, 15
          %s579 = scalar_select %p578, %s577, 15
          %s580 = smul.addr %s579, 4
          %s581 = smul.addr %s580, 8
          %s582 = scalar_lea.vmem %s0, %s581
          %s583 = smul.u32 8, %s31
        $region92: #{lenet_forward.1} parent=87 // pred_fallthru
          _
      $region88: #{lenet_forward.1} parent=5 // pred_fallthru
        _
      %p584 = scmp.le.s32.totalorder 1, %s31
      %p585 = scmp.lt.s32.totalorder %s31, 3
      %p586 = pnand %p584, %p585
      %p587 = pneg %p586
      // Predicated region
      $region93: #{lenet_forward.1} parent=5 // pred_check
        _
      $region94: #{lenet_forward.1} parent=5 // pred_check_branch
        %589 = sbr.rel (%p586) target = $region96
      $region95: #{lenet_forward.1} parent=5 // pred_region
        %s590 = ssub.s32 %s31, 1
        // Predicated region
        $region97: #{lenet_forward.1} parent=95 // pred_check
          %p591 = pneg %p120
        $region98: #{lenet_forward.1} parent=95 // pred_check_branch
          %593 = sbr.rel (%p591) target = $region100
        $region99: #{lenet_forward.1} parent=95 // pred_region
          %594 = dma.done [#allocation5], 2304
        $region100: #{lenet_forward.1} parent=95 // pred_fallthru
          _
        // Predicated region
        $region101: #{lenet_forward.1} parent=95 // pred_check
          %p595 = pneg %p141
        $region102: #{lenet_forward.1} parent=95 // pred_check_branch
          %597 = sbr.rel (%p595) target = $region104
        $region103: #{lenet_forward.1} parent=95 // pred_region
          %598 = dma.done [#allocation8], 2304
        $region104: #{lenet_forward.1} parent=95 // pred_fallthru
          _
        // Predicated region
        $region105: #{lenet_forward.1} parent=95 // pred_check
          %p599 = pneg %p183
        $region106: #{lenet_forward.1} parent=95 // pred_check_branch
          %601 = sbr.rel (%p599) target = $region108
        $region107: #{lenet_forward.1} parent=95 // pred_region
          %602 = dma.done [#allocation8], 3072
        $region108: #{lenet_forward.1} parent=95 // pred_fallthru
          _
        // Predicated region
        $region109: #{lenet_forward.1} parent=95 // pred_check
          %p603 = pneg %p414
        $region110: #{lenet_forward.1} parent=95 // pred_check_branch
          %605 = sbr.rel (%p603) target = $region112
        $region111: #{lenet_forward.1} parent=95 // pred_region
          %606 = dma.done [#allocation11], 1408
        $region112: #{lenet_forward.1} parent=95 // pred_fallthru
          _
        %s607 = smul.u32 8, %s36
        %p608 = scmp.lt.s32.totalorder %s607, 15
        %s609 = scalar_select %p608, %s607, 15
        %s610 = smul.addr %s609, 4
        %s611 = smul.addr %s610, 8
        %s612 = scalar_lea.vmem %s0, %s611
        %p613 = pneg %p57
        %p614 = pneg %p54
        %p615 = pneg %p78
        %p616 = pneg %p75
        %p617 = pneg %p99
        %p618 = pneg %p96
        %p619 = pneg %p120
        %p620 = pneg %p117
        %p621 = pneg %p141
        %p622 = pneg %p138
        %p623 = pneg %p162
        %p624 = pneg %p159
        %p625 = pneg %p183
        %p626 = pneg %p180
        %p627 = pneg %p204
        %p628 = pneg %p201
        %p629 = pneg %p225
        %p630 = pneg %p222
        %p631 = pneg %p246
        %p632 = pneg %p243
        %p633 = pneg %p267
        %p634 = pneg %p264
        %p635 = pneg %p288
        %p636 = pneg %p285
        %p637 = pneg %p309
        %p638 = pneg %p306
        %p639 = pneg %p330
        %p640 = pneg %p327
        %p641 = pneg %p351
        %p642 = pneg %p348
        %p643 = pneg %p372
        %p644 = pneg %p369
        %p645 = pneg %p393
        %p646 = pneg %p390
        %p647 = pneg %p414
        %p648 = pneg %p411
        %p649 = pneg %p435
        %p650 = pneg %p432
        %p651 = pneg %p461
        %p652 = pneg %p458
        %s653 = sand.u32 %s448, 1
        %s654 = scalar_lea.sflag [#allocation6], %s653
        %s655 = sand.u32 %s448, 1
        %s656 = smul.addr %s655, 8
        %s657 = scalar_lea.vmem [#allocation12], %s656
        %s658 = smul.u32 8, %s36
        %p659 = scmp.lt.s32.totalorder %s658, 15
        %s660 = scalar_select %p659, %s658, 15
        %s661 = smul.addr %s660, 4
        %s662 = smul.addr %s661, 8
        %s663 = scalar_lea.vmem %s0, %s662
        %s664 = smul.u32 8, %s36
        %v665 = vld [vmem:[%s663] sm:$0xff]
        %v666 = vld [vmem:[%s663 + $0x8] sm:$0xff]
        %v667 = vld [vmem:[%s663 + $0x10] sm:$0xff]
        %v668 = vld [vmem:[%s663 + $0x20] sm:$0xff]
        %v669 = vld [vmem:[%s663 + $0x28] sm:$0xff]
        %v670 = vld [vmem:[%s663 + $0x30] sm:$0xff]
        %v671 = vld [vmem:[%s663 + $0x40] sm:$0xff]
        %v672 = vld [vmem:[%s663 + $0x48] sm:$0xff]
        %v673 = vld [vmem:[%s663 + $0x50] sm:$0xff]
        %v674 = vld [vmem:[%s663 + $0x60] sm:$0xff]
        %v675 = vld [vmem:[%s663 + $0x68] sm:$0xff]
        %v676 = vld [vmem:[%s663 + $0x70] sm:$0xff]
        %v677 = vld [vmem:[%s663 + $0x80] sm:$0xff]
        %v678 = vld [vmem:[%s663 + $0x88] sm:$0xff]
        %v679 = vld [vmem:[%s663 + $0x90] sm:$0xff]
        %v680 = vld [vmem:[%s663 + $0xa0] sm:$0xff]
        %v681 = vld [vmem:[%s663 + $0xa8] sm:$0xff]
        %v682 = vld [vmem:[%s663 + $0xb0] sm:$0xff]
        %v683 = vld [vmem:[%s663 + $0xc0] sm:$0xff]
        %v684 = vld [vmem:[%s663 + $0xc8] sm:$0xff]
        %v685 = vld [vmem:[%s663 + $0xd0] sm:$0xff]
        %v686 = vld [vmem:[%s663 + $0xe0] sm:$0xff]
        %v687 = vld [vmem:[%s663 + $0xe8] sm:$0xff]
        %v688 = vld [vmem:[%s663 + $0xf0] sm:$0xff]
        %vm689 = vcmask 228352
        %690 = vst.msk [vmem:[#allocation2] sm:$0xff] %vm689, %v665
        %691 = vst.msk [vmem:[#allocation2 + $0x10] sm:$0xff] %vm689, %v666
        %692 = vst.msk [vmem:[#allocation2 + $0x20] sm:$0xff] %vm689, %v667
        %693 = vst.msk [vmem:[#allocation2 + $0x30] sm:$0xff] %vm689, %v668
        %694 = vst.msk [vmem:[#allocation2 + $0x40] sm:$0xff] %vm689, %v669
        %695 = vst.msk [vmem:[#allocation2 + $0x50] sm:$0xff] %vm689, %v670
        %696 = vst.msk [vmem:[#allocation2 + $0x60] sm:$0xff] %vm689, %v671
        %697 = vst.msk [vmem:[#allocation2 + $0x70] sm:$0xff] %vm689, %v672
        %698 = vst.msk [vmem:[#allocation2 + $0x80] sm:$0xff] %vm689, %v673
        %699 = vst.msk [vmem:[#allocation2 + $0x90] sm:$0xff] %vm689, %v674
        %700 = vst.msk [vmem:[#allocation2 + $0xa0] sm:$0xff] %vm689, %v675
        %701 = vst.msk [vmem:[#allocation2 + $0xb0] sm:$0xff] %vm689, %v676
        %702 = vst.msk [vmem:[#allocation2 + $0xc0] sm:$0xff] %vm689, %v677
        %703 = vst.msk [vmem:[#allocation2 + $0xd0] sm:$0xff] %vm689, %v678
        %704 = vst.msk [vmem:[#allocation2 + $0xe0] sm:$0xff] %vm689, %v679
        %705 = vst.msk [vmem:[#allocation2 + $0xf0] sm:$0xff] %vm689, %v680
        %706 = vst.msk [vmem:[#allocation2 + $0x100] sm:$0xff] %vm689, %v681
        %707 = vst.msk [vmem:[#allocation2 + $0x110] sm:$0xff] %vm689, %v682
        %708 = vst.msk [vmem:[#allocation2 + $0x120] sm:$0xff] %vm689, %v683
        %709 = vst.msk [vmem:[#allocation2 + $0x130] sm:$0xff] %vm689, %v684
        %710 = vst.msk [vmem:[#allocation2 + $0x140] sm:$0xff] %vm689, %v685
        %711 = vst.msk [vmem:[#allocation2 + $0x150] sm:$0xff] %vm689, %v686
        %712 = vst.msk [vmem:[#allocation2 + $0x160] sm:$0xff] %vm689, %v687
        %713 = vst.msk [vmem:[#allocation2 + $0x170] sm:$0xff] %vm689, %v688
        %v714 = vld [vmem:[%s663 + $0x1] sm:$0xff]
        %v715 = vld [vmem:[%s663 + $0x9] sm:$0xff]
        %v716 = vld [vmem:[%s663 + $0x11] sm:$0xff]
        %v717 = vld [vmem:[%s663 + $0x21] sm:$0xff]
        %v718 = vld [vmem:[%s663 + $0x29] sm:$0xff]
        %v719 = vld [vmem:[%s663 + $0x31] sm:$0xff]
        %v720 = vld [vmem:[%s663 + $0x41] sm:$0xff]
        %v721 = vld [vmem:[%s663 + $0x49] sm:$0xff]
        %v722 = vld [vmem:[%s663 + $0x51] sm:$0xff]
        %v723 = vld [vmem:[%s663 + $0x61] sm:$0xff]
        %v724 = vld [vmem:[%s663 + $0x69] sm:$0xff]
        %v725 = vld [vmem:[%s663 + $0x71] sm:$0xff]
        %v726 = vld [vmem:[%s663 + $0x81] sm:$0xff]
        %v727 = vld [vmem:[%s663 + $0x89] sm:$0xff]
        %v728 = vld [vmem:[%s663 + $0x91] sm:$0xff]
        %v729 = vld [vmem:[%s663 + $0xa1] sm:$0xff]
        %v730 = vld [vmem:[%s663 + $0xa9] sm:$0xff]
        %v731 = vld [vmem:[%s663 + $0xb1] sm:$0xff]
        %v732 = vld [vmem:[%s663 + $0xc1] sm:$0xff]
        %v733 = vld [vmem:[%s663 + $0xc9] sm:$0xff]
        %v734 = vld [vmem:[%s663 + $0xd1] sm:$0xff]
        %v735 = vld [vmem:[%s663 + $0xe1] sm:$0xff]
        %v736 = vld [vmem:[%s663 + $0xe9] sm:$0xff]
        %v737 = vld [vmem:[%s663 + $0xf1] sm:$0xff]
        %762 = vrot.lane.b32.xlu0 %v714, 28
        %v763 = vpop.permute.xlu0 %762
        %764 = vrot.lane.b32.xlu0 %v715, 28
        %v765 = vpop.permute.xlu0 %764
        %766 = vrot.lane.b32.xlu0 %v716, 28
        %v767 = vpop.permute.xlu0 %766
        %768 = vrot.lane.b32.xlu0 %v717, 28
        %v769 = vpop.permute.xlu0 %768
        %770 = vrot.lane.b32.xlu0 %v718, 28
        %v771 = vpop.permute.xlu0 %770
        %772 = vrot.lane.b32.xlu0 %v719, 28
        %v773 = vpop.permute.xlu0 %772
        %774 = vrot.lane.b32.xlu0 %v720, 28
        %v775 = vpop.permute.xlu0 %774
        %776 = vrot.lane.b32.xlu0 %v721, 28
        %v777 = vpop.permute.xlu0 %776
        %778 = vrot.lane.b32.xlu0 %v722, 28
        %v779 = vpop.permute.xlu0 %778
        %780 = vrot.lane.b32.xlu0 %v723, 28
        %v781 = vpop.permute.xlu0 %780
        %782 = vrot.lane.b32.xlu0 %v724, 28
        %v783 = vpop.permute.xlu0 %782
        %784 = vrot.lane.b32.xlu0 %v725, 28
        %v785 = vpop.permute.xlu0 %784
        %786 = vrot.lane.b32.xlu0 %v726, 28
        %v787 = vpop.permute.xlu0 %786
        %788 = vrot.lane.b32.xlu0 %v727, 28
        %v789 = vpop.permute.xlu0 %788
        %790 = vrot.lane.b32.xlu0 %v728, 28
        %v791 = vpop.permute.xlu0 %790
        %792 = vrot.lane.b32.xlu0 %v729, 28
        %v793 = vpop.permute.xlu0 %792
        %794 = vrot.lane.b32.xlu0 %v730, 28
        %v795 = vpop.permute.xlu0 %794
        %796 = vrot.lane.b32.xlu0 %v731, 28
        %v797 = vpop.permute.xlu0 %796
        %798 = vrot.lane.b32.xlu0 %v732, 28
        %v799 = vpop.permute.xlu0 %798
        %800 = vrot.lane.b32.xlu0 %v733, 28
        %v801 = vpop.permute.xlu0 %800
        %802 = vrot.lane.b32.xlu0 %v734, 28
        %v803 = vpop.permute.xlu0 %802
        %804 = vrot.lane.b32.xlu0 %v735, 28
        %v805 = vpop.permute.xlu0 %804
        %806 = vrot.lane.b32.xlu0 %v736, 28
        %v807 = vpop.permute.xlu0 %806
        %808 = vrot.lane.b32.xlu0 %v737, 28
        %v809 = vpop.permute.xlu0 %808
        %vm834 = vcmask 457952
        %835 = vst.msk [vmem:[#allocation2] sm:$0xff] %vm834, %v763
        %836 = vst.msk [vmem:[#allocation2 + $0x10] sm:$0xff] %vm834, %v765
        %837 = vst.msk [vmem:[#allocation2 + $0x20] sm:$0xff] %vm834, %v767
        %838 = vst.msk [vmem:[#allocation2 + $0x30] sm:$0xff] %vm834, %v769
        %839 = vst.msk [vmem:[#allocation2 + $0x40] sm:$0xff] %vm834, %v771
        %840 = vst.msk [vmem:[#allocation2 + $0x50] sm:$0xff] %vm834, %v773
        %841 = vst.msk [vmem:[#allocation2 + $0x60] sm:$0xff] %vm834, %v775
        %842 = vst.msk [vmem:[#allocation2 + $0x70] sm:$0xff] %vm834, %v777
        %843 = vst.msk [vmem:[#allocation2 + $0x80] sm:$0xff] %vm834, %v779
        %844 = vst.msk [vmem:[#allocation2 + $0x90] sm:$0xff] %vm834, %v781
        %845 = vst.msk [vmem:[#allocation2 + $0xa0] sm:$0xff] %vm834, %v783
        %846 = vst.msk [vmem:[#allocation2 + $0xb0] sm:$0xff] %vm834, %v785
        %847 = vst.msk [vmem:[#allocation2 + $0xc0] sm:$0xff] %vm834, %v787
        %848 = vst.msk [vmem:[#allocation2 + $0xd0] sm:$0xff] %vm834, %v789
        %849 = vst.msk [vmem:[#allocation2 + $0xe0] sm:$0xff] %vm834, %v791
        %850 = vst.msk [vmem:[#allocation2 + $0xf0] sm:$0xff] %vm834, %v793
        %851 = vst.msk [vmem:[#allocation2 + $0x100] sm:$0xff] %vm834, %v795
        %852 = vst.msk [vmem:[#allocation2 + $0x110] sm:$0xff] %vm834, %v797
        %853 = vst.msk [vmem:[#allocation2 + $0x120] sm:$0xff] %vm834, %v799
        %854 = vst.msk [vmem:[#allocation2 + $0x130] sm:$0xff] %vm834, %v801
        %855 = vst.msk [vmem:[#allocation2 + $0x140] sm:$0xff] %vm834, %v803
        %856 = vst.msk [vmem:[#allocation2 + $0x150] sm:$0xff] %vm834, %v805
        %857 = vst.msk [vmem:[#allocation2 + $0x160] sm:$0xff] %vm834, %v807
        %858 = vst.msk [vmem:[#allocation2 + $0x170] sm:$0xff] %vm834, %v809
        %v859 = vld [vmem:[%s663 + $0x2] sm:$0xff]
        %v860 = vld [vmem:[%s663 + $0xa] sm:$0xff]
        %v861 = vld [vmem:[%s663 + $0x12] sm:$0xff]
        %v862 = vld [vmem:[%s663 + $0x22] sm:$0xff]
        %v863 = vld [vmem:[%s663 + $0x2a] sm:$0xff]
        %v864 = vld [vmem:[%s663 + $0x32] sm:$0xff]
        %v865 = vld [vmem:[%s663 + $0x42] sm:$0xff]
        %v866 = vld [vmem:[%s663 + $0x4a] sm:$0xff]
        %v867 = vld [vmem:[%s663 + $0x52] sm:$0xff]
        %v868 = vld [vmem:[%s663 + $0x62] sm:$0xff]
        %v869 = vld [vmem:[%s663 + $0x6a] sm:$0xff]
        %v870 = vld [vmem:[%s663 + $0x72] sm:$0xff]
        %v871 = vld [vmem:[%s663 + $0x82] sm:$0xff]
        %v872 = vld [vmem:[%s663 + $0x8a] sm:$0xff]
        %v873 = vld [vmem:[%s663 + $0x92] sm:$0xff]
        %v874 = vld [vmem:[%s663 + $0xa2] sm:$0xff]
        %v875 = vld [vmem:[%s663 + $0xaa] sm:$0xff]
        %v876 = vld [vmem:[%s663 + $0xb2] sm:$0xff]
        %v877 = vld [vmem:[%s663 + $0xc2] sm:$0xff]
        %v878 = vld [vmem:[%s663 + $0xca] sm:$0xff]
        %v879 = vld [vmem:[%s663 + $0xd2] sm:$0xff]
        %v880 = vld [vmem:[%s663 + $0xe2] sm:$0xff]
        %v881 = vld [vmem:[%s663 + $0xea] sm:$0xff]
        %v882 = vld [vmem:[%s663 + $0xf2] sm:$0xff]
        %907 = vrot.lane.b32.xlu0 %v859, 56
        %v908 = vpop.permute.xlu0 %907
        %909 = vrot.lane.b32.xlu0 %v860, 56
        %v910 = vpop.permute.xlu0 %909
        %911 = vrot.lane.b32.xlu0 %v861, 56
        %v912 = vpop.permute.xlu0 %911
        %913 = vrot.lane.b32.xlu0 %v862, 56
        %v914 = vpop.permute.xlu0 %913
        %915 = vrot.lane.b32.xlu0 %v863, 56
        %v916 = vpop.permute.xlu0 %915
        %917 = vrot.lane.b32.xlu0 %v864, 56
        %v918 = vpop.permute.xlu0 %917
        %919 = vrot.lane.b32.xlu0 %v865, 56
        %v920 = vpop.permute.xlu0 %919
        %921 = vrot.lane.b32.xlu0 %v866, 56
        %v922 = vpop.permute.xlu0 %921
        %923 = vrot.lane.b32.xlu0 %v867, 56
        %v924 = vpop.permute.xlu0 %923
        %925 = vrot.lane.b32.xlu0 %v868, 56
        %v926 = vpop.permute.xlu0 %925
        %927 = vrot.lane.b32.xlu0 %v869, 56
        %v928 = vpop.permute.xlu0 %927
        %929 = vrot.lane.b32.xlu0 %v870, 56
        %v930 = vpop.permute.xlu0 %929
        %931 = vrot.lane.b32.xlu0 %v871, 56
        %v932 = vpop.permute.xlu0 %931
        %933 = vrot.lane.b32.xlu0 %v872, 56
        %v934 = vpop.permute.xlu0 %933
        %935 = vrot.lane.b32.xlu0 %v873, 56
        %v936 = vpop.permute.xlu0 %935
        %937 = vrot.lane.b32.xlu0 %v874, 56
        %v938 = vpop.permute.xlu0 %937
        %939 = vrot.lane.b32.xlu0 %v875, 56
        %v940 = vpop.permute.xlu0 %939
        %941 = vrot.lane.b32.xlu0 %v876, 56
        %v942 = vpop.permute.xlu0 %941
        %943 = vrot.lane.b32.xlu0 %v877, 56
        %v944 = vpop.permute.xlu0 %943
        %945 = vrot.lane.b32.xlu0 %v878, 56
        %v946 = vpop.permute.xlu0 %945
        %947 = vrot.lane.b32.xlu0 %v879, 56
        %v948 = vpop.permute.xlu0 %947
        %949 = vrot.lane.b32.xlu0 %v880, 56
        %v950 = vpop.permute.xlu0 %949
        %951 = vrot.lane.b32.xlu0 %v881, 56
        %v952 = vpop.permute.xlu0 %951
        %953 = vrot.lane.b32.xlu0 %v882, 56
        %v954 = vpop.permute.xlu0 %953
        %vm979 = vcmask 687552
        %980 = vst.msk [vmem:[#allocation2] sm:$0xff] %vm979, %v908
        %981 = vst.msk [vmem:[#allocation2 + $0x10] sm:$0xff] %vm979, %v910
        %982 = vst.msk [vmem:[#allocation2 + $0x20] sm:$0xff] %vm979, %v912
        %983 = vst.msk [vmem:[#allocation2 + $0x30] sm:$0xff] %vm979, %v914
        %984 = vst.msk [vmem:[#allocation2 + $0x40] sm:$0xff] %vm979, %v916
        %985 = vst.msk [vmem:[#allocation2 + $0x50] sm:$0xff] %vm979, %v918
        %986 = vst.msk [vmem:[#allocation2 + $0x60] sm:$0xff] %vm979, %v920
        %987 = vst.msk [vmem:[#allocation2 + $0x70] sm:$0xff] %vm979, %v922
        %988 = vst.msk [vmem:[#allocation2 + $0x80] sm:$0xff] %vm979, %v924
        %989 = vst.msk [vmem:[#allocation2 + $0x90] sm:$0xff] %vm979, %v926
        %990 = vst.msk [vmem:[#allocation2 + $0xa0] sm:$0xff] %vm979, %v928
        %991 = vst.msk [vmem:[#allocation2 + $0xb0] sm:$0xff] %vm979, %v930
        %992 = vst.msk [vmem:[#allocation2 + $0xc0] sm:$0xff] %vm979, %v932
        %993 = vst.msk [vmem:[#allocation2 + $0xd0] sm:$0xff] %vm979, %v934
        %994 = vst.msk [vmem:[#allocation2 + $0xe0] sm:$0xff] %vm979, %v936
        %995 = vst.msk [vmem:[#allocation2 + $0xf0] sm:$0xff] %vm979, %v938
        %996 = vst.msk [vmem:[#allocation2 + $0x100] sm:$0xff] %vm979, %v940
        %997 = vst.msk [vmem:[#allocation2 + $0x110] sm:$0xff] %vm979, %v942
        %998 = vst.msk [vmem:[#allocation2 + $0x120] sm:$0xff] %vm979, %v944
        %999 = vst.msk [vmem:[#allocation2 + $0x130] sm:$0xff] %vm979, %v946
        %1000 = vst.msk [vmem:[#allocation2 + $0x140] sm:$0xff] %vm979, %v948
        %1001 = vst.msk [vmem:[#allocation2 + $0x150] sm:$0xff] %vm979, %v950
        %1002 = vst.msk [vmem:[#allocation2 + $0x160] sm:$0xff] %vm979, %v952
        %1003 = vst.msk [vmem:[#allocation2 + $0x170] sm:$0xff] %vm979, %v954
        %v1004 = vld [vmem:[%s663 + $0x3] sm:$0xff]
        %v1005 = vld [vmem:[%s663 + $0xb] sm:$0xff]
        %v1006 = vld [vmem:[%s663 + $0x13] sm:$0xff]
        %v1007 = vld [vmem:[%s663 + $0x23] sm:$0xff]
        %v1008 = vld [vmem:[%s663 + $0x2b] sm:$0xff]
        %v1009 = vld [vmem:[%s663 + $0x33] sm:$0xff]
        %v1010 = vld [vmem:[%s663 + $0x43] sm:$0xff]
        %v1011 = vld [vmem:[%s663 + $0x4b] sm:$0xff]
        %v1012 = vld [vmem:[%s663 + $0x53] sm:$0xff]
        %v1013 = vld [vmem:[%s663 + $0x63] sm:$0xff]
        %v1014 = vld [vmem:[%s663 + $0x6b] sm:$0xff]
        %v1015 = vld [vmem:[%s663 + $0x73] sm:$0xff]
        %v1016 = vld [vmem:[%s663 + $0x83] sm:$0xff]
        %v1017 = vld [vmem:[%s663 + $0x8b] sm:$0xff]
        %v1018 = vld [vmem:[%s663 + $0x93] sm:$0xff]
        %v1019 = vld [vmem:[%s663 + $0xa3] sm:$0xff]
        %v1020 = vld [vmem:[%s663 + $0xab] sm:$0xff]
        %v1021 = vld [vmem:[%s663 + $0xb3] sm:$0xff]
        %v1022 = vld [vmem:[%s663 + $0xc3] sm:$0xff]
        %v1023 = vld [vmem:[%s663 + $0xcb] sm:$0xff]
        %v1024 = vld [vmem:[%s663 + $0xd3] sm:$0xff]
        %v1025 = vld [vmem:[%s663 + $0xe3] sm:$0xff]
        %v1026 = vld [vmem:[%s663 + $0xeb] sm:$0xff]
        %v1027 = vld [vmem:[%s663 + $0xf3] sm:$0xff]
        %1052 = vrot.lane.b32.xlu0 %v1004, 84
        %v1053 = vpop.permute.xlu0 %1052
        %1054 = vrot.lane.b32.xlu0 %v1005, 84
        %v1055 = vpop.permute.xlu0 %1054
        %1056 = vrot.lane.b32.xlu0 %v1006, 84
        %v1057 = vpop.permute.xlu0 %1056
        %1058 = vrot.lane.b32.xlu0 %v1007, 84
        %v1059 = vpop.permute.xlu0 %1058
        %1060 = vrot.lane.b32.xlu0 %v1008, 84
        %v1061 = vpop.permute.xlu0 %1060
        %1062 = vrot.lane.b32.xlu0 %v1009, 84
        %v1063 = vpop.permute.xlu0 %1062
        %1064 = vrot.lane.b32.xlu0 %v1010, 84
        %v1065 = vpop.permute.xlu0 %1064
        %1066 = vrot.lane.b32.xlu0 %v1011, 84
        %v1067 = vpop.permute.xlu0 %1066
        %1068 = vrot.lane.b32.xlu0 %v1012, 84
        %v1069 = vpop.permute.xlu0 %1068
        %1070 = vrot.lane.b32.xlu0 %v1013, 84
        %v1071 = vpop.permute.xlu0 %1070
        %1072 = vrot.lane.b32.xlu0 %v1014, 84
        %v1073 = vpop.permute.xlu0 %1072
        %1074 = vrot.lane.b32.xlu0 %v1015, 84
        %v1075 = vpop.permute.xlu0 %1074
        %1076 = vrot.lane.b32.xlu0 %v1016, 84
        %v1077 = vpop.permute.xlu0 %1076
        %1078 = vrot.lane.b32.xlu0 %v1017, 84
        %v1079 = vpop.permute.xlu0 %1078
        %1080 = vrot.lane.b32.xlu0 %v1018, 84
        %v1081 = vpop.permute.xlu0 %1080
        %1082 = vrot.lane.b32.xlu0 %v1019, 84
        %v1083 = vpop.permute.xlu0 %1082
        %1084 = vrot.lane.b32.xlu0 %v1020, 84
        %v1085 = vpop.permute.xlu0 %1084
        %1086 = vrot.lane.b32.xlu0 %v1021, 84
        %v1087 = vpop.permute.xlu0 %1086
        %1088 = vrot.lane.b32.xlu0 %v1022, 84
        %v1089 = vpop.permute.xlu0 %1088
        %1090 = vrot.lane.b32.xlu0 %v1023, 84
        %v1091 = vpop.permute.xlu0 %1090
        %1092 = vrot.lane.b32.xlu0 %v1024, 84
        %v1093 = vpop.permute.xlu0 %1092
        %1094 = vrot.lane.b32.xlu0 %v1025, 84
        %v1095 = vpop.permute.xlu0 %1094
        %1096 = vrot.lane.b32.xlu0 %v1026, 84
        %v1097 = vpop.permute.xlu0 %1096
        %1098 = vrot.lane.b32.xlu0 %v1027, 84
        %v1099 = vpop.permute.xlu0 %1098
        %vm1124 = vcmask 917152
        %1125 = vst.msk [vmem:[#allocation2] sm:$0xff] %vm1124, %v1053
        %1126 = vst.msk [vmem:[#allocation2 + $0x10] sm:$0xff] %vm1124, %v1055
        %1127 = vst.msk [vmem:[#allocation2 + $0x20] sm:$0xff] %vm1124, %v1057
        %1128 = vst.msk [vmem:[#allocation2 + $0x30] sm:$0xff] %vm1124, %v1059
        %1129 = vst.msk [vmem:[#allocation2 + $0x40] sm:$0xff] %vm1124, %v1061
        %1130 = vst.msk [vmem:[#allocation2 + $0x50] sm:$0xff] %vm1124, %v1063
        %1131 = vst.msk [vmem:[#allocation2 + $0x60] sm:$0xff] %vm1124, %v1065
        %1132 = vst.msk [vmem:[#allocation2 + $0x70] sm:$0xff] %vm1124, %v1067
        %1133 = vst.msk [vmem:[#allocation2 + $0x80] sm:$0xff] %vm1124, %v1069
        %1134 = vst.msk [vmem:[#allocation2 + $0x90] sm:$0xff] %vm1124, %v1071
        %1135 = vst.msk [vmem:[#allocation2 + $0xa0] sm:$0xff] %vm1124, %v1073
        %1136 = vst.msk [vmem:[#allocation2 + $0xb0] sm:$0xff] %vm1124, %v1075
        %1137 = vst.msk [vmem:[#allocation2 + $0xc0] sm:$0xff] %vm1124, %v1077
        %1138 = vst.msk [vmem:[#allocation2 + $0xd0] sm:$0xff] %vm1124, %v1079
        %1139 = vst.msk [vmem:[#allocation2 + $0xe0] sm:$0xff] %vm1124, %v1081
        %1140 = vst.msk [vmem:[#allocation2 + $0xf0] sm:$0xff] %vm1124, %v1083
        %1141 = vst.msk [vmem:[#allocation2 + $0x100] sm:$0xff] %vm1124, %v1085
        %1142 = vst.msk [vmem:[#allocation2 + $0x110] sm:$0xff] %vm1124, %v1087
        %1143 = vst.msk [vmem:[#allocation2 + $0x120] sm:$0xff] %vm1124, %v1089
        %1144 = vst.msk [vmem:[#allocation2 + $0x130] sm:$0xff] %vm1124, %v1091
        %1145 = vst.msk [vmem:[#allocation2 + $0x140] sm:$0xff] %vm1124, %v1093
        %1146 = vst.msk [vmem:[#allocation2 + $0x150] sm:$0xff] %vm1124, %v1095
        %1147 = vst.msk [vmem:[#allocation2 + $0x160] sm:$0xff] %vm1124, %v1097
        %1148 = vst.msk [vmem:[#allocation2 + $0x170] sm:$0xff] %vm1124, %v1099
        %v1149 = vld [vmem:[%s663 + $0x4] sm:$0xff]
        %v1150 = vld [vmem:[%s663 + $0xc] sm:$0xff]
        %v1151 = vld [vmem:[%s663 + $0x14] sm:$0xff]
        %v1152 = vld [vmem:[%s663 + $0x24] sm:$0xff]
        %v1153 = vld [vmem:[%s663 + $0x2c] sm:$0xff]
        %v1154 = vld [vmem:[%s663 + $0x34] sm:$0xff]
        %v1155 = vld [vmem:[%s663 + $0x44] sm:$0xff]
        %v1156 = vld [vmem:[%s663 + $0x4c] sm:$0xff]
        %v1157 = vld [vmem:[%s663 + $0x54] sm:$0xff]
        %v1158 = vld [vmem:[%s663 + $0x64] sm:$0xff]
        %v1159 = vld [vmem:[%s663 + $0x6c] sm:$0xff]
        %v1160 = vld [vmem:[%s663 + $0x74] sm:$0xff]
        %v1161 = vld [vmem:[%s663 + $0x84] sm:$0xff]
        %v1162 = vld [vmem:[%s663 + $0x8c] sm:$0xff]
        %v1163 = vld [vmem:[%s663 + $0x94] sm:$0xff]
        %v1164 = vld [vmem:[%s663 + $0xa4] sm:$0xff]
        %v1165 = vld [vmem:[%s663 + $0xac] sm:$0xff]
        %v1166 = vld [vmem:[%s663 + $0xb4] sm:$0xff]
        %v1167 = vld [vmem:[%s663 + $0xc4] sm:$0xff]
        %v1168 = vld [vmem:[%s663 + $0xcc] sm:$0xff]
        %v1169 = vld [vmem:[%s663 + $0xd4] sm:$0xff]
        %v1170 = vld [vmem:[%s663 + $0xe4] sm:$0xff]
        %v1171 = vld [vmem:[%s663 + $0xec] sm:$0xff]
        %v1172 = vld [vmem:[%s663 + $0xf4] sm:$0xff]
        %1197 = vrot.lane.b32.xlu0 %v1149, 112
        %v1198 = vpop.permute.xlu0 %1197
        %1199 = vrot.lane.b32.xlu0 %v1150, 112
        %v1200 = vpop.permute.xlu0 %1199
        %1201 = vrot.lane.b32.xlu0 %v1151, 112
        %v1202 = vpop.permute.xlu0 %1201
        %1203 = vrot.lane.b32.xlu0 %v1152, 112
        %v1204 = vpop.permute.xlu0 %1203
        %1205 = vrot.lane.b32.xlu0 %v1153, 112
        %v1206 = vpop.permute.xlu0 %1205
        %1207 = vrot.lane.b32.xlu0 %v1154, 112
        %v1208 = vpop.permute.xlu0 %1207
        %1209 = vrot.lane.b32.xlu0 %v1155, 112
        %v1210 = vpop.permute.xlu0 %1209
        %1211 = vrot.lane.b32.xlu0 %v1156, 112
        %v1212 = vpop.permute.xlu0 %1211
        %1213 = vrot.lane.b32.xlu0 %v1157, 112
        %v1214 = vpop.permute.xlu0 %1213
        %1215 = vrot.lane.b32.xlu0 %v1158, 112
        %v1216 = vpop.permute.xlu0 %1215
        %1217 = vrot.lane.b32.xlu0 %v1159, 112
        %v1218 = vpop.permute.xlu0 %1217
        %1219 = vrot.lane.b32.xlu0 %v1160, 112
        %v1220 = vpop.permute.xlu0 %1219
        %1221 = vrot.lane.b32.xlu0 %v1161, 112
        %v1222 = vpop.permute.xlu0 %1221
        %1223 = vrot.lane.b32.xlu0 %v1162, 112
        %v1224 = vpop.permute.xlu0 %1223
        %1225 = vrot.lane.b32.xlu0 %v1163, 112
        %v1226 = vpop.permute.xlu0 %1225
        %1227 = vrot.lane.b32.xlu0 %v1164, 112
        %v1228 = vpop.permute.xlu0 %1227
        %1229 = vrot.lane.b32.xlu0 %v1165, 112
        %v1230 = vpop.permute.xlu0 %1229
        %1231 = vrot.lane.b32.xlu0 %v1166, 112
        %v1232 = vpop.permute.xlu0 %1231
        %1233 = vrot.lane.b32.xlu0 %v1167, 112
        %v1234 = vpop.permute.xlu0 %1233
        %1235 = vrot.lane.b32.xlu0 %v1168, 112
        %v1236 = vpop.permute.xlu0 %1235
        %1237 = vrot.lane.b32.xlu0 %v1169, 112
        %v1238 = vpop.permute.xlu0 %1237
        %1239 = vrot.lane.b32.xlu0 %v1170, 112
        %v1240 = vpop.permute.xlu0 %1239
        %1241 = vrot.lane.b32.xlu0 %v1171, 112
        %v1242 = vpop.permute.xlu0 %1241
        %1243 = vrot.lane.b32.xlu0 %v1172, 112
        %v1244 = vpop.permute.xlu0 %1243
        %vm1269 = vcmask 1048448
        %1270 = vst.msk [vmem:[#allocation2] sm:$0xff] %vm1269, %v1198
        %vm1271 = vcmask 97280
        %1272 = vst.msk [vmem:[#allocation2 + $0x8] sm:$0xff] %vm1271, %v1198
        %1273 = vst.msk [vmem:[#allocation2 + $0x10] sm:$0xff] %vm1269, %v1200
        %1274 = vst.msk [vmem:[#allocation2 + $0x18] sm:$0xff] %vm1271, %v1200
        %1275 = vst.msk [vmem:[#allocation2 + $0x20] sm:$0xff] %vm1269, %v1202
        %1276 = vst.msk [vmem:[#allocation2 + $0x28] sm:$0xff] %vm1271, %v1202
        %1277 = vst.msk [vmem:[#allocation2 + $0x30] sm:$0xff] %vm1269, %v1204
        %1278 = vst.msk [vmem:[#allocation2 + $0x38] sm:$0xff] %vm1271, %v1204
        %1279 = vst.msk [vmem:[#allocation2 + $0x40] sm:$0xff] %vm1269, %v1206
        %1280 = vst.msk [vmem:[#allocation2 + $0x48] sm:$0xff] %vm1271, %v1206
        %1281 = vst.msk [vmem:[#allocation2 + $0x50] sm:$0xff] %vm1269, %v1208
        %1282 = vst.msk [vmem:[#allocation2 + $0x58] sm:$0xff] %vm1271, %v1208
        %1283 = vst.msk [vmem:[#allocation2 + $0x60] sm:$0xff] %vm1269, %v1210
        %1284 = vst.msk [vmem:[#allocation2 + $0x68] sm:$0xff] %vm1271, %v1210
        %1285 = vst.msk [vmem:[#allocation2 + $0x70] sm:$0xff] %vm1269, %v1212
        %1286 = vst.msk [vmem:[#allocation2 + $0x78] sm:$0xff] %vm1271, %v1212
        %1287 = vst.msk [vmem:[#allocation2 + $0x80] sm:$0xff] %vm1269, %v1214
        %1288 = vst.msk [vmem:[#allocation2 + $0x88] sm:$0xff] %vm1271, %v1214
        %1289 = vst.msk [vmem:[#allocation2 + $0x90] sm:$0xff] %vm1269, %v1216
        %1290 = vst.msk [vmem:[#allocation2 + $0x98] sm:$0xff] %vm1271, %v1216
        %1291 = vst.msk [vmem:[#allocation2 + $0xa0] sm:$0xff] %vm1269, %v1218
        %1292 = vst.msk [vmem:[#allocation2 + $0xa8] sm:$0xff] %vm1271, %v1218
        %1293 = vst.msk [vmem:[#allocation2 + $0xb0] sm:$0xff] %vm1269, %v1220
        %1294 = vst.msk [vmem:[#allocation2 + $0xb8] sm:$0xff] %vm1271, %v1220
        %1295 = vst.msk [vmem:[#allocation2 + $0xc0] sm:$0xff] %vm1269, %v1222
        %1296 = vst.msk [vmem:[#allocation2 + $0xc8] sm:$0xff] %vm1271, %v1222
        %1297 = vst.msk [vmem:[#allocation2 + $0xd0] sm:$0xff] %vm1269, %v1224
        %1298 = vst.msk [vmem:[#allocation2 + $0xd8] sm:$0xff] %vm1271, %v1224
        %1299 = vst.msk [vmem:[#allocation2 + $0xe0] sm:$0xff] %vm1269, %v1226
        %1300 = vst.msk [vmem:[#allocation2 + $0xe8] sm:$0xff] %vm1271, %v1226
        %1301 = vst.msk [vmem:[#allocation2 + $0xf0] sm:$0xff] %vm1269, %v1228
        %1302 = vst.msk [vmem:[#allocation2 + $0xf8] sm:$0xff] %vm1271, %v1228
        %1303 = vst.msk [vmem:[#allocation2 + $0x100] sm:$0xff] %vm1269, %v1230
        %1304 = vst.msk [vmem:[#allocation2 + $0x108] sm:$0xff] %vm1271, %v1230
        %1305 = vst.msk [vmem:[#allocation2 + $0x110] sm:$0xff] %vm1269, %v1232
        %1306 = vst.msk [vmem:[#allocation2 + $0x118] sm:$0xff] %vm1271, %v1232
        %1307 = vst.msk [vmem:[#allocation2 + $0x120] sm:$0xff] %vm1269, %v1234
        %1308 = vst.msk [vmem:[#allocation2 + $0x128] sm:$0xff] %vm1271, %v1234
        %1309 = vst.msk [vmem:[#allocation2 + $0x130] sm:$0xff] %vm1269, %v1236
        %1310 = vst.msk [vmem:[#allocation2 + $0x138] sm:$0xff] %vm1271, %v1236
        %1311 = vst.msk [vmem:[#allocation2 + $0x140] sm:$0xff] %vm1269, %v1238
        %1312 = vst.msk [vmem:[#allocation2 + $0x148] sm:$0xff] %vm1271, %v1238
        %1313 = vst.msk [vmem:[#allocation2 + $0x150] sm:$0xff] %vm1269, %v1240
        %1314 = vst.msk [vmem:[#allocation2 + $0x158] sm:$0xff] %vm1271, %v1240
        %1315 = vst.msk [vmem:[#allocation2 + $0x160] sm:$0xff] %vm1269, %v1242
        %1316 = vst.msk [vmem:[#allocation2 + $0x168] sm:$0xff] %vm1271, %v1242
        %1317 = vst.msk [vmem:[#allocation2 + $0x170] sm:$0xff] %vm1269, %v1244
        %1318 = vst.msk [vmem:[#allocation2 + $0x178] sm:$0xff] %vm1271, %v1244
        %v1319 = vld [vmem:[#allocation2] sm:$0xff]
        %v1320 = vld [vmem:[#allocation2 + $0x8] sm:$0xff]
        %v1321 = vld [vmem:[#allocation2 + $0x10] sm:$0xff]
        %v1322 = vld [vmem:[#allocation2 + $0x18] sm:$0xff]
        %v1323 = vld [vmem:[#allocation2 + $0x20] sm:$0xff]
        %v1324 = vld [vmem:[#allocation2 + $0x28] sm:$0xff]
        %v1325 = vld [vmem:[#allocation2 + $0x30] sm:$0xff]
        %v1326 = vld [vmem:[#allocation2 + $0x38] sm:$0xff]
        %v1327 = vld [vmem:[#allocation2 + $0x40] sm:$0xff]
        %v1328 = vld [vmem:[#allocation2 + $0x48] sm:$0xff]
        %v1329 = vld [vmem:[#allocation2 + $0x50] sm:$0xff]
        %v1330 = vld [vmem:[#allocation2 + $0x58] sm:$0xff]
        %v1331 = vld [vmem:[#allocation2 + $0x60] sm:$0xff]
        %v1332 = vld [vmem:[#allocation2 + $0x68] sm:$0xff]
        %v1333 = vld [vmem:[#allocation2 + $0x70] sm:$0xff]
        %v1334 = vld [vmem:[#allocation2 + $0x78] sm:$0xff]
        %v1335 = vld [vmem:[#allocation2 + $0x80] sm:$0xff]
        %v1336 = vld [vmem:[#allocation2 + $0x88] sm:$0xff]
        %v1337 = vld [vmem:[#allocation2 + $0x90] sm:$0xff]
        %v1338 = vld [vmem:[#allocation2 + $0x98] sm:$0xff]
        %v1339 = vld [vmem:[#allocation2 + $0xa0] sm:$0xff]
        %v1340 = vld [vmem:[#allocation2 + $0xa8] sm:$0xff]
        %v1341 = vld [vmem:[#allocation2 + $0xb0] sm:$0xff]
        %v1342 = vld [vmem:[#allocation2 + $0xb8] sm:$0xff]
        %v1343 = vld [vmem:[#allocation2 + $0xc0] sm:$0xff]
        %v1344 = vld [vmem:[#allocation2 + $0xc8] sm:$0xff]
        %v1345 = vld [vmem:[#allocation2 + $0xd0] sm:$0xff]
        %v1346 = vld [vmem:[#allocation2 + $0xd8] sm:$0xff]
        %v1347 = vld [vmem:[#allocation2 + $0xe0] sm:$0xff]
        %v1348 = vld [vmem:[#allocation2 + $0xe8] sm:$0xff]
        %v1349 = vld [vmem:[#allocation2 + $0xf0] sm:$0xff]
        %v1350 = vld [vmem:[#allocation2 + $0xf8] sm:$0xff]
        %v1351 = vld [vmem:[#allocation2 + $0x100] sm:$0xff]
        %v1352 = vld [vmem:[#allocation2 + $0x108] sm:$0xff]
        %v1353 = vld [vmem:[#allocation2 + $0x110] sm:$0xff]
        %v1354 = vld [vmem:[#allocation2 + $0x118] sm:$0xff]
        %v1355 = vld [vmem:[#allocation2 + $0x120] sm:$0xff]
        %v1356 = vld [vmem:[#allocation2 + $0x128] sm:$0xff]
        %v1357 = vld [vmem:[#allocation2 + $0x130] sm:$0xff]
        %v1358 = vld [vmem:[#allocation2 + $0x138] sm:$0xff]
        %v1359 = vld [vmem:[#allocation2 + $0x140] sm:$0xff]
        %v1360 = vld [vmem:[#allocation2 + $0x148] sm:$0xff]
        %v1361 = vld [vmem:[#allocation2 + $0x150] sm:$0xff]
        %v1362 = vld [vmem:[#allocation2 + $0x158] sm:$0xff]
        %v1363 = vld [vmem:[#allocation2 + $0x160] sm:$0xff]
        %v1364 = vld [vmem:[#allocation2 + $0x168] sm:$0xff]
        %v1365 = vld [vmem:[#allocation2 + $0x170] sm:$0xff]
        %v1366 = vld [vmem:[#allocation2 + $0x178] sm:$0xff]
        %v1367 = vld [vmem:[%s1] sm:$0xff]
        %v1368 = vld [vmem:[%s1 + $0x8] sm:$0xff]
        %v1369 = vld [vmem:[%s1 + $0x10] sm:$0xff]
        %v1370 = vld [vmem:[%s1 + $0x18] sm:$0xff]
        %v1371 = vld [vmem:[%s1 + $0x20] sm:$0xff]
        %v1372 = vld [vmem:[%s1 + $0x28] sm:$0xff]
        %v1373 = vld [vmem:[%s1 + $0x30] sm:$0xff]
        %v1374 = vld [vmem:[%s1 + $0x38] sm:$0xff]
        %v1375 = vld [vmem:[%s1 + $0x40] sm:$0xff]
        %v1376 = vld [vmem:[%s1 + $0x48] sm:$0xff]
        %v1377 = vld [vmem:[%s1 + $0x50] sm:$0xff]
        %v1378 = vld [vmem:[%s1 + $0x58] sm:$0xff]
        %v1379 = vld [vmem:[%s1 + $0x60] sm:$0xff]
        %v1380 = vld [vmem:[%s1 + $0x68] sm:$0xff]
        %v1381 = vld [vmem:[%s1 + $0x70] sm:$0xff]
        %v1382 = vld [vmem:[%s1 + $0x78] sm:$0xff]
        %v1383 = vld [vmem:[%s1 + $0x80] sm:$0xff]
        %v1384 = vld [vmem:[%s1 + $0x88] sm:$0xff]
        %v1385 = vld [vmem:[%s1 + $0x90] sm:$0xff]
        %v1386 = vld [vmem:[%s1 + $0x98] sm:$0xff]
        %v1387 = vld [vmem:[%s1 + $0xa0] sm:$0xff]
        %v1388 = vld [vmem:[%s1 + $0xa8] sm:$0xff]
        %v1389 = vld [vmem:[%s1 + $0xb0] sm:$0xff]
        %v1390 = vld [vmem:[%s1 + $0xb8] sm:$0xff]
        %v1391 = vld [vmem:[%s1 + $0xc0] sm:$0xff]
        %v1392 = vld [vmem:[%s1 + $0xc8] sm:$0xff]
        %v1393 = vld [vmem:[%s1 + $0xd0] sm:$0xff]
        %v1394 = vld [vmem:[%s1 + $0xd8] sm:$0xff]
        %v1395 = vld [vmem:[%s1 + $0xe0] sm:$0xff]
        %v1396 = vld [vmem:[%s1 + $0xe8] sm:$0xff]
        %v1397 = vld [vmem:[%s1 + $0xf0] sm:$0xff]
        %v1398 = vld [vmem:[%s1 + $0xf8] sm:$0xff]
        %v1399 = vld [vmem:[%s1 + $0x100] sm:$0xff]
        %v1400 = vld [vmem:[%s1 + $0x108] sm:$0xff]
        %v1401 = vld [vmem:[%s1 + $0x110] sm:$0xf]
        %v1402 = vld [vmem:[%s1 + $0x118] sm:$0xf]
        %v1403 = vld [vmem:[%s2] sm:$0x3]
        %v1405 = vlaneseq
        %v1406 = vshrl.u32 %v1405, 7
        %v1407 = vsub.s32 0, %v1406
        %v1408 = vrot.slane %v1403, %v1407
        %v1409 = vlaneseq
        %v1410 = vshrl.u32 %v1409, 7
        %v1411 = vsub.s32 1, %v1410
        %v1412 = vrot.slane %v1403, %v1411
        %v1416 = vsel %vm1271, %v1320, 0
        %v1419 = vsel %vm1271, %v1322, 0
        %v1422 = vsel %vm1271, %v1324, 0
        %v1425 = vsel %vm1271, %v1326, 0
        %v1428 = vsel %vm1271, %v1328, 0
        %v1431 = vsel %vm1271, %v1330, 0
        %v1434 = vsel %vm1271, %v1332, 0
        %v1437 = vsel %vm1271, %v1334, 0
        %v1440 = vsel %vm1271, %v1336, 0
        %v1443 = vsel %vm1271, %v1338, 0
        %v1446 = vsel %vm1271, %v1340, 0
        %v1449 = vsel %vm1271, %v1342, 0
        %v1452 = vsel %vm1271, %v1344, 0
        %v1455 = vsel %vm1271, %v1346, 0
        %v1458 = vsel %vm1271, %v1348, 0
        %v1461 = vsel %vm1271, %v1350, 0
        %v1464 = vsel %vm1271, %v1352, 0
        %v1467 = vsel %vm1271, %v1354, 0
        %v1470 = vsel %vm1271, %v1356, 0
        %v1473 = vsel %vm1271, %v1358, 0
        %v1476 = vsel %vm1271, %v1360, 0
        %v1479 = vsel %vm1271, %v1362, 0
        %v1482 = vsel %vm1271, %v1364, 0
        %v1485 = vsel %vm1271, %v1366, 0
        %vm1487 = vcmask 1043456
        %v1489 = vsel %vm1487, %v1401, 0
        %v1492 = vsel %vm1487, %v1402, 0
        %1494 = vmatprep.subr.mxu0 %v1368
        %1495 = vmatpush1.msra.mxu0 %v1367
        %1496 = vmatprep.subr.mxu0 %v1370
        %1497 = vmatpush1.msra.mxu0 %v1369
        %1498 = vmatprep.subr.mxu0 %v1372
        %1499 = vmatpush1.msra.mxu0 %v1371
        %1500 = vmatprep.subr.mxu0 %v1374
        %1501 = vmatpush1.msra.mxu0 %v1373
        %1502 = vmatprep.subr.mxu0 %v1376
        %1503 = vmatpush1.msra.mxu0 %v1375
        %1504 = vmatprep.subr.mxu0 %v1378
        %1505 = vmatpush1.msra.mxu0 %v1377
        %1506 = vmatprep.subr.mxu0 %v1380
        %1507 = vmatpush1.msra.mxu0 %v1379
        %1508 = vmatprep.subr.mxu0 %v1382
        %1509 = vmatpush1.msra.mxu0 %v1381
        %1510 = vmatprep.subr.mxu0 %v1384
        %1511 = vmatpush1.msra.mxu0 %v1383
        %1512 = vmatprep.subr.mxu0 %v1386
        %1513 = vmatpush1.msra.mxu0 %v1385
        %1514 = vmatprep.subr.mxu0 %v1388
        %1515 = vmatpush1.msra.mxu0 %v1387
        %1516 = vmatprep.subr.mxu0 %v1390
        %1517 = vmatpush1.msra.mxu0 %v1389
        %1518 = vmatprep.subr.mxu0 %v1392
        %1519 = vmatpush1.msra.mxu0 %v1391
        %1520 = vmatprep.subr.mxu0 %v1394
        %1521 = vmatpush1.msra.mxu0 %v1393
        %1522 = vmatprep.subr.mxu0 %v1396
        %1523 = vmatpush1.msra.mxu0 %v1395
        %1524 = vmatprep.subr.mxu0 %v1398
        %1525 = vmatpush1.msra.mxu0 %v1397
        %1526 = vmatprep.subr.mxu0 %v1400
        %1527 = vmatpush1.msra.mxu0 %v1399
        %1528 = vmatprep.subr.mxu0 %v1492
        %1529 = vmatpush1.msra.mxu0 %v1489
        %1530 = vmatprep.subr.mxu0 0.0
        %1531 = vmatpush1.msra.mxu0 0.0
        %1532 = vmatprep.subr.mxu0 0.0
        %1533 = vmatpush1.msra.mxu0 0.0
        %1534 = vmatprep.subr.mxu0 0.0
        %1535 = vmatpush1.msra.mxu0 0.0
        %1536 = vmatprep.subr.mxu0 0.0
        %1537 = vmatpush1.msra.mxu0 0.0
        %1538 = vmatprep.subr.mxu0 0.0
        %1539 = vmatpush1.msra.mxu0 0.0
        %1540 = vmatprep.subr.mxu0 0.0
        %1541 = vmatpush1.msra.mxu0 0.0
        %1542 = vmatprep.subr.mxu0 0.0
        %1543 = vmatpush1.msra.mxu0 0.0
        %1544 = vmatprep.subr.mxu0 0.0
        %1545 = vmatpush1.msra.mxu0 0.0
        %1546 = vmatprep.subr.mxu0 0.0
        %1547 = vmatpush1.msra.mxu0 0.0
        %1548 = vmatprep.subr.mxu0 0.0
        %1549 = vmatpush1.msra.mxu0 0.0
        %1550 = vmatprep.subr.mxu0 0.0
        %1551 = vmatpush1.msra.mxu0 0.0
        %1552 = vmatprep.subr.mxu0 0.0
        %1553 = vmatpush1.msra.mxu0 0.0
        %1554 = vmatprep.subr.mxu0 0.0
        %1555 = vmatpush1.msra.mxu0 0.0
        %1556 = vmatprep.subr.mxu0 0.0
        %1557 = vmatpush1.msra.mxu0 0.0
        %1558 = vmatprep.mubr.f32.mxu0 %v1416
        %1559 = vmatmul.mubr.f32.gmra.mrb[0].mxu0 %v1319
        %v1560 = vpop.f32.mrb[0].mxu0
        %v1561 = vadd.f32 %v1408, %v1560
        %v1562 = vpop.f32.mrb[0].mxu0
        %v1563 = vadd.f32 %v1412, %v1562
        %1564 = vmatprep.mubr.f32.mxu0 %v1419
        %1565 = vmatmul.mubr.f32.gmra.mrb[0].mxu0 %v1321
        %v1566 = vpop.f32.mrb[0].mxu0
        %v1567 = vadd.f32 %v1408, %v1566
        %v1568 = vpop.f32.mrb[0].mxu0
        %v1569 = vadd.f32 %v1412, %v1568
        %1570 = vmatprep.mubr.f32.mxu0 %v1422
        %1571 = vmatmul.mubr.f32.gmra.mrb[0].mxu0 %v1323
        %v1572 = vpop.f32.mrb[0].mxu0
        %v1573 = vadd.f32 %v1408, %v1572
        %v1574 = vpop.f32.mrb[0].mxu0
        %v1575 = vadd.f32 %v1412, %v1574
        %1576 = vmatprep.mubr.f32.mxu0 %v1425
        %1577 = vmatmul.mubr.f32.gmra.mrb[0].mxu0 %v1325
        %v1578 = vpop.f32.mrb[0].mxu0
        %v1579 = vadd.f32 %v1408, %v1578
        %v1580 = vpop.f32.mrb[0].mxu0
        %v1581 = vadd.f32 %v1412, %v1580
        %1582 = vmatprep.mubr.f32.mxu0 %v1428
        %1583 = vmatmul.mubr.f32.gmra.mrb[0].mxu0 %v1327
        %v1584 = vpop.f32.mrb[0].mxu0
        %v1585 = vadd.f32 %v1408, %v1584
        %v1586 = vpop.f32.mrb[0].mxu0
        %v1587 = vadd.f32 %v1412, %v1586
        %1588 = vmatprep.mubr.f32.mxu0 %v1431
        %1589 = vmatmul.mubr.f32.gmra.mrb[0].mxu0 %v1329
        %v1590 = vpop.f32.mrb[0].mxu0
        %v1591 = vadd.f32 %v1408, %v1590
        %v1592 = vpop.f32.mrb[0].mxu0
        %v1593 = vadd.f32 %v1412, %v1592
        %1594 = vmatprep.mubr.f32.mxu0 %v1434
        %1595 = vmatmul.mubr.f32.gmra.mrb[0].mxu0 %v1331
        %v1596 = vpop.f32.mrb[0].mxu0
        %v1597 = vadd.f32 %v1408, %v1596
        %v1598 = vpop.f32.mrb[0].mxu0
        %v1599 = vadd.f32 %v1412, %v1598
        %1600 = vmatprep.mubr.f32.mxu0 %v1437
        %1601 = vmatmul.mubr.f32.gmra.mrb[0].mxu0 %v1333
        %v1602 = vpop.f32.mrb[0].mxu0
        %v1603 = vadd.f32 %v1408, %v1602
        %v1604 = vpop.f32.mrb[0].mxu0
        %v1605 = vadd.f32 %v1412, %v1604
        %1606 = vmatprep.mubr.f32.mxu0 %v1440
        %1607 = vmatmul.mubr.f32.gmra.mrb[0].mxu0 %v1335
        %v1608 = vpop.f32.mrb[0].mxu0
        %v1609 = vadd.f32 %v1408, %v1608
        %v1610 = vpop.f32.mrb[0].mxu0
        %v1611 = vadd.f32 %v1412, %v1610
        %1612 = vmatprep.mubr.f32.mxu0 %v1443
        %1613 = vmatmul.mubr.f32.gmra.mrb[0].mxu0 %v1337
        %v1614 = vpop.f32.mrb[0].mxu0
        %v1615 = vadd.f32 %v1408, %v1614
        %v1616 = vpop.f32.mrb[0].mxu0
        %v1617 = vadd.f32 %v1412, %v1616
        %1618 = vmatprep.mubr.f32.mxu0 %v1446
        %1619 = vmatmul.mubr.f32.gmra.mrb[0].mxu0 %v1339
        %v1620 = vpop.f32.mrb[0].mxu0
        %v1621 = vadd.f32 %v1408, %v1620
        %v1622 = vpop.f32.mrb[0].mxu0
        %v1623 = vadd.f32 %v1412, %v1622
        %1624 = vmatprep.mubr.f32.mxu0 %v1449
        %1625 = vmatmul.mubr.f32.gmra.mrb[0].mxu0 %v1341
        %v1626 = vpop.f32.mrb[0].mxu0
        %v1627 = vadd.f32 %v1408, %v1626
        %v1628 = vpop.f32.mrb[0].mxu0
        %v1629 = vadd.f32 %v1412, %v1628
        %1630 = vmatprep.mubr.f32.mxu0 %v1452
        %1631 = vmatmul.mubr.f32.gmra.mrb[0].mxu0 %v1343
        %v1632 = vpop.f32.mrb[0].mxu0
        %v1633 = vadd.f32 %v1408, %v1632
        %v1634 = vpop.f32.mrb[0].mxu0
        %v1635 = vadd.f32 %v1412, %v1634
        %1636 = vmatprep.mubr.f32.mxu0 %v1455
        %1637 = vmatmul.mubr.f32.gmra.mrb[0].mxu0 %v1345
        %v1638 = vpop.f32.mrb[0].mxu0
        %v1639 = vadd.f32 %v1408, %v1638
        %v1640 = vpop.f32.mrb[0].mxu0
        %v1641 = vadd.f32 %v1412, %v1640
        %1642 = vmatprep.mubr.f32.mxu0 %v1458
        %1643 = vmatmul.mubr.f32.gmra.mrb[0].mxu0 %v1347
        %v1644 = vpop.f32.mrb[0].mxu0
        %v1645 = vadd.f32 %v1408, %v1644
        %v1646 = vpop.f32.mrb[0].mxu0
        %v1647 = vadd.f32 %v1412, %v1646
        %1648 = vmatprep.mubr.f32.mxu0 %v1461
        %1649 = vmatmul.mubr.f32.gmra.mrb[0].mxu0 %v1349
        %v1650 = vpop.f32.mrb[0].mxu0
        %v1651 = vadd.f32 %v1408, %v1650
        %v1652 = vpop.f32.mrb[0].mxu0
        %v1653 = vadd.f32 %v1412, %v1652
        %1654 = vmatprep.mubr.f32.mxu0 %v1464
        %1655 = vmatmul.mubr.f32.gmra.mrb[0].mxu0 %v1351
        %v1656 = vpop.f32.mrb[0].mxu0
        %v1657 = vadd.f32 %v1408, %v1656
        %v1658 = vpop.f32.mrb[0].mxu0
        %v1659 = vadd.f32 %v1412, %v1658
        %1660 = vmatprep.mubr.f32.mxu0 %v1467
        %1661 = vmatmul.mubr.f32.gmra.mrb[0].mxu0 %v1353
        %v1662 = vpop.f32.mrb[0].mxu0
        %v1663 = vadd.f32 %v1408, %v1662
        %v1664 = vpop.f32.mrb[0].mxu0
        %v1665 = vadd.f32 %v1412, %v1664
        %1666 = vmatprep.mubr.f32.mxu0 %v1470
        %1667 = vmatmul.mubr.f32.gmra.mrb[0].mxu0 %v1355
        %v1668 = vpop.f32.mrb[0].mxu0
        %v1669 = vadd.f32 %v1408, %v1668
        %v1670 = vpop.f32.mrb[0].mxu0
        %v1671 = vadd.f32 %v1412, %v1670
        %1672 = vmatprep.mubr.f32.mxu0 %v1473
        %1673 = vmatmul.mubr.f32.gmra.mrb[0].mxu0 %v1357
        %v1674 = vpop.f32.mrb[0].mxu0
        %v1675 = vadd.f32 %v1408, %v1674
        %v1676 = vpop.f32.mrb[0].mxu0
        %v1677 = vadd.f32 %v1412, %v1676
        %1678 = vmatprep.mubr.f32.mxu0 %v1476
        %1679 = vmatmul.mubr.f32.gmra.mrb[0].mxu0 %v1359
        %v1680 = vpop.f32.mrb[0].mxu0
        %v1681 = vadd.f32 %v1408, %v1680
        %v1682 = vpop.f32.mrb[0].mxu0
        %v1683 = vadd.f32 %v1412, %v1682
        %1684 = vmatprep.mubr.f32.mxu0 %v1479
        %1685 = vmatmul.mubr.f32.gmra.mrb[0].mxu0 %v1361
        %v1686 = vpop.f32.mrb[0].mxu0
        %v1687 = vadd.f32 %v1408, %v1686
        %v1688 = vpop.f32.mrb[0].mxu0
        %v1689 = vadd.f32 %v1412, %v1688
        %1690 = vmatprep.mubr.f32.mxu0 %v1482
        %1691 = vmatmul.mubr.f32.gmra.mrb[0].mxu0 %v1363
        %v1692 = vpop.f32.mrb[0].mxu0
        %v1693 = vadd.f32 %v1408, %v1692
        %v1694 = vpop.f32.mrb[0].mxu0
        %v1695 = vadd.f32 %v1412, %v1694
        %1696 = vmatprep.mubr.f32.mxu0 %v1485
        %1697 = vmatmul.mubr.f32.gmra.mrb[0].mxu0 %v1365
        %v1698 = vpop.f32.mrb[0].mxu0
        %v1699 = vadd.f32 %v1408, %v1698
        %v1700 = vpop.f32.mrb[0].mxu0
        %v1701 = vadd.f32 %v1412, %v1700
        %1702 = vdwg.mxu0
        %v1703 = vmax.f32 %v1561, 0.0
        %v1704 = vmax.f32 %v1563, 0.0
        %v1705 = vmax.f32 %v1567, 0.0
        %v1706 = vmax.f32 %v1569, 0.0
        %v1707 = vmax.f32 %v1573, 0.0
        %v1708 = vmax.f32 %v1575, 0.0
        %v1709 = vmax.f32 %v1579, 0.0
        %v1710 = vmax.f32 %v1581, 0.0
        %v1711 = vmax.f32 %v1585, 0.0
        %v1712 = vmax.f32 %v1587, 0.0
        %v1713 = vmax.f32 %v1591, 0.0
        %v1714 = vmax.f32 %v1593, 0.0
        %v1715 = vmax.f32 %v1597, 0.0
        %v1716 = vmax.f32 %v1599, 0.0
        %v1717 = vmax.f32 %v1603, 0.0
        %v1718 = vmax.f32 %v1605, 0.0
        %v1719 = vmax.f32 %v1609, 0.0
        %v1720 = vmax.f32 %v1611, 0.0
        %v1721 = vmax.f32 %v1615, 0.0
        %v1722 = vmax.f32 %v1617, 0.0
        %v1723 = vmax.f32 %v1621, 0.0
        %v1724 = vmax.f32 %v1623, 0.0
        %v1725 = vmax.f32 %v1627, 0.0
        %v1726 = vmax.f32 %v1629, 0.0
        %v1727 = vmax.f32 %v1633, 0.0
        %v1728 = vmax.f32 %v1635, 0.0
        %v1729 = vmax.f32 %v1639, 0.0
        %v1730 = vmax.f32 %v1641, 0.0
        %v1731 = vmax.f32 %v1645, 0.0
        %v1732 = vmax.f32 %v1647, 0.0
        %v1733 = vmax.f32 %v1651, 0.0
        %v1734 = vmax.f32 %v1653, 0.0
        %v1735 = vmax.f32 %v1657, 0.0
        %v1736 = vmax.f32 %v1659, 0.0
        %v1737 = vmax.f32 %v1663, 0.0
        %v1738 = vmax.f32 %v1665, 0.0
        %v1739 = vmax.f32 %v1669, 0.0
        %v1740 = vmax.f32 %v1671, 0.0
        %v1741 = vmax.f32 %v1675, 0.0
        %v1742 = vmax.f32 %v1677, 0.0
        %v1743 = vmax.f32 %v1681, 0.0
        %v1744 = vmax.f32 %v1683, 0.0
        %v1745 = vmax.f32 %v1687, 0.0
        %v1746 = vmax.f32 %v1689, 0.0
        %v1747 = vmax.f32 %v1693, 0.0
        %v1748 = vmax.f32 %v1695, 0.0
        %v1749 = vmax.f32 %v1699, 0.0
        %v1750 = vmax.f32 %v1701, 0.0
        %v1751 = vld [vmem:[#allocation4] sm:$0xff]
        %v1752 = vld [vmem:[#allocation4 + $0x8] sm:$0xff]
        %v1753 = vld [vmem:[#allocation4 + $0x10] sm:$0xff]
        %v1754 = vld [vmem:[#allocation4 + $0x18] sm:$0xff]
        %v1755 = vld [vmem:[#allocation4 + $0x20] sm:$0xff]
        %v1756 = vld [vmem:[#allocation4 + $0x28] sm:$0xff]
        %v1757 = vld [vmem:[#allocation4 + $0x30] sm:$0xff]
        %v1758 = vld [vmem:[#allocation4 + $0x38] sm:$0xff]
        %v1759 = vld [vmem:[#allocation4 + $0x40] sm:$0xff]
        %v1760 = vld [vmem:[#allocation4 + $0x48] sm:$0xff]
        %v1761 = vld [vmem:[#allocation4 + $0x50] sm:$0xff]
        %v1762 = vld [vmem:[#allocation4 + $0x58] sm:$0xff]
        %v1763 = vld [vmem:[#allocation4 + $0x60] sm:$0xff]
        %v1764 = vld [vmem:[#allocation4 + $0x68] sm:$0xff]
        %v1765 = vld [vmem:[#allocation4 + $0x70] sm:$0xff]
        %v1766 = vld [vmem:[#allocation4 + $0x78] sm:$0xff]
        %v1767 = vld [vmem:[#allocation4 + $0x80] sm:$0xff]
        %v1768 = vld [vmem:[#allocation4 + $0x88] sm:$0xff]
        %vm1769 = vcmask 130048
        %v1771 = vsel %vm1769, %v1704, 0
        %v1774 = vsel %vm1769, %v1706, 0
        %v1777 = vsel %vm1769, %v1708, 0
        %v1780 = vsel %vm1769, %v1710, 0
        %v1783 = vsel %vm1769, %v1712, 0
        %v1786 = vsel %vm1769, %v1714, 0
        %v1789 = vsel %vm1769, %v1716, 0
        %v1792 = vsel %vm1769, %v1718, 0
        %v1795 = vsel %vm1769, %v1720, 0
        %v1798 = vsel %vm1769, %v1722, 0
        %v1801 = vsel %vm1769, %v1724, 0
        %v1804 = vsel %vm1769, %v1726, 0
        %v1807 = vsel %vm1769, %v1728, 0
        %v1810 = vsel %vm1769, %v1730, 0
        %v1813 = vsel %vm1769, %v1732, 0
        %v1816 = vsel %vm1769, %v1734, 0
        %v1819 = vsel %vm1769, %v1736, 0
        %v1822 = vsel %vm1769, %v1738, 0
        %v1825 = vsel %vm1769, %v1740, 0
        %v1828 = vsel %vm1769, %v1742, 0
        %v1831 = vsel %vm1769, %v1744, 0
        %v1834 = vsel %vm1769, %v1746, 0
        %v1837 = vsel %vm1769, %v1748, 0
        %v1840 = vsel %vm1769, %v1750, 0
        %1842 = vmatprep.subr.mxu0 0.0
        %1843 = vmatpush1.msra.mxu0 %v1751
        %1844 = vmatprep.subr.mxu0 0.0
        %1845 = vmatpush1.msra.mxu0 %v1752
        %1846 = vmatprep.subr.mxu0 0.0
        %1847 = vmatpush1.msra.mxu0 %v1753
        %1848 = vmatprep.subr.mxu0 0.0
        %1849 = vmatpush1.msra.mxu0 %v1754
        %1850 = vmatprep.subr.mxu0 0.0
        %1851 = vmatpush1.msra.mxu0 %v1755
        %1852 = vmatprep.subr.mxu0 0.0
        %1853 = vmatpush1.msra.mxu0 %v1756
        %1854 = vmatprep.subr.mxu0 0.0
        %1855 = vmatpush1.msra.mxu0 %v1757
        %1856 = vmatprep.subr.mxu0 0.0
        %1857 = vmatpush1.msra.mxu0 %v1758
        %1858 = vmatprep.subr.mxu0 0.0
        %1859 = vmatpush1.msra.mxu0 %v1759
        %1860 = vmatprep.subr.mxu0 0.0
        %1861 = vmatpush1.msra.mxu0 %v1760
        %1862 = vmatprep.subr.mxu0 0.0
        %1863 = vmatpush1.msra.mxu0 %v1761
        %1864 = vmatprep.subr.mxu0 0.0
        %1865 = vmatpush1.msra.mxu0 %v1762
        %1866 = vmatprep.subr.mxu0 0.0
        %1867 = vmatpush1.msra.mxu0 %v1763
        %1868 = vmatprep.subr.mxu0 0.0
        %1869 = vmatpush1.msra.mxu0 %v1764
        %1870 = vmatprep.subr.mxu0 0.0
        %1871 = vmatpush1.msra.mxu0 %v1765
        %1872 = vmatprep.subr.mxu0 0.0
        %1873 = vmatpush1.msra.mxu0 %v1766
        %1874 = vmatprep.subr.mxu0 0.0
        %1875 = vmatpush1.msra.mxu0 %v1767
        %1876 = vmatprep.subr.mxu0 0.0
        %1877 = vmatpush1.msra.mxu0 %v1768
        %1878 = vmatprep.subr.mxu0 0.0
        %1879 = vmatpush1.msra.mxu0 0.0
        %1880 = vmatprep.subr.mxu0 0.0
        %1881 = vmatpush1.msra.mxu0 0.0
        %1882 = vmatprep.subr.mxu0 0.0
        %1883 = vmatpush1.msra.mxu0 0.0
        %1884 = vmatprep.subr.mxu0 0.0
        %1885 = vmatpush1.msra.mxu0 0.0
        %1886 = vmatprep.subr.mxu0 0.0
        %1887 = vmatpush1.msra.mxu0 0.0
        %1888 = vmatprep.subr.mxu0 0.0
        %1889 = vmatpush1.msra.mxu0 0.0
        %1890 = vmatprep.subr.mxu0 0.0
        %1891 = vmatpush1.msra.mxu0 0.0
        %1892 = vmatprep.subr.mxu0 0.0
        %1893 = vmatpush1.msra.mxu0 0.0
        %1894 = vmatprep.subr.mxu0 0.0
        %1895 = vmatpush1.msra.mxu0 0.0
        %1896 = vmatprep.subr.mxu0 0.0
        %1897 = vmatpush1.msra.mxu0 0.0
        %1898 = vmatprep.subr.mxu0 0.0
        %1899 = vmatpush1.msra.mxu0 0.0
        %1900 = vmatprep.subr.mxu0 0.0
        %1901 = vmatpush1.msra.mxu0 0.0
        %1902 = vmatprep.subr.mxu0 0.0
        %1903 = vmatpush1.msra.mxu0 0.0
        %1904 = vmatprep.subr.mxu0 0.0
        %1905 = vmatpush1.msra.mxu0 0.0
        %1906 = vmatprep.mubr.f32.mxu0 %v1771
        %1907 = vmatmul.mubr.f32.gmra.mrb[0].mxu0 %v1703
        %v1908 = vpop.f32.mrb[0].mxu0
        %v1909 = vadd.f32 0.0, %v1908
        %v1910 = vpop.f32.mrb[0].mxu0
        %1911 = vmatprep.mubr.f32.mxu0 %v1774
        %1912 = vmatmul.mubr.f32.gmra.mrb[0].mxu0 %v1705
        %v1913 = vpop.f32.mrb[0].mxu0
        %v1914 = vadd.f32 0.0, %v1913
        %v1915 = vpop.f32.mrb[0].mxu0
        %1916 = vmatprep.mubr.f32.mxu0 %v1777
        %1917 = vmatmul.mubr.f32.gmra.mrb[0].mxu0 %v1707
        %v1918 = vpop.f32.mrb[0].mxu0
        %v1919 = vadd.f32 0.0, %v1918
        %v1920 = vpop.f32.mrb[0].mxu0
        %1921 = vmatprep.mubr.f32.mxu0 %v1780
        %1922 = vmatmul.mubr.f32.gmra.mrb[0].mxu0 %v1709
        %v1923 = vpop.f32.mrb[0].mxu0
        %v1924 = vadd.f32 0.0, %v1923
        %v1925 = vpop.f32.mrb[0].mxu0
        %1926 = vmatprep.mubr.f32.mxu0 %v1783
        %1927 = vmatmul.mubr.f32.gmra.mrb[0].mxu0 %v1711
        %v1928 = vpop.f32.mrb[0].mxu0
        %v1929 = vadd.f32 0.0, %v1928
        %v1930 = vpop.f32.mrb[0].mxu0
        %1931 = vmatprep.mubr.f32.mxu0 %v1786
        %1932 = vmatmul.mubr.f32.gmra.mrb[0].mxu0 %v1713
        %v1933 = vpop.f32.mrb[0].mxu0
        %v1934 = vadd.f32 0.0, %v1933
        %v1935 = vpop.f32.mrb[0].mxu0
        %1936 = vmatprep.mubr.f32.mxu0 %v1789
        %1937 = vmatmul.mubr.f32.gmra.mrb[0].mxu0 %v1715
        %v1938 = vpop.f32.mrb[0].mxu0
        %v1939 = vadd.f32 0.0, %v1938
        %v1940 = vpop.f32.mrb[0].mxu0
        %1941 = vmatprep.mubr.f32.mxu0 %v1792
        %1942 = vmatmul.mubr.f32.gmra.mrb[0].mxu0 %v1717
        %v1943 = vpop.f32.mrb[0].mxu0
        %v1944 = vadd.f32 0.0, %v1943
        %v1945 = vpop.f32.mrb[0].mxu0
        %1946 = vmatprep.mubr.f32.mxu0 %v1795
        %1947 = vmatmul.mubr.f32.gmra.mrb[0].mxu0 %v1719
        %v1948 = vpop.f32.mrb[0].mxu0
        %v1949 = vadd.f32 0.0, %v1948
        %v1950 = vpop.f32.mrb[0].mxu0
        %1951 = vmatprep.mubr.f32.mxu0 %v1798
        %1952 = vmatmul.mubr.f32.gmra.mrb[0].mxu0 %v1721
        %v1953 = vpop.f32.mrb[0].mxu0
        %v1954 = vadd.f32 0.0, %v1953
        %v1955 = vpop.f32.mrb[0].mxu0
        %1956 = vmatprep.mubr.f32.mxu0 %v1801
        %1957 = vmatmul.mubr.f32.gmra.mrb[0].mxu0 %v1723
        %v1958 = vpop.f32.mrb[0].mxu0
        %v1959 = vadd.f32 0.0, %v1958
        %v1960 = vpop.f32.mrb[0].mxu0
        %1961 = vmatprep.mubr.f32.mxu0 %v1804
        %1962 = vmatmul.mubr.f32.gmra.mrb[0].mxu0 %v1725
        %v1963 = vpop.f32.mrb[0].mxu0
        %v1964 = vadd.f32 0.0, %v1963
        %v1965 = vpop.f32.mrb[0].mxu0
        %1966 = vmatprep.mubr.f32.mxu0 %v1807
        %1967 = vmatmul.mubr.f32.gmra.mrb[0].mxu0 %v1727
        %v1968 = vpop.f32.mrb[0].mxu0
        %v1969 = vadd.f32 0.0, %v1968
        %v1970 = vpop.f32.mrb[0].mxu0
        %1971 = vmatprep.mubr.f32.mxu0 %v1810
        %1972 = vmatmul.mubr.f32.gmra.mrb[0].mxu0 %v1729
        %v1973 = vpop.f32.mrb[0].mxu0
        %v1974 = vadd.f32 0.0, %v1973
        %v1975 = vpop.f32.mrb[0].mxu0
        %1976 = vmatprep.mubr.f32.mxu0 %v1813
        %1977 = vmatmul.mubr.f32.gmra.mrb[0].mxu0 %v1731
        %v1978 = vpop.f32.mrb[0].mxu0
        %v1979 = vadd.f32 0.0, %v1978
        %v1980 = vpop.f32.mrb[0].mxu0
        %1981 = vmatprep.mubr.f32.mxu0 %v1816
        %1982 = vmatmul.mubr.f32.gmra.mrb[0].mxu0 %v1733
        %v1983 = vpop.f32.mrb[0].mxu0
        %v1984 = vadd.f32 0.0, %v1983
        %v1985 = vpop.f32.mrb[0].mxu0
        %1986 = vmatprep.mubr.f32.mxu0 %v1819
        %1987 = vmatmul.mubr.f32.gmra.mrb[0].mxu0 %v1735
        %v1988 = vpop.f32.mrb[0].mxu0
        %v1989 = vadd.f32 0.0, %v1988
        %v1990 = vpop.f32.mrb[0].mxu0
        %1991 = vmatprep.mubr.f32.mxu0 %v1822
        %1992 = vmatmul.mubr.f32.gmra.mrb[0].mxu0 %v1737
        %v1993 = vpop.f32.mrb[0].mxu0
        %v1994 = vadd.f32 0.0, %v1993
        %v1995 = vpop.f32.mrb[0].mxu0
        %1996 = vmatprep.mubr.f32.mxu0 %v1825
        %1997 = vmatmul.mubr.f32.gmra.mrb[0].mxu0 %v1739
        %v1998 = vpop.f32.mrb[0].mxu0
        %v1999 = vadd.f32 0.0, %v1998
        %v2000 = vpop.f32.mrb[0].mxu0
        %2001 = vmatprep.mubr.f32.mxu0 %v1828
        %2002 = vmatmul.mubr.f32.gmra.mrb[0].mxu0 %v1741
        %v2003 = vpop.f32.mrb[0].mxu0
        %v2004 = vadd.f32 0.0, %v2003
        %v2005 = vpop.f32.mrb[0].mxu0
        %2006 = vmatprep.mubr.f32.mxu0 %v1831
        %2007 = vmatmul.mubr.f32.gmra.mrb[0].mxu0 %v1743
        %v2008 = vpop.f32.mrb[0].mxu0
        %v2009 = vadd.f32 0.0, %v2008
        %v2010 = vpop.f32.mrb[0].mxu0
        %2011 = vmatprep.mubr.f32.mxu0 %v1834
        %2012 = vmatmul.mubr.f32.gmra.mrb[0].mxu0 %v1745
        %v2013 = vpop.f32.mrb[0].mxu0
        %v2014 = vadd.f32 0.0, %v2013
        %v2015 = vpop.f32.mrb[0].mxu0
        %2016 = vmatprep.mubr.f32.mxu0 %v1837
        %2017 = vmatmul.mubr.f32.gmra.mrb[0].mxu0 %v1747
        %v2018 = vpop.f32.mrb[0].mxu0
        %v2019 = vadd.f32 0.0, %v2018
        %v2020 = vpop.f32.mrb[0].mxu0
        %2021 = vmatprep.mubr.f32.mxu0 %v1840
        %2022 = vmatmul.mubr.f32.gmra.mrb[0].mxu0 %v1749
        %v2023 = vpop.f32.mrb[0].mxu0
        %v2024 = vadd.f32 0.0, %v2023
        %v2025 = vpop.f32.mrb[0].mxu0
        %2026 = vdwg.mxu0
        %v2027 = vld [vmem:[#allocation7] sm:$0xff]
        %v2028 = vld [vmem:[#allocation7 + $0x8] sm:$0xff]
        %v2029 = vld [vmem:[#allocation7 + $0x10] sm:$0xff]
        %v2030 = vld [vmem:[#allocation7 + $0x18] sm:$0xff]
        %v2031 = vld [vmem:[#allocation7 + $0x20] sm:$0xff]
        %v2032 = vld [vmem:[#allocation7 + $0x28] sm:$0xff]
        %v2033 = vld [vmem:[#allocation7 + $0x30] sm:$0xff]
        %v2034 = vld [vmem:[#allocation7 + $0x38] sm:$0xff]
        %v2035 = vld [vmem:[#allocation7 + $0x40] sm:$0xff]
        %v2036 = vld [vmem:[#allocation7 + $0x48] sm:$0xff]
        %v2037 = vld [vmem:[#allocation7 + $0x50] sm:$0xff]
        %v2038 = vld [vmem:[#allocation7 + $0x58] sm:$0xff]
        %v2039 = vld [vmem:[#allocation7 + $0x60] sm:$0xff]
        %v2040 = vld [vmem:[#allocation7 + $0x68] sm:$0xff]
        %v2041 = vld [vmem:[#allocation7 + $0x70] sm:$0xff]
        %v2042 = vld [vmem:[#allocation7 + $0x78] sm:$0xff]
        %v2043 = vld [vmem:[#allocation7 + $0x80] sm:$0xff]
        %v2044 = vld [vmem:[#allocation7 + $0x88] sm:$0xff]
        %2045 = vmatprep.subr.mxu0 0.0
        %2046 = vmatpush1.msra.mxu0 %v2027
        %2047 = vmatprep.subr.mxu0 0.0
        %2048 = vmatpush1.msra.mxu0 %v2028
        %2049 = vmatprep.subr.mxu0 0.0
        %2050 = vmatpush1.msra.mxu0 %v2029
        %2051 = vmatprep.subr.mxu0 0.0
        %2052 = vmatpush1.msra.mxu0 %v2030
        %2053 = vmatprep.subr.mxu0 0.0
        %2054 = vmatpush1.msra.mxu0 %v2031
        %2055 = vmatprep.subr.mxu0 0.0
        %2056 = vmatpush1.msra.mxu0 %v2032
        %2057 = vmatprep.subr.mxu0 0.0
        %2058 = vmatpush1.msra.mxu0 %v2033
        %2059 = vmatprep.subr.mxu0 0.0
        %2060 = vmatpush1.msra.mxu0 %v2034
        %2061 = vmatprep.subr.mxu0 0.0
        %2062 = vmatpush1.msra.mxu0 %v2035
        %2063 = vmatprep.subr.mxu0 0.0
        %2064 = vmatpush1.msra.mxu0 %v2036
        %2065 = vmatprep.subr.mxu0 0.0
        %2066 = vmatpush1.msra.mxu0 %v2037
        %2067 = vmatprep.subr.mxu0 0.0
        %2068 = vmatpush1.msra.mxu0 %v2038
        %2069 = vmatprep.subr.mxu0 0.0
        %2070 = vmatpush1.msra.mxu0 %v2039
        %2071 = vmatprep.subr.mxu0 0.0
        %2072 = vmatpush1.msra.mxu0 %v2040
        %2073 = vmatprep.subr.mxu0 0.0
        %2074 = vmatpush1.msra.mxu0 %v2041
        %2075 = vmatprep.subr.mxu0 0.0
        %2076 = vmatpush1.msra.mxu0 %v2042
        %2077 = vmatprep.subr.mxu0 0.0
        %2078 = vmatpush1.msra.mxu0 %v2043
        %2079 = vmatprep.subr.mxu0 0.0
        %2080 = vmatpush1.msra.mxu0 %v2044
        %2081 = vmatprep.subr.mxu0 0.0
        %2082 = vmatpush1.msra.mxu0 0.0
        %2083 = vmatprep.subr.mxu0 0.0
        %2084 = vmatpush1.msra.mxu0 0.0
        %2085 = vmatprep.subr.mxu0 0.0
        %2086 = vmatpush1.msra.mxu0 0.0
        %2087 = vmatprep.subr.mxu0 0.0
        %2088 = vmatpush1.msra.mxu0 0.0
        %2089 = vmatprep.subr.mxu0 0.0
        %2090 = vmatpush1.msra.mxu0 0.0
        %2091 = vmatprep.subr.mxu0 0.0
        %2092 = vmatpush1.msra.mxu0 0.0
        %2093 = vmatprep.subr.mxu0 0.0
        %2094 = vmatpush1.msra.mxu0 0.0
        %2095 = vmatprep.subr.mxu0 0.0
        %2096 = vmatpush1.msra.mxu0 0.0
        %2097 = vmatprep.subr.mxu0 0.0
        %2098 = vmatpush1.msra.mxu0 0.0
        %2099 = vmatprep.subr.mxu0 0.0
        %2100 = vmatpush1.msra.mxu0 0.0
        %2101 = vmatprep.subr.mxu0 0.0
        %2102 = vmatpush1.msra.mxu0 0.0
        %2103 = vmatprep.subr.mxu0 0.0
        %2104 = vmatpush1.msra.mxu0 0.0
        %2105 = vmatprep.subr.mxu0 0.0
        %2106 = vmatpush1.msra.mxu0 0.0
        %2107 = vmatprep.subr.mxu0 0.0
        %2108 = vmatpush1.msra.mxu0 0.0
        %2109 = vmatprep.mubr.f32.mxu0 %v1771
        %2110 = vmatmul.mubr.f32.gmra.mrb[0].mxu0 %v1703
        %v2111 = vpop.f32.mrb[0].mxu0
        %v2112 = vadd.f32 0.0, %v2111
        %v2113 = vpop.f32.mrb[0].mxu0
        %2114 = vmatprep.mubr.f32.mxu0 %v1774
        %2115 = vmatmul.mubr.f32.gmra.mrb[0].mxu0 %v1705
        %v2116 = vpop.f32.mrb[0].mxu0
        %v2117 = vadd.f32 0.0, %v2116
        %v2118 = vpop.f32.mrb[0].mxu0
        %2119 = vmatprep.mubr.f32.mxu0 %v1777
        %2120 = vmatmul.mubr.f32.gmra.mrb[0].mxu0 %v1707
        %v2121 = vpop.f32.mrb[0].mxu0
        %v2122 = vadd.f32 0.0, %v2121
        %v2123 = vpop.f32.mrb[0].mxu0
        %2124 = vmatprep.mubr.f32.mxu0 %v1780
        %2125 = vmatmul.mubr.f32.gmra.mrb[0].mxu0 %v1709
        %v2126 = vpop.f32.mrb[0].mxu0
        %v2127 = vadd.f32 0.0, %v2126
        %v2128 = vpop.f32.mrb[0].mxu0
        %2129 = vmatprep.mubr.f32.mxu0 %v1783
        %2130 = vmatmul.mubr.f32.gmra.mrb[0].mxu0 %v1711
        %v2131 = vpop.f32.mrb[0].mxu0
        %v2132 = vadd.f32 0.0, %v2131
        %v2133 = vpop.f32.mrb[0].mxu0
        %2134 = vmatprep.mubr.f32.mxu0 %v1786
        %2135 = vmatmul.mubr.f32.gmra.mrb[0].mxu0 %v1713
        %v2136 = vpop.f32.mrb[0].mxu0
        %v2137 = vadd.f32 0.0, %v2136
        %v2138 = vpop.f32.mrb[0].mxu0
        %2139 = vmatprep.mubr.f32.mxu0 %v1789
        %2140 = vmatmul.mubr.f32.gmra.mrb[0].mxu0 %v1715
        %v2141 = vpop.f32.mrb[0].mxu0
        %v2142 = vadd.f32 0.0, %v2141
        %v2143 = vpop.f32.mrb[0].mxu0
        %2144 = vmatprep.mubr.f32.mxu0 %v1792
        %2145 = vmatmul.mubr.f32.gmra.mrb[0].mxu0 %v1717
        %v2146 = vpop.f32.mrb[0].mxu0
        %v2147 = vadd.f32 0.0, %v2146
        %v2148 = vpop.f32.mrb[0].mxu0
        %2149 = vmatprep.mubr.f32.mxu0 %v1795
        %2150 = vmatmul.mubr.f32.gmra.mrb[0].mxu0 %v1719
        %v2151 = vpop.f32.mrb[0].mxu0
        %v2152 = vadd.f32 0.0, %v2151
        %v2153 = vpop.f32.mrb[0].mxu0
        %2154 = vmatprep.mubr.f32.mxu0 %v1798
        %2155 = vmatmul.mubr.f32.gmra.mrb[0].mxu0 %v1721
        %v2156 = vpop.f32.mrb[0].mxu0
        %v2157 = vadd.f32 0.0, %v2156
        %v2158 = vpop.f32.mrb[0].mxu0
        %2159 = vmatprep.mubr.f32.mxu0 %v1801
        %2160 = vmatmul.mubr.f32.gmra.mrb[0].mxu0 %v1723
        %v2161 = vpop.f32.mrb[0].mxu0
        %v2162 = vadd.f32 0.0, %v2161
        %v2163 = vpop.f32.mrb[0].mxu0
        %2164 = vmatprep.mubr.f32.mxu0 %v1804
        %2165 = vmatmul.mubr.f32.gmra.mrb[0].mxu0 %v1725
        %v2166 = vpop.f32.mrb[0].mxu0
        %v2167 = vadd.f32 0.0, %v2166
        %v2168 = vpop.f32.mrb[0].mxu0
        %2169 = vmatprep.mubr.f32.mxu0 %v1807
        %2170 = vmatmul.mubr.f32.gmra.mrb[0].mxu0 %v1727
        %v2171 = vpop.f32.mrb[0].mxu0
        %v2172 = vadd.f32 0.0, %v2171
        %v2173 = vpop.f32.mrb[0].mxu0
        %2174 = vmatprep.mubr.f32.mxu0 %v1810
        %2175 = vmatmul.mubr.f32.gmra.mrb[0].mxu0 %v1729
        %v2176 = vpop.f32.mrb[0].mxu0
        %v2177 = vadd.f32 0.0, %v2176
        %v2178 = vpop.f32.mrb[0].mxu0
        %2179 = vmatprep.mubr.f32.mxu0 %v1813
        %2180 = vmatmul.mubr.f32.gmra.mrb[0].mxu0 %v1731
        %v2181 = vpop.f32.mrb[0].mxu0
        %v2182 = vadd.f32 0.0, %v2181
        %v2183 = vpop.f32.mrb[0].mxu0
        %2184 = vmatprep.mubr.f32.mxu0 %v1816
        %2185 = vmatmul.mubr.f32.gmra.mrb[0].mxu0 %v1733
        %v2186 = vpop.f32.mrb[0].mxu0
        %v2187 = vadd.f32 0.0, %v2186
        %v2188 = vpop.f32.mrb[0].mxu0
        %2189 = vmatprep.mubr.f32.mxu0 %v1819
        %2190 = vmatmul.mubr.f32.gmra.mrb[0].mxu0 %v1735
        %v2191 = vpop.f32.mrb[0].mxu0
        %v2192 = vadd.f32 0.0, %v2191
        %v2193 = vpop.f32.mrb[0].mxu0
        %2194 = vmatprep.mubr.f32.mxu0 %v1822
        %2195 = vmatmul.mubr.f32.gmra.mrb[0].mxu0 %v1737
        %v2196 = vpop.f32.mrb[0].mxu0
        %v2197 = vadd.f32 0.0, %v2196
        %v2198 = vpop.f32.mrb[0].mxu0
        %2199 = vmatprep.mubr.f32.mxu0 %v1825
        %2200 = vmatmul.mubr.f32.gmra.mrb[0].mxu0 %v1739
        %v2201 = vpop.f32.mrb[0].mxu0
        %v2202 = vadd.f32 0.0, %v2201
        %v2203 = vpop.f32.mrb[0].mxu0
        %2204 = vmatprep.mubr.f32.mxu0 %v1828
        %2205 = vmatmul.mubr.f32.gmra.mrb[0].mxu0 %v1741
        %v2206 = vpop.f32.mrb[0].mxu0
        %v2207 = vadd.f32 0.0, %v2206
        %v2208 = vpop.f32.mrb[0].mxu0
        %2209 = vmatprep.mubr.f32.mxu0 %v1831
        %2210 = vmatmul.mubr.f32.gmra.mrb[0].mxu0 %v1743
        %v2211 = vpop.f32.mrb[0].mxu0
        %v2212 = vadd.f32 0.0, %v2211
        %v2213 = vpop.f32.mrb[0].mxu0
        %2214 = vmatprep.mubr.f32.mxu0 %v1834
        %2215 = vmatmul.mubr.f32.gmra.mrb[0].mxu0 %v1745
        %v2216 = vpop.f32.mrb[0].mxu0
        %v2217 = vadd.f32 0.0, %v2216
        %v2218 = vpop.f32.mrb[0].mxu0
        %2219 = vmatprep.mubr.f32.mxu0 %v1837
        %2220 = vmatmul.mubr.f32.gmra.mrb[0].mxu0 %v1747
        %v2221 = vpop.f32.mrb[0].mxu0
        %v2222 = vadd.f32 0.0, %v2221
        %v2223 = vpop.f32.mrb[0].mxu0
        %2224 = vmatprep.mubr.f32.mxu0 %v1840
        %2225 = vmatmul.mubr.f32.gmra.mrb[0].mxu0 %v1749
        %v2226 = vpop.f32.mrb[0].mxu0
        %v2227 = vadd.f32 0.0, %v2226
        %v2228 = vpop.f32.mrb[0].mxu0
        %2229 = vdwg.mxu0
        %v2230 = vmax.f32 %v1909, %v2112
        %v2231 = vmax.f32 %v1914, %v2117
        %v2232 = vmax.f32 %v1919, %v2122
        %v2233 = vmax.f32 %v1924, %v2127
        %v2234 = vmax.f32 %v1929, %v2132
        %v2235 = vmax.f32 %v1934, %v2137
        %v2236 = vmax.f32 %v1939, %v2142
        %v2237 = vmax.f32 %v1944, %v2147
        %v2238 = vmax.f32 %v1949, %v2152
        %v2239 = vmax.f32 %v1954, %v2157
        %v2240 = vmax.f32 %v1959, %v2162
        %v2241 = vmax.f32 %v1964, %v2167
        %v2242 = vmax.f32 %v1969, %v2172
        %v2243 = vmax.f32 %v1974, %v2177
        %v2244 = vmax.f32 %v1979, %v2182
        %v2245 = vmax.f32 %v1984, %v2187
        %v2246 = vmax.f32 %v1989, %v2192
        %v2247 = vmax.f32 %v1994, %v2197
        %v2248 = vmax.f32 %v1999, %v2202
        %v2249 = vmax.f32 %v2004, %v2207
        %v2250 = vmax.f32 %v2009, %v2212
        %v2251 = vmax.f32 %v2014, %v2217
        %v2252 = vmax.f32 %v2019, %v2222
        %v2253 = vmax.f32 %v2024, %v2227
        %v2254 = vld [vmem:[%s5] sm:$0xff]
        %v2255 = vld [vmem:[%s5 + $0x8] sm:$0xff]
        %v2256 = vld [vmem:[%s5 + $0x10] sm:$0xff]
        %v2257 = vld [vmem:[%s5 + $0x18] sm:$0xff]
        %v2258 = vld [vmem:[%s5 + $0x20] sm:$0xff]
        %v2259 = vld [vmem:[%s5 + $0x28] sm:$0xff]
        %v2260 = vld [vmem:[%s5 + $0x30] sm:$0xff]
        %v2261 = vld [vmem:[%s5 + $0x38] sm:$0xff]
        %v2262 = vld [vmem:[%s5 + $0x40] sm:$0xff]
        %v2263 = vld [vmem:[%s5 + $0x48] sm:$0xff]
        %v2264 = vld [vmem:[%s5 + $0x50] sm:$0xff]
        %v2265 = vld [vmem:[%s5 + $0x58] sm:$0xff]
        %v2266 = vld [vmem:[%s5 + $0x60] sm:$0xff]
        %v2267 = vld [vmem:[%s5 + $0x68] sm:$0xff]
        %v2268 = vld [vmem:[%s5 + $0x70] sm:$0xff]
        %v2269 = vld [vmem:[%s5 + $0x78] sm:$0xff]
        %v2270 = vld [vmem:[%s5 + $0x80] sm:$0xff]
        %v2271 = vld [vmem:[%s5 + $0x88] sm:$0xff]
        %v2272 = vld [vmem:[%s5 + $0x90] sm:$0xff]
        %v2273 = vld [vmem:[%s5 + $0x98] sm:$0xff]
        %v2274 = vld [vmem:[%s5 + $0xa0] sm:$0xff]
        %v2275 = vld [vmem:[%s5 + $0xa8] sm:$0xff]
        %v2276 = vld [vmem:[%s5 + $0xb0] sm:$0xff]
        %v2277 = vld [vmem:[%s5 + $0xb8] sm:$0xff]
        %vm2278 = vcmask 523264
        %v2280 = vsel %vm2278, %v2255, 0
        %v2283 = vsel %vm2278, %v2257, 0
        %v2286 = vsel %vm2278, %v2259, 0
        %v2289 = vsel %vm2278, %v2261, 0
        %v2292 = vsel %vm2278, %v2263, 0
        %v2295 = vsel %vm2278, %v2265, 0
        %v2298 = vsel %vm2278, %v2267, 0
        %v2301 = vsel %vm2278, %v2269, 0
        %v2304 = vsel %vm2278, %v2271, 0
        %v2307 = vsel %vm2278, %v2273, 0
        %v2310 = vsel %vm2278, %v2275, 0
        %v2313 = vsel %vm2278, %v2277, 0
        %2315 = vmatprep.subr.mxu0 0.0
        %2316 = vmatpush1.msra.mxu0 %v2230
        %2317 = vmatprep.subr.mxu0 0.0
        %2318 = vmatpush1.msra.mxu0 %v2231
        %2319 = vmatprep.subr.mxu0 0.0
        %2320 = vmatpush1.msra.mxu0 %v2232
        %2321 = vmatprep.subr.mxu0 0.0
        %2322 = vmatpush1.msra.mxu0 %v2233
        %2323 = vmatprep.subr.mxu0 0.0
        %2324 = vmatpush1.msra.mxu0 %v2234
        %2325 = vmatprep.subr.mxu0 0.0
        %2326 = vmatpush1.msra.mxu0 %v2235
        %2327 = vmatprep.subr.mxu0 0.0
        %2328 = vmatpush1.msra.mxu0 %v2236
        %2329 = vmatprep.subr.mxu0 0.0
        %2330 = vmatpush1.msra.mxu0 %v2237
        %2331 = vmatprep.subr.mxu0 0.0
        %2332 = vmatpush1.msra.mxu0 %v2238
        %2333 = vmatprep.subr.mxu0 0.0
        %2334 = vmatpush1.msra.mxu0 %v2239
        %2335 = vmatprep.subr.mxu0 0.0
        %2336 = vmatpush1.msra.mxu0 %v2240
        %2337 = vmatprep.subr.mxu0 0.0
        %2338 = vmatpush1.msra.mxu0 %v2241
        %2339 = vmatprep.subr.mxu0 0.0
        %2340 = vmatpush1.msra.mxu0 %v2242
        %2341 = vmatprep.subr.mxu0 0.0
        %2342 = vmatpush1.msra.mxu0 %v2243
        %2343 = vmatprep.subr.mxu0 0.0
        %2344 = vmatpush1.msra.mxu0 %v2244
        %2345 = vmatprep.subr.mxu0 0.0
        %2346 = vmatpush1.msra.mxu0 %v2245
        %2347 = vmatprep.subr.mxu0 0.0
        %2348 = vmatpush1.msra.mxu0 %v2246
        %2349 = vmatprep.subr.mxu0 0.0
        %2350 = vmatpush1.msra.mxu0 %v2247
        %2351 = vmatprep.subr.mxu0 0.0
        %2352 = vmatpush1.msra.mxu0 %v2248
        %2353 = vmatprep.subr.mxu0 0.0
        %2354 = vmatpush1.msra.mxu0 %v2249
        %2355 = vmatprep.subr.mxu0 0.0
        %2356 = vmatpush1.msra.mxu0 %v2250
        %2357 = vmatprep.subr.mxu0 0.0
        %2358 = vmatpush1.msra.mxu0 %v2251
        %2359 = vmatprep.subr.mxu0 0.0
        %2360 = vmatpush1.msra.mxu0 %v2252
        %2361 = vmatprep.subr.mxu0 0.0
        %2362 = vmatpush1.msra.mxu0 %v2253
        %2363 = vmatprep.subr.mxu0 0.0
        %2364 = vmatpush1.msra.mxu0 0.0
        %2365 = vmatprep.subr.mxu0 0.0
        %2366 = vmatpush1.msra.mxu0 0.0
        %2367 = vmatprep.subr.mxu0 0.0
        %2368 = vmatpush1.msra.mxu0 0.0
        %2369 = vmatprep.subr.mxu0 0.0
        %2370 = vmatpush1.msra.mxu0 0.0
        %2371 = vmatprep.subr.mxu0 0.0
        %2372 = vmatpush1.msra.mxu0 0.0
        %2373 = vmatprep.subr.mxu0 0.0
        %2374 = vmatpush1.msra.mxu0 0.0
        %2375 = vmatprep.subr.mxu0 0.0
        %2376 = vmatpush1.msra.mxu0 0.0
        %2377 = vmatprep.subr.mxu0 0.0
        %2378 = vmatpush1.msra.mxu0 0.0
        %2379 = vmatprep.mubr.f32.mxu0 %v2280
        %2380 = vmatmul.mubr.f32.gmra.mrb[0].mxu0 %v2254
        %v2381 = vpop.f32.mrb[0].mxu0
        %v2382 = vadd.f32 0.0, %v2381
        %v2383 = vpop.f32.mrb[0].mxu0
        %2384 = vmatprep.mubr.f32.mxu0 %v2283
        %2385 = vmatmul.mubr.f32.gmra.mrb[0].mxu0 %v2256
        %v2386 = vpop.f32.mrb[0].mxu0
        %v2387 = vadd.f32 0.0, %v2386
        %v2388 = vpop.f32.mrb[0].mxu0
        %2389 = vmatprep.mubr.f32.mxu0 %v2286
        %2390 = vmatmul.mubr.f32.gmra.mrb[0].mxu0 %v2258
        %v2391 = vpop.f32.mrb[0].mxu0
        %v2392 = vadd.f32 0.0, %v2391
        %v2393 = vpop.f32.mrb[0].mxu0
        %2394 = vmatprep.mubr.f32.mxu0 %v2289
        %2395 = vmatmul.mubr.f32.gmra.mrb[0].mxu0 %v2260
        %v2396 = vpop.f32.mrb[0].mxu0
        %v2397 = vadd.f32 0.0, %v2396
        %v2398 = vpop.f32.mrb[0].mxu0
        %2399 = vmatprep.mubr.f32.mxu0 %v2292
        %2400 = vmatmul.mubr.f32.gmra.mrb[0].mxu0 %v2262
        %v2401 = vpop.f32.mrb[0].mxu0
        %v2402 = vadd.f32 0.0, %v2401
        %v2403 = vpop.f32.mrb[0].mxu0
        %2404 = vmatprep.mubr.f32.mxu0 %v2295
        %2405 = vmatmul.mubr.f32.gmra.mrb[0].mxu0 %v2264
        %v2406 = vpop.f32.mrb[0].mxu0
        %v2407 = vadd.f32 0.0, %v2406
        %v2408 = vpop.f32.mrb[0].mxu0
        %2409 = vmatprep.mubr.f32.mxu0 %v2298
        %2410 = vmatmul.mubr.f32.gmra.mrb[0].mxu0 %v2266
        %v2411 = vpop.f32.mrb[0].mxu0
        %v2412 = vadd.f32 0.0, %v2411
        %v2413 = vpop.f32.mrb[0].mxu0
        %2414 = vmatprep.mubr.f32.mxu0 %v2301
        %2415 = vmatmul.mubr.f32.gmra.mrb[0].mxu0 %v2268
        %v2416 = vpop.f32.mrb[0].mxu0
        %v2417 = vadd.f32 0.0, %v2416
        %v2418 = vpop.f32.mrb[0].mxu0
        %2419 = vmatprep.mubr.f32.mxu0 %v2304
        %2420 = vmatmul.mubr.f32.gmra.mrb[0].mxu0 %v2270
        %v2421 = vpop.f32.mrb[0].mxu0
        %v2422 = vadd.f32 0.0, %v2421
        %v2423 = vpop.f32.mrb[0].mxu0
        %2424 = vmatprep.mubr.f32.mxu0 %v2307
        %2425 = vmatmul.mubr.f32.gmra.mrb[0].mxu0 %v2272
        %v2426 = vpop.f32.mrb[0].mxu0
        %v2427 = vadd.f32 0.0, %v2426
        %v2428 = vpop.f32.mrb[0].mxu0
        %2429 = vmatprep.mubr.f32.mxu0 %v2310
        %2430 = vmatmul.mubr.f32.gmra.mrb[0].mxu0 %v2274
        %v2431 = vpop.f32.mrb[0].mxu0
        %v2432 = vadd.f32 0.0, %v2431
        %v2433 = vpop.f32.mrb[0].mxu0
        %2434 = vmatprep.mubr.f32.mxu0 %v2313
        %2435 = vmatmul.mubr.f32.gmra.mrb[0].mxu0 %v2276
        %v2436 = vpop.f32.mrb[0].mxu0
        %v2437 = vadd.f32 0.0, %v2436
        %v2438 = vpop.f32.mrb[0].mxu0
        %2439 = vdwg.mxu0
        %v2440 = vld [vmem:[#allocation9] sm:$0xff]
        %v2441 = vld [vmem:[#allocation9 + $0x8] sm:$0xff]
        %v2442 = vld [vmem:[#allocation9 + $0x10] sm:$0xff]
        %v2443 = vld [vmem:[#allocation9 + $0x18] sm:$0xff]
        %v2444 = vld [vmem:[#allocation9 + $0x20] sm:$0xff]
        %v2445 = vld [vmem:[#allocation9 + $0x28] sm:$0xff]
        %v2446 = vld [vmem:[#allocation9 + $0x30] sm:$0xff]
        %v2447 = vld [vmem:[#allocation9 + $0x38] sm:$0xff]
        %v2448 = vld [vmem:[#allocation9 + $0x40] sm:$0xff]
        %v2449 = vld [vmem:[#allocation9 + $0x48] sm:$0xff]
        %v2450 = vld [vmem:[#allocation9 + $0x50] sm:$0xff]
        %v2451 = vld [vmem:[#allocation9 + $0x58] sm:$0xff]
        %v2452 = vld [vmem:[#allocation9 + $0x60] sm:$0xff]
        %v2453 = vld [vmem:[#allocation9 + $0x68] sm:$0xff]
        %v2454 = vld [vmem:[#allocation9 + $0x70] sm:$0xff]
        %v2455 = vld [vmem:[#allocation9 + $0x78] sm:$0xff]
        %v2456 = vld [vmem:[#allocation9 + $0x80] sm:$0xff]
        %v2457 = vld [vmem:[#allocation9 + $0x88] sm:$0xff]
        %v2458 = vld [vmem:[#allocation9 + $0x90] sm:$0xff]
        %v2459 = vld [vmem:[#allocation9 + $0x98] sm:$0xff]
        %v2460 = vld [vmem:[#allocation9 + $0xa0] sm:$0xff]
        %v2461 = vld [vmem:[#allocation9 + $0xa8] sm:$0xff]
        %v2462 = vld [vmem:[#allocation9 + $0xb0] sm:$0xff]
        %v2463 = vld [vmem:[#allocation9 + $0xb8] sm:$0xff]
        %v2465 = vsel %vm2278, %v2441, 0
        %v2468 = vsel %vm2278, %v2443, 0
        %v2471 = vsel %vm2278, %v2445, 0
        %v2474 = vsel %vm2278, %v2447, 0
        %v2477 = vsel %vm2278, %v2449, 0
        %v2480 = vsel %vm2278, %v2451, 0
        %v2483 = vsel %vm2278, %v2453, 0
        %v2486 = vsel %vm2278, %v2455, 0
        %v2489 = vsel %vm2278, %v2457, 0
        %v2492 = vsel %vm2278, %v2459, 0
        %v2495 = vsel %vm2278, %v2461, 0
        %v2498 = vsel %vm2278, %v2463, 0
        %2500 = vmatprep.subr.mxu0 0.0
        %2501 = vmatpush1.msra.mxu0 %v2230
        %2502 = vmatprep.subr.mxu0 0.0
        %2503 = vmatpush1.msra.mxu0 %v2231
        %2504 = vmatprep.subr.mxu0 0.0
        %2505 = vmatpush1.msra.mxu0 %v2232
        %2506 = vmatprep.subr.mxu0 0.0
        %2507 = vmatpush1.msra.mxu0 %v2233
        %2508 = vmatprep.subr.mxu0 0.0
        %2509 = vmatpush1.msra.mxu0 %v2234
        %2510 = vmatprep.subr.mxu0 0.0
        %2511 = vmatpush1.msra.mxu0 %v2235
        %2512 = vmatprep.subr.mxu0 0.0
        %2513 = vmatpush1.msra.mxu0 %v2236
        %2514 = vmatprep.subr.mxu0 0.0
        %2515 = vmatpush1.msra.mxu0 %v2237
        %2516 = vmatprep.subr.mxu0 0.0
        %2517 = vmatpush1.msra.mxu0 %v2238
        %2518 = vmatprep.subr.mxu0 0.0
        %2519 = vmatpush1.msra.mxu0 %v2239
        %2520 = vmatprep.subr.mxu0 0.0
        %2521 = vmatpush1.msra.mxu0 %v2240
        %2522 = vmatprep.subr.mxu0 0.0
        %2523 = vmatpush1.msra.mxu0 %v2241
        %2524 = vmatprep.subr.mxu0 0.0
        %2525 = vmatpush1.msra.mxu0 %v2242
        %2526 = vmatprep.subr.mxu0 0.0
        %2527 = vmatpush1.msra.mxu0 %v2243
        %2528 = vmatprep.subr.mxu0 0.0
        %2529 = vmatpush1.msra.mxu0 %v2244
        %2530 = vmatprep.subr.mxu0 0.0
        %2531 = vmatpush1.msra.mxu0 %v2245
        %2532 = vmatprep.subr.mxu0 0.0
        %2533 = vmatpush1.msra.mxu0 %v2246
        %2534 = vmatprep.subr.mxu0 0.0
        %2535 = vmatpush1.msra.mxu0 %v2247
        %2536 = vmatprep.subr.mxu0 0.0
        %2537 = vmatpush1.msra.mxu0 %v2248
        %2538 = vmatprep.subr.mxu0 0.0
        %2539 = vmatpush1.msra.mxu0 %v2249
        %2540 = vmatprep.subr.mxu0 0.0
        %2541 = vmatpush1.msra.mxu0 %v2250
        %2542 = vmatprep.subr.mxu0 0.0
        %2543 = vmatpush1.msra.mxu0 %v2251
        %2544 = vmatprep.subr.mxu0 0.0
        %2545 = vmatpush1.msra.mxu0 %v2252
        %2546 = vmatprep.subr.mxu0 0.0
        %2547 = vmatpush1.msra.mxu0 %v2253
        %2548 = vmatprep.subr.mxu0 0.0
        %2549 = vmatpush1.msra.mxu0 0.0
        %2550 = vmatprep.subr.mxu0 0.0
        %2551 = vmatpush1.msra.mxu0 0.0
        %2552 = vmatprep.subr.mxu0 0.0
        %2553 = vmatpush1.msra.mxu0 0.0
        %2554 = vmatprep.subr.mxu0 0.0
        %2555 = vmatpush1.msra.mxu0 0.0
        %2556 = vmatprep.subr.mxu0 0.0
        %2557 = vmatpush1.msra.mxu0 0.0
        %2558 = vmatprep.subr.mxu0 0.0
        %2559 = vmatpush1.msra.mxu0 0.0
        %2560 = vmatprep.subr.mxu0 0.0
        %2561 = vmatpush1.msra.mxu0 0.0
        %2562 = vmatprep.subr.mxu0 0.0
        %2563 = vmatpush1.msra.mxu0 0.0
        %2564 = vmatprep.mubr.f32.mxu0 %v2465
        %2565 = vmatmul.mubr.f32.gmra.mrb[0].mxu0 %v2440
        %v2566 = vpop.f32.mrb[0].mxu0
        %v2567 = vadd.f32 0.0, %v2566
        %v2568 = vpop.f32.mrb[0].mxu0
        %2569 = vmatprep.mubr.f32.mxu0 %v2468
        %2570 = vmatmul.mubr.f32.gmra.mrb[0].mxu0 %v2442
        %v2571 = vpop.f32.mrb[0].mxu0
        %v2572 = vadd.f32 0.0, %v2571
        %v2573 = vpop.f32.mrb[0].mxu0
        %2574 = vmatprep.mubr.f32.mxu0 %v2471
        %2575 = vmatmul.mubr.f32.gmra.mrb[0].mxu0 %v2444
        %v2576 = vpop.f32.mrb[0].mxu0
        %v2577 = vadd.f32 0.0, %v2576
        %v2578 = vpop.f32.mrb[0].mxu0
        %2579 = vmatprep.mubr.f32.mxu0 %v2474
        %2580 = vmatmul.mubr.f32.gmra.mrb[0].mxu0 %v2446
        %v2581 = vpop.f32.mrb[0].mxu0
        %v2582 = vadd.f32 0.0, %v2581
        %v2583 = vpop.f32.mrb[0].mxu0
        %2584 = vmatprep.mubr.f32.mxu0 %v2477
        %2585 = vmatmul.mubr.f32.gmra.mrb[0].mxu0 %v2448
        %v2586 = vpop.f32.mrb[0].mxu0
        %v2587 = vadd.f32 0.0, %v2586
        %v2588 = vpop.f32.mrb[0].mxu0
        %2589 = vmatprep.mubr.f32.mxu0 %v2480
        %2590 = vmatmul.mubr.f32.gmra.mrb[0].mxu0 %v2450
        %v2591 = vpop.f32.mrb[0].mxu0
        %v2592 = vadd.f32 0.0, %v2591
        %v2593 = vpop.f32.mrb[0].mxu0
        %2594 = vmatprep.mubr.f32.mxu0 %v2483
        %2595 = vmatmul.mubr.f32.gmra.mrb[0].mxu0 %v2452
        %v2596 = vpop.f32.mrb[0].mxu0
        %v2597 = vadd.f32 0.0, %v2596
        %v2598 = vpop.f32.mrb[0].mxu0
        %2599 = vmatprep.mubr.f32.mxu0 %v2486
        %2600 = vmatmul.mubr.f32.gmra.mrb[0].mxu0 %v2454
        %v2601 = vpop.f32.mrb[0].mxu0
        %v2602 = vadd.f32 0.0, %v2601
        %v2603 = vpop.f32.mrb[0].mxu0
        %2604 = vmatprep.mubr.f32.mxu0 %v2489
        %2605 = vmatmul.mubr.f32.gmra.mrb[0].mxu0 %v2456
        %v2606 = vpop.f32.mrb[0].mxu0
        %v2607 = vadd.f32 0.0, %v2606
        %v2608 = vpop.f32.mrb[0].mxu0
        %2609 = vmatprep.mubr.f32.mxu0 %v2492
        %2610 = vmatmul.mubr.f32.gmra.mrb[0].mxu0 %v2458
        %v2611 = vpop.f32.mrb[0].mxu0
        %v2612 = vadd.f32 0.0, %v2611
        %v2613 = vpop.f32.mrb[0].mxu0
        %2614 = vmatprep.mubr.f32.mxu0 %v2495
        %2615 = vmatmul.mubr.f32.gmra.mrb[0].mxu0 %v2460
        %v2616 = vpop.f32.mrb[0].mxu0
        %v2617 = vadd.f32 0.0, %v2616
        %v2618 = vpop.f32.mrb[0].mxu0
        %2619 = vmatprep.mubr.f32.mxu0 %v2498
        %2620 = vmatmul.mubr.f32.gmra.mrb[0].mxu0 %v2462
        %v2621 = vpop.f32.mrb[0].mxu0
        %v2622 = vadd.f32 0.0, %v2621
        %v2623 = vpop.f32.mrb[0].mxu0
        %2624 = vdwg.mxu0
        %v2625 = vmax.f32 %v2382, %v2567
        %v2626 = vmax.f32 %v2387, %v2572
        %v2627 = vmax.f32 %v2392, %v2577
        %v2628 = vmax.f32 %v2397, %v2582
        %v2629 = vmax.f32 %v2402, %v2587
        %v2630 = vmax.f32 %v2407, %v2592
        %v2631 = vmax.f32 %v2412, %v2597
        %v2632 = vmax.f32 %v2417, %v2602
        %v2633 = vmax.f32 %v2422, %v2607
        %v2634 = vmax.f32 %v2427, %v2612
        %v2635 = vmax.f32 %v2432, %v2617
        %v2636 = vmax.f32 %v2437, %v2622
        %v2649 = vcombine.high %v2625, %v2625
        %v2650 = vcombine.high %v2626, %v2626
        %v2651 = vcombine.high %v2627, %v2627
        %v2652 = vcombine.high %v2628, %v2628
        %v2653 = vcombine.high %v2629, %v2629
        %v2654 = vcombine.high %v2630, %v2630
        %v2655 = vcombine.high %v2631, %v2631
        %v2656 = vcombine.high %v2632, %v2632
        %v2657 = vcombine.high %v2633, %v2633
        %v2658 = vcombine.high %v2634, %v2634
        %v2659 = vcombine.high %v2635, %v2635
        %v2660 = vcombine.high %v2636, %v2636
        %v2661 = vcombine.low %v2625, %v2649
        %v2662 = vcombine.low %v2650, %v2627
        %v2663 = vcombine.low %v2628, %v2652
        %v2664 = vcombine.low %v2653, %v2630
        %v2665 = vcombine.low %v2631, %v2655
        %v2666 = vcombine.low %v2656, %v2633
        %v2667 = vcombine.low %v2634, %v2658
        %v2668 = vcombine.low %v2659, %v2636
        %vm2677 = vcmask 588800
        %2678 = vst.msk [vmem:[#allocation3] sm:$0xff] %vm2677, %v2661
        %2679 = vst.msk [vmem:[#allocation3 + $0x18] sm:$0xff] %vm2677, %v2662
        %2680 = vst.msk [vmem:[#allocation3 + $0x30] sm:$0xff] %vm2677, %v2663
        %2681 = vst.msk [vmem:[#allocation3 + $0x48] sm:$0xff] %vm2677, %v2664
        %2682 = vst.msk [vmem:[#allocation3 + $0x60] sm:$0xff] %vm2677, %v2665
        %2683 = vst.msk [vmem:[#allocation3 + $0x78] sm:$0xff] %vm2677, %v2666
        %2684 = vst.msk [vmem:[#allocation3 + $0x90] sm:$0xff] %vm2677, %v2667
        %2685 = vst.msk [vmem:[#allocation3 + $0xa8] sm:$0xff] %vm2677, %v2668
        %vm2686 = vcmask 1046528
        %v2687 = vrot.slane %v2661, 1
        %v2688 = vrot.slane %v2626, 1
        %v2689 = vsel %vm2686, %v2687, %v2688
        %v2690 = vrot.slane %v2662, 1
        %v2691 = vrot.slane %v2651, 1
        %v2692 = vsel %vm2686, %v2690, %v2691
        %v2693 = vrot.slane %v2663, 1
        %v2694 = vrot.slane %v2629, 1
        %v2695 = vsel %vm2686, %v2693, %v2694
        %v2696 = vrot.slane %v2664, 1
        %v2697 = vrot.slane %v2654, 1
        %v2698 = vsel %vm2686, %v2696, %v2697
        %v2699 = vrot.slane %v2665, 1
        %v2700 = vrot.slane %v2632, 1
        %v2701 = vsel %vm2686, %v2699, %v2700
        %v2702 = vrot.slane %v2666, 1
        %v2703 = vrot.slane %v2657, 1
        %v2704 = vsel %vm2686, %v2702, %v2703
        %v2705 = vrot.slane %v2667, 1
        %v2706 = vrot.slane %v2635, 1
        %v2707 = vsel %vm2686, %v2705, %v2706
        %v2708 = vrot.slane %v2668, 1
        %v2709 = vrot.slane %v2660, 1
        %v2710 = vsel %vm2686, %v2708, %v2709
        %2711 = vrot.lane.b32.xlu0 %v2689, 72
        %v2712 = vpop.permute.xlu0 %2711
        %2713 = vrot.lane.b32.xlu0 %v2692, 72
        %v2714 = vpop.permute.xlu0 %2713
        %2715 = vrot.lane.b32.xlu0 %v2695, 72
        %v2716 = vpop.permute.xlu0 %2715
        %2717 = vrot.lane.b32.xlu0 %v2698, 72
        %v2718 = vpop.permute.xlu0 %2717
        %2719 = vrot.lane.b32.xlu0 %v2701, 72
        %v2720 = vpop.permute.xlu0 %2719
        %2721 = vrot.lane.b32.xlu0 %v2704, 72
        %v2722 = vpop.permute.xlu0 %2721
        %2723 = vrot.lane.b32.xlu0 %v2707, 72
        %v2724 = vpop.permute.xlu0 %2723
        %2725 = vrot.lane.b32.xlu0 %v2710, 72
        %v2726 = vpop.permute.xlu0 %2725
        %vm2735 = vcmask 1048128
        %2736 = vst.msk [vmem:[#allocation3] sm:$0xff] %vm2735, %v2712
        %2737 = vst.msk [vmem:[#allocation3 + $0x8] sm:$0xff] %vm1769, %v2712
        %2738 = vst.msk [vmem:[#allocation3 + $0x18] sm:$0xff] %vm2735, %v2714
        %2739 = vst.msk [vmem:[#allocation3 + $0x20] sm:$0xff] %vm1769, %v2714
        %2740 = vst.msk [vmem:[#allocation3 + $0x30] sm:$0xff] %vm2735, %v2716
        %2741 = vst.msk [vmem:[#allocation3 + $0x38] sm:$0xff] %vm1769, %v2716
        %2742 = vst.msk [vmem:[#allocation3 + $0x48] sm:$0xff] %vm2735, %v2718
        %2743 = vst.msk [vmem:[#allocation3 + $0x50] sm:$0xff] %vm1769, %v2718
        %2744 = vst.msk [vmem:[#allocation3 + $0x60] sm:$0xff] %vm2735, %v2720
        %2745 = vst.msk [vmem:[#allocation3 + $0x68] sm:$0xff] %vm1769, %v2720
        %2746 = vst.msk [vmem:[#allocation3 + $0x78] sm:$0xff] %vm2735, %v2722
        %2747 = vst.msk [vmem:[#allocation3 + $0x80] sm:$0xff] %vm1769, %v2722
        %2748 = vst.msk [vmem:[#allocation3 + $0x90] sm:$0xff] %vm2735, %v2724
        %2749 = vst.msk [vmem:[#allocation3 + $0x98] sm:$0xff] %vm1769, %v2724
        %2750 = vst.msk [vmem:[#allocation3 + $0xa8] sm:$0xff] %vm2735, %v2726
        %2751 = vst.msk [vmem:[#allocation3 + $0xb0] sm:$0xff] %vm1769, %v2726
        %vm2752 = vcmask 1045504
        %v2753 = vrot.slane %v2661, 2
        %v2754 = vrot.slane %v2626, 2
        %v2755 = vsel %vm2752, %v2753, %v2754
        %v2756 = vrot.slane %v2662, 2
        %v2757 = vrot.slane %v2651, 2
        %v2758 = vsel %vm2752, %v2756, %v2757
        %v2759 = vrot.slane %v2663, 2
        %v2760 = vrot.slane %v2629, 2
        %v2761 = vsel %vm2752, %v2759, %v2760
        %v2762 = vrot.slane %v2664, 2
        %v2763 = vrot.slane %v2654, 2
        %v2764 = vsel %vm2752, %v2762, %v2763
        %v2765 = vrot.slane %v2665, 2
        %v2766 = vrot.slane %v2632, 2
        %v2767 = vsel %vm2752, %v2765, %v2766
        %v2768 = vrot.slane %v2666, 2
        %v2769 = vrot.slane %v2657, 2
        %v2770 = vsel %vm2752, %v2768, %v2769
        %v2771 = vrot.slane %v2667, 2
        %v2772 = vrot.slane %v2635, 2
        %v2773 = vsel %vm2752, %v2771, %v2772
        %v2774 = vrot.slane %v2668, 2
        %v2775 = vrot.slane %v2660, 2
        %v2776 = vsel %vm2752, %v2774, %v2775
        %2777 = vrot.lane.b32.xlu0 %v2755, 16
        %v2778 = vpop.permute.xlu0 %2777
        %2779 = vrot.lane.b32.xlu0 %v2758, 16
        %v2780 = vpop.permute.xlu0 %2779
        %2781 = vrot.lane.b32.xlu0 %v2761, 16
        %v2782 = vpop.permute.xlu0 %2781
        %2783 = vrot.lane.b32.xlu0 %v2764, 16
        %v2784 = vpop.permute.xlu0 %2783
        %2785 = vrot.lane.b32.xlu0 %v2767, 16
        %v2786 = vpop.permute.xlu0 %2785
        %2787 = vrot.lane.b32.xlu0 %v2770, 16
        %v2788 = vpop.permute.xlu0 %2787
        %2789 = vrot.lane.b32.xlu0 %v2773, 16
        %v2790 = vpop.permute.xlu0 %2789
        %2791 = vrot.lane.b32.xlu0 %v2776, 16
        %v2792 = vpop.permute.xlu0 %2791
        %vm2801 = vcmask 720000
        %2802 = vst.msk [vmem:[#allocation3 + $0x8] sm:$0xff] %vm2801, %v2778
        %2803 = vst.msk [vmem:[#allocation3 + $0x20] sm:$0xff] %vm2801, %v2780
        %2804 = vst.msk [vmem:[#allocation3 + $0x38] sm:$0xff] %vm2801, %v2782
        %2805 = vst.msk [vmem:[#allocation3 + $0x50] sm:$0xff] %vm2801, %v2784
        %2806 = vst.msk [vmem:[#allocation3 + $0x68] sm:$0xff] %vm2801, %v2786
        %2807 = vst.msk [vmem:[#allocation3 + $0x80] sm:$0xff] %vm2801, %v2788
        %2808 = vst.msk [vmem:[#allocation3 + $0x98] sm:$0xff] %vm2801, %v2790
        %2809 = vst.msk [vmem:[#allocation3 + $0xb0] sm:$0xff] %vm2801, %v2792
        %vm2810 = vcmask 1044480
        %v2811 = vrot.slane %v2661, 3
        %v2812 = vrot.slane %v2626, 3
        %v2813 = vsel %vm2810, %v2811, %v2812
        %v2814 = vrot.slane %v2662, 3
        %v2815 = vrot.slane %v2651, 3
        %v2816 = vsel %vm2810, %v2814, %v2815
        %v2817 = vrot.slane %v2663, 3
        %v2818 = vrot.slane %v2629, 3
        %v2819 = vsel %vm2810, %v2817, %v2818
        %v2820 = vrot.slane %v2664, 3
        %v2821 = vrot.slane %v2654, 3
        %v2822 = vsel %vm2810, %v2820, %v2821
        %v2823 = vrot.slane %v2665, 3
        %v2824 = vrot.slane %v2632, 3
        %v2825 = vsel %vm2810, %v2823, %v2824
        %v2826 = vrot.slane %v2666, 3
        %v2827 = vrot.slane %v2657, 3
        %v2828 = vsel %vm2810, %v2826, %v2827
        %v2829 = vrot.slane %v2667, 3
        %v2830 = vrot.slane %v2635, 3
        %v2831 = vsel %vm2810, %v2829, %v2830
        %v2832 = vrot.slane %v2668, 3
        %v2833 = vrot.slane %v2660, 3
        %v2834 = vsel %vm2810, %v2832, %v2833
        %2835 = vrot.lane.b32.xlu0 %v2813, 88
        %v2836 = vpop.permute.xlu0 %2835
        %2837 = vrot.lane.b32.xlu0 %v2816, 88
        %v2838 = vpop.permute.xlu0 %2837
        %2839 = vrot.lane.b32.xlu0 %v2819, 88
        %v2840 = vpop.permute.xlu0 %2839
        %2841 = vrot.lane.b32.xlu0 %v2822, 88
        %v2842 = vpop.permute.xlu0 %2841
        %2843 = vrot.lane.b32.xlu0 %v2825, 88
        %v2844 = vpop.permute.xlu0 %2843
        %2845 = vrot.lane.b32.xlu0 %v2828, 88
        %v2846 = vpop.permute.xlu0 %2845
        %2847 = vrot.lane.b32.xlu0 %v2831, 88
        %v2848 = vpop.permute.xlu0 %2847
        %2849 = vrot.lane.b32.xlu0 %v2834, 88
        %v2850 = vpop.permute.xlu0 %2849
        %vm2859 = vcmask 1048256
        %2860 = vst.msk [vmem:[#allocation3 + $0x8] sm:$0xff] %vm2859, %v2836
        %vm2861 = vcmask 261120
        %2862 = vst.msk [vmem:[#allocation3 + $0x10] sm:$0xff] %vm2861, %v2836
        %2863 = vst.msk [vmem:[#allocation3 + $0x20] sm:$0xff] %vm2859, %v2838
        %2864 = vst.msk [vmem:[#allocation3 + $0x28] sm:$0xff] %vm2861, %v2838
        %2865 = vst.msk [vmem:[#allocation3 + $0x38] sm:$0xff] %vm2859, %v2840
        %2866 = vst.msk [vmem:[#allocation3 + $0x40] sm:$0xff] %vm2861, %v2840
        %2867 = vst.msk [vmem:[#allocation3 + $0x50] sm:$0xff] %vm2859, %v2842
        %2868 = vst.msk [vmem:[#allocation3 + $0x58] sm:$0xff] %vm2861, %v2842
        %2869 = vst.msk [vmem:[#allocation3 + $0x68] sm:$0xff] %vm2859, %v2844
        %2870 = vst.msk [vmem:[#allocation3 + $0x70] sm:$0xff] %vm2861, %v2844
        %2871 = vst.msk [vmem:[#allocation3 + $0x80] sm:$0xff] %vm2859, %v2846
        %2872 = vst.msk [vmem:[#allocation3 + $0x88] sm:$0xff] %vm2861, %v2846
        %2873 = vst.msk [vmem:[#allocation3 + $0x98] sm:$0xff] %vm2859, %v2848
        %2874 = vst.msk [vmem:[#allocation3 + $0xa0] sm:$0xff] %vm2861, %v2848
        %2875 = vst.msk [vmem:[#allocation3 + $0xb0] sm:$0xff] %vm2859, %v2850
        %2876 = vst.msk [vmem:[#allocation3 + $0xb8] sm:$0xff] %vm2861, %v2850
        %v2877 = vcombine.low %v2649, %v2626
        %v2878 = vcombine.low %v2627, %v2651
        %v2879 = vcombine.low %v2652, %v2629
        %v2880 = vcombine.low %v2630, %v2654
        %v2881 = vcombine.low %v2655, %v2632
        %v2882 = vcombine.low %v2633, %v2657
        %v2883 = vcombine.low %v2658, %v2635
        %v2884 = vcombine.low %v2636, %v2660
        %2885 = vrot.lane.b32.xlu0 %v2877, 32
        %v2886 = vpop.permute.xlu0 %2885
        %2887 = vrot.lane.b32.xlu0 %v2878, 32
        %v2888 = vpop.permute.xlu0 %2887
        %2889 = vrot.lane.b32.xlu0 %v2879, 32
        %v2890 = vpop.permute.xlu0 %2889
        %2891 = vrot.lane.b32.xlu0 %v2880, 32
        %v2892 = vpop.permute.xlu0 %2891
        %2893 = vrot.lane.b32.xlu0 %v2881, 32
        %v2894 = vpop.permute.xlu0 %2893
        %2895 = vrot.lane.b32.xlu0 %v2882, 32
        %v2896 = vpop.permute.xlu0 %2895
        %2897 = vrot.lane.b32.xlu0 %v2883, 32
        %v2898 = vpop.permute.xlu0 %2897
        %2899 = vrot.lane.b32.xlu0 %v2884, 32
        %v2900 = vpop.permute.xlu0 %2899
        %vm2909 = vcmask 851200
        %2910 = vst.msk [vmem:[#allocation3 + $0x10] sm:$0xff] %vm2909, %v2886
        %2911 = vst.msk [vmem:[#allocation3 + $0x28] sm:$0xff] %vm2909, %v2888
        %2912 = vst.msk [vmem:[#allocation3 + $0x40] sm:$0xff] %vm2909, %v2890
        %2913 = vst.msk [vmem:[#allocation3 + $0x58] sm:$0xff] %vm2909, %v2892
        %2914 = vst.msk [vmem:[#allocation3 + $0x70] sm:$0xff] %vm2909, %v2894
        %2915 = vst.msk [vmem:[#allocation3 + $0x88] sm:$0xff] %vm2909, %v2896
        %2916 = vst.msk [vmem:[#allocation3 + $0xa0] sm:$0xff] %vm2909, %v2898
        %2917 = vst.msk [vmem:[#allocation3 + $0xb8] sm:$0xff] %vm2909, %v2900
        %v2918 = vld [vmem:[#allocation3] sm:$0xff]
        %v2919 = vld [vmem:[#allocation3 + $0x8] sm:$0xff]
        %v2920 = vld [vmem:[#allocation3 + $0x10] sm:$0xff]
        %v2921 = vld [vmem:[#allocation3 + $0x18] sm:$0xff]
        %v2922 = vld [vmem:[#allocation3 + $0x20] sm:$0xff]
        %v2923 = vld [vmem:[#allocation3 + $0x28] sm:$0xff]
        %v2924 = vld [vmem:[#allocation3 + $0x30] sm:$0xff]
        %v2925 = vld [vmem:[#allocation3 + $0x38] sm:$0xff]
        %v2926 = vld [vmem:[#allocation3 + $0x40] sm:$0xff]
        %v2927 = vld [vmem:[#allocation3 + $0x48] sm:$0xff]
        %v2928 = vld [vmem:[#allocation3 + $0x50] sm:$0xff]
        %v2929 = vld [vmem:[#allocation3 + $0x58] sm:$0xff]
        %v2930 = vld [vmem:[#allocation3 + $0x60] sm:$0xff]
        %v2931 = vld [vmem:[#allocation3 + $0x68] sm:$0xff]
        %v2932 = vld [vmem:[#allocation3 + $0x70] sm:$0xff]
        %v2933 = vld [vmem:[#allocation3 + $0x78] sm:$0xff]
        %v2934 = vld [vmem:[#allocation3 + $0x80] sm:$0xff]
        %v2935 = vld [vmem:[#allocation3 + $0x88] sm:$0xff]
        %v2936 = vld [vmem:[#allocation3 + $0x90] sm:$0xff]
        %v2937 = vld [vmem:[#allocation3 + $0x98] sm:$0xff]
        %v2938 = vld [vmem:[#allocation3 + $0xa0] sm:$0xff]
        %v2939 = vld [vmem:[#allocation3 + $0xa8] sm:$0xff]
        %v2940 = vld [vmem:[#allocation3 + $0xb0] sm:$0xff]
        %v2941 = vld [vmem:[#allocation3 + $0xb8] sm:$0xff]
        %v2942 = vld [vmem:[%s7] sm:$0xff]
        %v2943 = vld [vmem:[%s7 + $0x8] sm:$0xff]
        %v2944 = vld [vmem:[%s7 + $0x10] sm:$0xff]
        %v2945 = vld [vmem:[%s7 + $0x18] sm:$0xff]
        %v2946 = vld [vmem:[%s7 + $0x20] sm:$0xff]
        %v2947 = vld [vmem:[%s7 + $0x28] sm:$0xff]
        %v2948 = vld [vmem:[%s7 + $0x30] sm:$0xff]
        %v2949 = vld [vmem:[%s7 + $0x38] sm:$0xff]
        %v2950 = vld [vmem:[%s7 + $0x40] sm:$0xff]
        %v2951 = vld [vmem:[%s7 + $0x48] sm:$0xff]
        %v2952 = vld [vmem:[%s7 + $0x50] sm:$0xff]
        %v2953 = vld [vmem:[%s7 + $0x58] sm:$0xff]
        %v2954 = vld [vmem:[%s7 + $0x60] sm:$0xff]
        %v2955 = vld [vmem:[%s7 + $0x68] sm:$0xff]
        %v2956 = vld [vmem:[%s7 + $0x70] sm:$0xff]
        %v2957 = vld [vmem:[%s7 + $0x78] sm:$0xff]
        %v2958 = vld [vmem:[%s7 + $0x80] sm:$0xff]
        %v2959 = vld [vmem:[%s7 + $0x88] sm:$0xff]
        %v2960 = vld [vmem:[%s7 + $0x90] sm:$0xff]
        %v2961 = vld [vmem:[%s7 + $0x98] sm:$0xff]
        %v2962 = vld [vmem:[%s7 + $0xa0] sm:$0xff]
        %v2963 = vld [vmem:[%s7 + $0xa8] sm:$0xff]
        %v2964 = vld [vmem:[%s7 + $0xb0] sm:$0xff]
        %v2965 = vld [vmem:[%s7 + $0xb8] sm:$0xff]
        %v2966 = vld [vmem:[%s7 + $0xc0] sm:$0xff]
        %v2967 = vld [vmem:[%s7 + $0xc8] sm:$0xff]
        %v2968 = vld [vmem:[%s7 + $0xd0] sm:$0xff]
        %v2969 = vld [vmem:[%s7 + $0xd8] sm:$0xff]
        %v2970 = vld [vmem:[%s7 + $0xe0] sm:$0xff]
        %v2971 = vld [vmem:[%s7 + $0xe8] sm:$0xff]
        %v2972 = vld [vmem:[%s7 + $0xf0] sm:$0xff]
        %v2973 = vld [vmem:[%s7 + $0xf8] sm:$0xff]
        %v2974 = vld [vmem:[%s7 + $0x100] sm:$0xff]
        %v2975 = vld [vmem:[%s7 + $0x108] sm:$0xff]
        %v2976 = vld [vmem:[%s7 + $0x110] sm:$0xff]
        %v2977 = vld [vmem:[%s7 + $0x118] sm:$0xff]
        %v2978 = vld [vmem:[%s7 + $0x120] sm:$0xff]
        %v2979 = vld [vmem:[%s7 + $0x128] sm:$0xff]
        %v2980 = vld [vmem:[%s7 + $0x130] sm:$0xff]
        %v2981 = vld [vmem:[%s7 + $0x138] sm:$0xff]
        %v2982 = vld [vmem:[%s7 + $0x140] sm:$0xff]
        %v2983 = vld [vmem:[%s7 + $0x148] sm:$0xff]
        %v2984 = vld [vmem:[%s7 + $0x150] sm:$0xff]
        %v2985 = vld [vmem:[%s7 + $0x158] sm:$0xff]
        %v2986 = vld [vmem:[%s7 + $0x160] sm:$0xff]
        %v2987 = vld [vmem:[%s8] sm:$0x1]
        %v2989 = vlaneseq
        %v2990 = vshrl.u32 %v2989, 7
        %v2991 = vsub.s32 0, %v2990
        %v2992 = vrot.slane %v2987, %v2991
        %vm2994 = vcmask 850944
        %v2996 = vsel %vm2994, %v2920, 0
        %v2999 = vsel %vm2994, %v2923, 0
        %v3002 = vsel %vm2994, %v2926, 0
        %v3005 = vsel %vm2994, %v2929, 0
        %v3008 = vsel %vm2994, %v2932, 0
        %v3011 = vsel %vm2994, %v2935, 0
        %v3014 = vsel %vm2994, %v2938, 0
        %v3017 = vsel %vm2994, %v2941, 0
        %3019 = vmatprep.subr.mxu0 0.0
        %3020 = vmatpush1.msra.mxu0 %v2942
        %3021 = vmatprep.subr.mxu0 0.0
        %3022 = vmatpush1.msra.mxu0 %v2943
        %3023 = vmatprep.subr.mxu0 0.0
        %3024 = vmatpush1.msra.mxu0 %v2944
        %3025 = vmatprep.subr.mxu0 0.0
        %3026 = vmatpush1.msra.mxu0 %v2945
        %3027 = vmatprep.subr.mxu0 0.0
        %3028 = vmatpush1.msra.mxu0 %v2946
        %3029 = vmatprep.subr.mxu0 0.0
        %3030 = vmatpush1.msra.mxu0 %v2947
        %3031 = vmatprep.subr.mxu0 0.0
        %3032 = vmatpush1.msra.mxu0 %v2948
        %3033 = vmatprep.subr.mxu0 0.0
        %3034 = vmatpush1.msra.mxu0 %v2949
        %3035 = vmatprep.subr.mxu0 0.0
        %3036 = vmatpush1.msra.mxu0 %v2950
        %3037 = vmatprep.subr.mxu0 0.0
        %3038 = vmatpush1.msra.mxu0 %v2951
        %3039 = vmatprep.subr.mxu0 0.0
        %3040 = vmatpush1.msra.mxu0 %v2952
        %3041 = vmatprep.subr.mxu0 0.0
        %3042 = vmatpush1.msra.mxu0 %v2953
        %3043 = vmatprep.subr.mxu0 0.0
        %3044 = vmatpush1.msra.mxu0 %v2954
        %3045 = vmatprep.subr.mxu0 0.0
        %3046 = vmatpush1.msra.mxu0 %v2955
        %3047 = vmatprep.subr.mxu0 0.0
        %3048 = vmatpush1.msra.mxu0 %v2956
        %3049 = vmatprep.subr.mxu0 0.0
        %3050 = vmatpush1.msra.mxu0 %v2957
        %3051 = vmatprep.subr.mxu0 0.0
        %3052 = vmatpush1.msra.mxu0 %v2958
        %3053 = vmatprep.subr.mxu0 0.0
        %3054 = vmatpush1.msra.mxu0 %v2959
        %3055 = vmatprep.subr.mxu0 0.0
        %3056 = vmatpush1.msra.mxu0 %v2960
        %3057 = vmatprep.subr.mxu0 0.0
        %3058 = vmatpush1.msra.mxu0 %v2961
        %3059 = vmatprep.subr.mxu0 0.0
        %3060 = vmatpush1.msra.mxu0 %v2962
        %3061 = vmatprep.subr.mxu0 0.0
        %3062 = vmatpush1.msra.mxu0 %v2963
        %3063 = vmatprep.subr.mxu0 0.0
        %3064 = vmatpush1.msra.mxu0 %v2964
        %3065 = vmatprep.subr.mxu0 0.0
        %3066 = vmatpush1.msra.mxu0 %v2965
        %3067 = vmatprep.subr.mxu0 0.0
        %3068 = vmatpush1.msra.mxu0 %v2966
        %3069 = vmatprep.subr.mxu0 0.0
        %3070 = vmatpush1.msra.mxu0 %v2967
        %3071 = vmatprep.subr.mxu0 0.0
        %3072 = vmatpush1.msra.mxu0 %v2968
        %3073 = vmatprep.subr.mxu0 0.0
        %3074 = vmatpush1.msra.mxu0 %v2969
        %3075 = vmatprep.subr.mxu0 0.0
        %3076 = vmatpush1.msra.mxu0 %v2970
        %3077 = vmatprep.subr.mxu0 0.0
        %3078 = vmatpush1.msra.mxu0 %v2971
        %3079 = vmatprep.subr.mxu0 0.0
        %3080 = vmatpush1.msra.mxu0 %v2972
        %3081 = vmatprep.subr.mxu0 0.0
        %3082 = vmatpush1.msra.mxu0 %v2973
        %3083 = vmatprep.mubr.f32.mxu0 %v2919
        %3084 = vmatmul.mubr.f32.gmra.mrb[0].mxu0 %v2918
        %v3085 = vpop.f32.mrb[0].mxu0
        %v3086 = vadd.f32 %v2992, %v3085
        %v3087 = vpop.f32.mrb[0].mxu0
        %3088 = vmatprep.mubr.f32.mxu0 %v2922
        %3089 = vmatmul.mubr.f32.gmra.mrb[0].mxu0 %v2921
        %v3090 = vpop.f32.mrb[0].mxu0
        %v3091 = vadd.f32 %v2992, %v3090
        %v3092 = vpop.f32.mrb[0].mxu0
        %3093 = vmatprep.mubr.f32.mxu0 %v2925
        %3094 = vmatmul.mubr.f32.gmra.mrb[0].mxu0 %v2924
        %v3095 = vpop.f32.mrb[0].mxu0
        %v3096 = vadd.f32 %v2992, %v3095
        %v3097 = vpop.f32.mrb[0].mxu0
        %3098 = vmatprep.mubr.f32.mxu0 %v2928
        %3099 = vmatmul.mubr.f32.gmra.mrb[0].mxu0 %v2927
        %v3100 = vpop.f32.mrb[0].mxu0
        %v3101 = vadd.f32 %v2992, %v3100
        %v3102 = vpop.f32.mrb[0].mxu0
        %3103 = vmatprep.mubr.f32.mxu0 %v2931
        %3104 = vmatmul.mubr.f32.gmra.mrb[0].mxu0 %v2930
        %v3105 = vpop.f32.mrb[0].mxu0
        %v3106 = vadd.f32 %v2992, %v3105
        %v3107 = vpop.f32.mrb[0].mxu0
        %3108 = vmatprep.mubr.f32.mxu0 %v2934
        %3109 = vmatmul.mubr.f32.gmra.mrb[0].mxu0 %v2933
        %v3110 = vpop.f32.mrb[0].mxu0
        %v3111 = vadd.f32 %v2992, %v3110
        %v3112 = vpop.f32.mrb[0].mxu0
        %3113 = vmatprep.mubr.f32.mxu0 %v2937
        %3114 = vmatmul.mubr.f32.gmra.mrb[0].mxu0 %v2936
        %v3115 = vpop.f32.mrb[0].mxu0
        %v3116 = vadd.f32 %v2992, %v3115
        %v3117 = vpop.f32.mrb[0].mxu0
        %3118 = vmatprep.mubr.f32.mxu0 %v2940
        %3119 = vmatmul.mubr.f32.gmra.mrb[0].mxu0 %v2939
        %v3120 = vpop.f32.mrb[0].mxu0
        %v3121 = vadd.f32 %v2992, %v3120
        %v3122 = vpop.f32.mrb[0].mxu0
        %3123 = vdwg.mxu0
        %3124 = vmatprep.subr.mxu0 0.0
        %3125 = vmatpush1.msra.mxu0 %v2974
        %3126 = vmatprep.subr.mxu0 0.0
        %3127 = vmatpush1.msra.mxu0 %v2975
        %3128 = vmatprep.subr.mxu0 0.0
        %3129 = vmatpush1.msra.mxu0 %v2976
        %3130 = vmatprep.subr.mxu0 0.0
        %3131 = vmatpush1.msra.mxu0 %v2977
        %3132 = vmatprep.subr.mxu0 0.0
        %3133 = vmatpush1.msra.mxu0 %v2978
        %3134 = vmatprep.subr.mxu0 0.0
        %3135 = vmatpush1.msra.mxu0 %v2979
        %3136 = vmatprep.subr.mxu0 0.0
        %3137 = vmatpush1.msra.mxu0 %v2980
        %3138 = vmatprep.subr.mxu0 0.0
        %3139 = vmatpush1.msra.mxu0 %v2981
        %3140 = vmatprep.subr.mxu0 0.0
        %3141 = vmatpush1.msra.mxu0 %v2982
        %3142 = vmatprep.subr.mxu0 0.0
        %3143 = vmatpush1.msra.mxu0 %v2983
        %3144 = vmatprep.subr.mxu0 0.0
        %3145 = vmatpush1.msra.mxu0 %v2984
        %3146 = vmatprep.subr.mxu0 0.0
        %3147 = vmatpush1.msra.mxu0 %v2985
        %3148 = vmatprep.subr.mxu0 0.0
        %3149 = vmatpush1.msra.mxu0 %v2986
        %3150 = vmatprep.subr.mxu0 0.0
        %3151 = vmatpush1.msra.mxu0 0.0
        %3152 = vmatprep.subr.mxu0 0.0
        %3153 = vmatpush1.msra.mxu0 0.0
        %3154 = vmatprep.subr.mxu0 0.0
        %3155 = vmatpush1.msra.mxu0 0.0
        %3156 = vmatprep.subr.mxu0 0.0
        %3157 = vmatpush1.msra.mxu0 0.0
        %3158 = vmatprep.subr.mxu0 0.0
        %3159 = vmatpush1.msra.mxu0 0.0
        %3160 = vmatprep.subr.mxu0 0.0
        %3161 = vmatpush1.msra.mxu0 0.0
        %3162 = vmatprep.subr.mxu0 0.0
        %3163 = vmatpush1.msra.mxu0 0.0
        %3164 = vmatprep.subr.mxu0 0.0
        %3165 = vmatpush1.msra.mxu0 0.0
        %3166 = vmatprep.subr.mxu0 0.0
        %3167 = vmatpush1.msra.mxu0 0.0
        %3168 = vmatprep.subr.mxu0 0.0
        %3169 = vmatpush1.msra.mxu0 0.0
        %3170 = vmatprep.subr.mxu0 0.0
        %3171 = vmatpush1.msra.mxu0 0.0
        %3172 = vmatprep.subr.mxu0 0.0
        %3173 = vmatpush1.msra.mxu0 0.0
        %3174 = vmatprep.subr.mxu0 0.0
        %3175 = vmatpush1.msra.mxu0 0.0
        %3176 = vmatprep.subr.mxu0 0.0
        %3177 = vmatpush1.msra.mxu0 0.0
        %3178 = vmatprep.subr.mxu0 0.0
        %3179 = vmatpush1.msra.mxu0 0.0
        %3180 = vmatprep.subr.mxu0 0.0
        %3181 = vmatpush1.msra.mxu0 0.0
        %3182 = vmatprep.subr.mxu0 0.0
        %3183 = vmatpush1.msra.mxu0 0.0
        %3184 = vmatprep.subr.mxu0 0.0
        %3185 = vmatpush1.msra.mxu0 0.0
        %3186 = vmatprep.subr.mxu0 0.0
        %3187 = vmatpush1.msra.mxu0 0.0
        %3188 = vmatprep.mubr.f32.mxu0 0.0
        %3189 = vmatmul.mubr.f32.gmra.mrb[0].mxu0 %v2996
        %v3190 = vpop.f32.mrb[0].mxu0
        %v3191 = vadd.f32 %v3086, %v3190
        %v3192 = vpop.f32.mrb[0].mxu0
        %3193 = vmatprep.mubr.f32.mxu0 0.0
        %3194 = vmatmul.mubr.f32.gmra.mrb[0].mxu0 %v2999
        %v3195 = vpop.f32.mrb[0].mxu0
        %v3196 = vadd.f32 %v3091, %v3195
        %v3197 = vpop.f32.mrb[0].mxu0
        %3198 = vmatprep.mubr.f32.mxu0 0.0
        %3199 = vmatmul.mubr.f32.gmra.mrb[0].mxu0 %v3002
        %v3200 = vpop.f32.mrb[0].mxu0
        %v3201 = vadd.f32 %v3096, %v3200
        %v3202 = vpop.f32.mrb[0].mxu0
        %3203 = vmatprep.mubr.f32.mxu0 0.0
        %3204 = vmatmul.mubr.f32.gmra.mrb[0].mxu0 %v3005
        %v3205 = vpop.f32.mrb[0].mxu0
        %v3206 = vadd.f32 %v3101, %v3205
        %v3207 = vpop.f32.mrb[0].mxu0
        %3208 = vmatprep.mubr.f32.mxu0 0.0
        %3209 = vmatmul.mubr.f32.gmra.mrb[0].mxu0 %v3008
        %v3210 = vpop.f32.mrb[0].mxu0
        %v3211 = vadd.f32 %v3106, %v3210
        %v3212 = vpop.f32.mrb[0].mxu0
        %3213 = vmatprep.mubr.f32.mxu0 0.0
        %3214 = vmatmul.mubr.f32.gmra.mrb[0].mxu0 %v3011
        %v3215 = vpop.f32.mrb[0].mxu0
        %v3216 = vadd.f32 %v3111, %v3215
        %v3217 = vpop.f32.mrb[0].mxu0
        %3218 = vmatprep.mubr.f32.mxu0 0.0
        %3219 = vmatmul.mubr.f32.gmra.mrb[0].mxu0 %v3014
        %v3220 = vpop.f32.mrb[0].mxu0
        %v3221 = vadd.f32 %v3116, %v3220
        %v3222 = vpop.f32.mrb[0].mxu0
        %3223 = vmatprep.mubr.f32.mxu0 0.0
        %3224 = vmatmul.mubr.f32.gmra.mrb[0].mxu0 %v3017
        %v3225 = vpop.f32.mrb[0].mxu0
        %v3226 = vadd.f32 %v3121, %v3225
        %v3227 = vpop.f32.mrb[0].mxu0
        %3228 = vdwg.mxu0
        %v3229 = vmax.f32 %v3191, 0.0
        %v3230 = vmax.f32 %v3196, 0.0
        %v3231 = vmax.f32 %v3201, 0.0
        %v3232 = vmax.f32 %v3206, 0.0
        %v3233 = vmax.f32 %v3211, 0.0
        %v3234 = vmax.f32 %v3216, 0.0
        %v3235 = vmax.f32 %v3221, 0.0
        %v3236 = vmax.f32 %v3226, 0.0
        %v3237 = vld [vmem:[%s9] sm:$0xff]
        %v3238 = vld [vmem:[%s9 + $0x8] sm:$0xff]
        %v3239 = vld [vmem:[%s9 + $0x10] sm:$0xff]
        %v3240 = vld [vmem:[%s9 + $0x18] sm:$0xff]
        %v3241 = vld [vmem:[%s9 + $0x20] sm:$0xff]
        %v3242 = vld [vmem:[%s9 + $0x28] sm:$0xff]
        %v3243 = vld [vmem:[%s9 + $0x30] sm:$0xff]
        %v3244 = vld [vmem:[%s9 + $0x38] sm:$0xff]
        %v3245 = vld [vmem:[%s9 + $0x40] sm:$0xff]
        %v3246 = vld [vmem:[%s9 + $0x48] sm:$0xff]
        %v3247 = vld [vmem:[%s9 + $0x50] sm:$0xff]
        %v3248 = vld [vmem:[%s9 + $0x58] sm:$0xff]
        %v3249 = vld [vmem:[%s9 + $0x60] sm:$0xff]
        %v3250 = vld [vmem:[%s9 + $0x68] sm:$0xff]
        %v3251 = vld [vmem:[%s9 + $0x70] sm:$0xff]
        %v3252 = vld [vmem:[%s9 + $0x78] sm:$0xff]
        %3253 = vmatprep.subr.mxu0 0.0
        %3254 = vmatpush1.msra.mxu0 %v3237
        %3255 = vmatprep.subr.mxu0 0.0
        %3256 = vmatpush1.msra.mxu0 %v3238
        %3257 = vmatprep.subr.mxu0 0.0
        %3258 = vmatpush1.msra.mxu0 %v3239
        %3259 = vmatprep.subr.mxu0 0.0
        %3260 = vmatpush1.msra.mxu0 %v3240
        %3261 = vmatprep.subr.mxu0 0.0
        %3262 = vmatpush1.msra.mxu0 %v3241
        %3263 = vmatprep.subr.mxu0 0.0
        %3264 = vmatpush1.msra.mxu0 %v3242
        %3265 = vmatprep.subr.mxu0 0.0
        %3266 = vmatpush1.msra.mxu0 %v3243
        %3267 = vmatprep.subr.mxu0 0.0
        %3268 = vmatpush1.msra.mxu0 %v3244
        %3269 = vmatprep.subr.mxu0 0.0
        %3270 = vmatpush1.msra.mxu0 %v3245
        %3271 = vmatprep.subr.mxu0 0.0
        %3272 = vmatpush1.msra.mxu0 %v3246
        %3273 = vmatprep.subr.mxu0 0.0
        %3274 = vmatpush1.msra.mxu0 %v3247
        %3275 = vmatprep.subr.mxu0 0.0
        %3276 = vmatpush1.msra.mxu0 %v3248
        %3277 = vmatprep.subr.mxu0 0.0
        %3278 = vmatpush1.msra.mxu0 %v3249
        %3279 = vmatprep.subr.mxu0 0.0
        %3280 = vmatpush1.msra.mxu0 %v3250
        %3281 = vmatprep.subr.mxu0 0.0
        %3282 = vmatpush1.msra.mxu0 %v3251
        %3283 = vmatprep.subr.mxu0 0.0
        %3284 = vmatpush1.msra.mxu0 %v3252
        %3285 = vmatprep.subr.mxu0 0.0
        %3286 = vmatpush1.msra.mxu0 0.0
        %3287 = vmatprep.subr.mxu0 0.0
        %3288 = vmatpush1.msra.mxu0 0.0
        %3289 = vmatprep.subr.mxu0 0.0
        %3290 = vmatpush1.msra.mxu0 0.0
        %3291 = vmatprep.subr.mxu0 0.0
        %3292 = vmatpush1.msra.mxu0 0.0
        %3293 = vmatprep.subr.mxu0 0.0
        %3294 = vmatpush1.msra.mxu0 0.0
        %3295 = vmatprep.subr.mxu0 0.0
        %3296 = vmatpush1.msra.mxu0 0.0
        %3297 = vmatprep.subr.mxu0 0.0
        %3298 = vmatpush1.msra.mxu0 0.0
        %3299 = vmatprep.subr.mxu0 0.0
        %3300 = vmatpush1.msra.mxu0 0.0
        %3301 = vmatprep.subr.mxu0 0.0
        %3302 = vmatpush1.msra.mxu0 0.0
        %3303 = vmatprep.subr.mxu0 0.0
        %3304 = vmatpush1.msra.mxu0 0.0
        %3305 = vmatprep.subr.mxu0 0.0
        %3306 = vmatpush1.msra.mxu0 0.0
        %3307 = vmatprep.subr.mxu0 0.0
        %3308 = vmatpush1.msra.mxu0 0.0
        %3309 = vmatprep.subr.mxu0 0.0
        %3310 = vmatpush1.msra.mxu0 0.0
        %3311 = vmatprep.subr.mxu0 0.0
        %3312 = vmatpush1.msra.mxu0 0.0
        %3313 = vmatprep.subr.mxu0 0.0
        %3314 = vmatpush1.msra.mxu0 0.0
        %3315 = vmatprep.subr.mxu0 0.0
        %3316 = vmatpush1.msra.mxu0 0.0
        %3317 = vmatprep.mubr.f32.mxu0 0.0
        %3318 = vmatmul.mubr.f32.gmra.mrb[0].mxu0 %v3229
        %v3319 = vpop.f32.mrb[0].mxu0
        %v3320 = vadd.f32 0.0, %v3319
        %v3321 = vpop.f32.mrb[0].mxu0
        %3322 = vmatprep.mubr.f32.mxu0 0.0
        %3323 = vmatmul.mubr.f32.gmra.mrb[0].mxu0 %v3230
        %v3324 = vpop.f32.mrb[0].mxu0
        %v3325 = vadd.f32 0.0, %v3324
        %v3326 = vpop.f32.mrb[0].mxu0
        %3327 = vmatprep.mubr.f32.mxu0 0.0
        %3328 = vmatmul.mubr.f32.gmra.mrb[0].mxu0 %v3231
        %v3329 = vpop.f32.mrb[0].mxu0
        %v3330 = vadd.f32 0.0, %v3329
        %v3331 = vpop.f32.mrb[0].mxu0
        %3332 = vmatprep.mubr.f32.mxu0 0.0
        %3333 = vmatmul.mubr.f32.gmra.mrb[0].mxu0 %v3232
        %v3334 = vpop.f32.mrb[0].mxu0
        %v3335 = vadd.f32 0.0, %v3334
        %v3336 = vpop.f32.mrb[0].mxu0
        %3337 = vmatprep.mubr.f32.mxu0 0.0
        %3338 = vmatmul.mubr.f32.gmra.mrb[0].mxu0 %v3233
        %v3339 = vpop.f32.mrb[0].mxu0
        %v3340 = vadd.f32 0.0, %v3339
        %v3341 = vpop.f32.mrb[0].mxu0
        %3342 = vmatprep.mubr.f32.mxu0 0.0
        %3343 = vmatmul.mubr.f32.gmra.mrb[0].mxu0 %v3234
        %v3344 = vpop.f32.mrb[0].mxu0
        %v3345 = vadd.f32 0.0, %v3344
        %v3346 = vpop.f32.mrb[0].mxu0
        %3347 = vmatprep.mubr.f32.mxu0 0.0
        %3348 = vmatmul.mubr.f32.gmra.mrb[0].mxu0 %v3235
        %v3349 = vpop.f32.mrb[0].mxu0
        %v3350 = vadd.f32 0.0, %v3349
        %v3351 = vpop.f32.mrb[0].mxu0
        %3352 = vmatprep.mubr.f32.mxu0 0.0
        %3353 = vmatmul.mubr.f32.gmra.mrb[0].mxu0 %v3236
        %v3354 = vpop.f32.mrb[0].mxu0
        %v3355 = vadd.f32 0.0, %v3354
        %v3356 = vpop.f32.mrb[0].mxu0
        %3357 = vdwg.mxu0
        %v3358 = vld [vmem:[%s10] sm:$0xff]
        %v3359 = vld [vmem:[%s10 + $0x8] sm:$0xff]
        %v3360 = vld [vmem:[%s10 + $0x10] sm:$0xff]
        %v3361 = vld [vmem:[%s10 + $0x18] sm:$0xff]
        %v3362 = vld [vmem:[%s10 + $0x20] sm:$0xff]
        %v3363 = vld [vmem:[%s10 + $0x28] sm:$0xff]
        %v3364 = vld [vmem:[%s10 + $0x30] sm:$0xff]
        %v3365 = vld [vmem:[%s10 + $0x38] sm:$0xff]
        %v3366 = vld [vmem:[%s10 + $0x40] sm:$0xff]
        %v3367 = vld [vmem:[%s10 + $0x48] sm:$0xff]
        %v3368 = vld [vmem:[%s10 + $0x50] sm:$0xff]
        %v3369 = vld [vmem:[%s10 + $0x58] sm:$0xff]
        %v3370 = vld [vmem:[%s10 + $0x60] sm:$0xff]
        %v3371 = vld [vmem:[%s10 + $0x68] sm:$0xff]
        %v3372 = vld [vmem:[%s10 + $0x70] sm:$0xff]
        %v3373 = vld [vmem:[%s10 + $0x78] sm:$0xff]
        %3374 = vmatprep.subr.mxu0 0.0
        %3375 = vmatpush1.msra.mxu0 %v3358
        %3376 = vmatprep.subr.mxu0 0.0
        %3377 = vmatpush1.msra.mxu0 %v3359
        %3378 = vmatprep.subr.mxu0 0.0
        %3379 = vmatpush1.msra.mxu0 %v3360
        %3380 = vmatprep.subr.mxu0 0.0
        %3381 = vmatpush1.msra.mxu0 %v3361
        %3382 = vmatprep.subr.mxu0 0.0
        %3383 = vmatpush1.msra.mxu0 %v3362
        %3384 = vmatprep.subr.mxu0 0.0
        %3385 = vmatpush1.msra.mxu0 %v3363
        %3386 = vmatprep.subr.mxu0 0.0
        %3387 = vmatpush1.msra.mxu0 %v3364
        %3388 = vmatprep.subr.mxu0 0.0
        %3389 = vmatpush1.msra.mxu0 %v3365
        %3390 = vmatprep.subr.mxu0 0.0
        %3391 = vmatpush1.msra.mxu0 %v3366
        %3392 = vmatprep.subr.mxu0 0.0
        %3393 = vmatpush1.msra.mxu0 %v3367
        %3394 = vmatprep.subr.mxu0 0.0
        %3395 = vmatpush1.msra.mxu0 %v3368
        %3396 = vmatprep.subr.mxu0 0.0
        %3397 = vmatpush1.msra.mxu0 %v3369
        %3398 = vmatprep.subr.mxu0 0.0
        %3399 = vmatpush1.msra.mxu0 %v3370
        %3400 = vmatprep.subr.mxu0 0.0
        %3401 = vmatpush1.msra.mxu0 %v3371
        %3402 = vmatprep.subr.mxu0 0.0
        %3403 = vmatpush1.msra.mxu0 %v3372
        %3404 = vmatprep.subr.mxu0 0.0
        %3405 = vmatpush1.msra.mxu0 %v3373
        %3406 = vmatprep.subr.mxu0 0.0
        %3407 = vmatpush1.msra.mxu0 0.0
        %3408 = vmatprep.subr.mxu0 0.0
        %3409 = vmatpush1.msra.mxu0 0.0
        %3410 = vmatprep.subr.mxu0 0.0
        %3411 = vmatpush1.msra.mxu0 0.0
        %3412 = vmatprep.subr.mxu0 0.0
        %3413 = vmatpush1.msra.mxu0 0.0
        %3414 = vmatprep.subr.mxu0 0.0
        %3415 = vmatpush1.msra.mxu0 0.0
        %3416 = vmatprep.subr.mxu0 0.0
        %3417 = vmatpush1.msra.mxu0 0.0
        %3418 = vmatprep.subr.mxu0 0.0
        %3419 = vmatpush1.msra.mxu0 0.0
        %3420 = vmatprep.subr.mxu0 0.0
        %3421 = vmatpush1.msra.mxu0 0.0
        %3422 = vmatprep.subr.mxu0 0.0
        %3423 = vmatpush1.msra.mxu0 0.0
        %3424 = vmatprep.subr.mxu0 0.0
        %3425 = vmatpush1.msra.mxu0 0.0
        %3426 = vmatprep.subr.mxu0 0.0
        %3427 = vmatpush1.msra.mxu0 0.0
        %3428 = vmatprep.subr.mxu0 0.0
        %3429 = vmatpush1.msra.mxu0 0.0
        %3430 = vmatprep.subr.mxu0 0.0
        %3431 = vmatpush1.msra.mxu0 0.0
        %3432 = vmatprep.subr.mxu0 0.0
        %3433 = vmatpush1.msra.mxu0 0.0
        %3434 = vmatprep.subr.mxu0 0.0
        %3435 = vmatpush1.msra.mxu0 0.0
        %3436 = vmatprep.subr.mxu0 0.0
        %3437 = vmatpush1.msra.mxu0 0.0
        %3438 = vmatprep.mubr.f32.mxu0 0.0
        %3439 = vmatmul.mubr.f32.gmra.mrb[0].mxu0 %v3229
        %v3440 = vpop.f32.mrb[0].mxu0
        %v3441 = vadd.f32 0.0, %v3440
        %v3442 = vpop.f32.mrb[0].mxu0
        %3443 = vmatprep.mubr.f32.mxu0 0.0
        %3444 = vmatmul.mubr.f32.gmra.mrb[0].mxu0 %v3230
        %v3445 = vpop.f32.mrb[0].mxu0
        %v3446 = vadd.f32 0.0, %v3445
        %v3447 = vpop.f32.mrb[0].mxu0
        %3448 = vmatprep.mubr.f32.mxu0 0.0
        %3449 = vmatmul.mubr.f32.gmra.mrb[0].mxu0 %v3231
        %v3450 = vpop.f32.mrb[0].mxu0
        %v3451 = vadd.f32 0.0, %v3450
        %v3452 = vpop.f32.mrb[0].mxu0
        %3453 = vmatprep.mubr.f32.mxu0 0.0
        %3454 = vmatmul.mubr.f32.gmra.mrb[0].mxu0 %v3232
        %v3455 = vpop.f32.mrb[0].mxu0
        %v3456 = vadd.f32 0.0, %v3455
        %v3457 = vpop.f32.mrb[0].mxu0
        %3458 = vmatprep.mubr.f32.mxu0 0.0
        %3459 = vmatmul.mubr.f32.gmra.mrb[0].mxu0 %v3233
        %v3460 = vpop.f32.mrb[0].mxu0
        %v3461 = vadd.f32 0.0, %v3460
        %v3462 = vpop.f32.mrb[0].mxu0
        %3463 = vmatprep.mubr.f32.mxu0 0.0
        %3464 = vmatmul.mubr.f32.gmra.mrb[0].mxu0 %v3234
        %v3465 = vpop.f32.mrb[0].mxu0
        %v3466 = vadd.f32 0.0, %v3465
        %v3467 = vpop.f32.mrb[0].mxu0
        %3468 = vmatprep.mubr.f32.mxu0 0.0
        %3469 = vmatmul.mubr.f32.gmra.mrb[0].mxu0 %v3235
        %v3470 = vpop.f32.mrb[0].mxu0
        %v3471 = vadd.f32 0.0, %v3470
        %v3472 = vpop.f32.mrb[0].mxu0
        %3473 = vmatprep.mubr.f32.mxu0 0.0
        %3474 = vmatmul.mubr.f32.gmra.mrb[0].mxu0 %v3236
        %v3475 = vpop.f32.mrb[0].mxu0
        %v3476 = vadd.f32 0.0, %v3475
        %v3477 = vpop.f32.mrb[0].mxu0
        %3478 = vdwg.mxu0
        %v3479 = vmax.f32 %v3320, %v3441
        %v3480 = vmax.f32 %v3325, %v3446
        %v3481 = vmax.f32 %v3330, %v3451
        %v3482 = vmax.f32 %v3335, %v3456
        %v3483 = vmax.f32 %v3340, %v3461
        %v3484 = vmax.f32 %v3345, %v3466
        %v3485 = vmax.f32 %v3350, %v3471
        %v3486 = vmax.f32 %v3355, %v3476
        %v3487 = vld [vmem:[%s11] sm:$0xff]
        %v3488 = vld [vmem:[%s11 + $0x8] sm:$0xff]
        %v3489 = vld [vmem:[%s11 + $0x10] sm:$0xff]
        %v3490 = vld [vmem:[%s11 + $0x18] sm:$0xff]
        %v3492 = vsel %vm2278, %v3487, 0
        %v3495 = vsel %vm2278, %v3488, 0
        %v3498 = vsel %vm2278, %v3489, 0
        %v3501 = vsel %vm2278, %v3490, 0
        %3503 = vmatprep.subr.mxu0 0.0
        %3504 = vmatpush1.msra.mxu0 %v3479
        %3505 = vmatprep.subr.mxu0 0.0
        %3506 = vmatpush1.msra.mxu0 %v3480
        %3507 = vmatprep.subr.mxu0 0.0
        %3508 = vmatpush1.msra.mxu0 %v3481
        %3509 = vmatprep.subr.mxu0 0.0
        %3510 = vmatpush1.msra.mxu0 %v3482
        %3511 = vmatprep.subr.mxu0 0.0
        %3512 = vmatpush1.msra.mxu0 %v3483
        %3513 = vmatprep.subr.mxu0 0.0
        %3514 = vmatpush1.msra.mxu0 %v3484
        %3515 = vmatprep.subr.mxu0 0.0
        %3516 = vmatpush1.msra.mxu0 %v3485
        %3517 = vmatprep.subr.mxu0 0.0
        %3518 = vmatpush1.msra.mxu0 %v3486
        %3519 = vmatprep.subr.mxu0 0.0
        %3520 = vmatpush1.msra.mxu0 0.0
        %3521 = vmatprep.subr.mxu0 0.0
        %3522 = vmatpush1.msra.mxu0 0.0
        %3523 = vmatprep.subr.mxu0 0.0
        %3524 = vmatpush1.msra.mxu0 0.0
        %3525 = vmatprep.subr.mxu0 0.0
        %3526 = vmatpush1.msra.mxu0 0.0
        %3527 = vmatprep.subr.mxu0 0.0
        %3528 = vmatpush1.msra.mxu0 0.0
        %3529 = vmatprep.subr.mxu0 0.0
        %3530 = vmatpush1.msra.mxu0 0.0
        %3531 = vmatprep.subr.mxu0 0.0
        %3532 = vmatpush1.msra.mxu0 0.0
        %3533 = vmatprep.subr.mxu0 0.0
        %3534 = vmatpush1.msra.mxu0 0.0
        %3535 = vmatprep.subr.mxu0 0.0
        %3536 = vmatpush1.msra.mxu0 0.0
        %3537 = vmatprep.subr.mxu0 0.0
        %3538 = vmatpush1.msra.mxu0 0.0
        %3539 = vmatprep.subr.mxu0 0.0
        %3540 = vmatpush1.msra.mxu0 0.0
        %3541 = vmatprep.subr.mxu0 0.0
        %3542 = vmatpush1.msra.mxu0 0.0
        %3543 = vmatprep.subr.mxu0 0.0
        %3544 = vmatpush1.msra.mxu0 0.0
        %3545 = vmatprep.subr.mxu0 0.0
        %3546 = vmatpush1.msra.mxu0 0.0
        %3547 = vmatprep.subr.mxu0 0.0
        %3548 = vmatpush1.msra.mxu0 0.0
        %3549 = vmatprep.subr.mxu0 0.0
        %3550 = vmatpush1.msra.mxu0 0.0
        %3551 = vmatprep.subr.mxu0 0.0
        %3552 = vmatpush1.msra.mxu0 0.0
        %3553 = vmatprep.subr.mxu0 0.0
        %3554 = vmatpush1.msra.mxu0 0.0
        %3555 = vmatprep.subr.mxu0 0.0
        %3556 = vmatpush1.msra.mxu0 0.0
        %3557 = vmatprep.subr.mxu0 0.0
        %3558 = vmatpush1.msra.mxu0 0.0
        %3559 = vmatprep.subr.mxu0 0.0
        %3560 = vmatpush1.msra.mxu0 0.0
        %3561 = vmatprep.subr.mxu0 0.0
        %3562 = vmatpush1.msra.mxu0 0.0
        %3563 = vmatprep.subr.mxu0 0.0
        %3564 = vmatpush1.msra.mxu0 0.0
        %3565 = vmatprep.subr.mxu0 0.0
        %3566 = vmatpush1.msra.mxu0 0.0
        %3567 = vmatprep.mubr.f32.mxu0 0.0
        %3568 = vmatmul.mubr.f32.gmra.mrb[0].mxu0 %v3492
        %v3569 = vpop.f32.mrb[0].mxu0
        %v3570 = vadd.f32 0.0, %v3569
        %v3571 = vpop.f32.mrb[0].mxu0
        %3572 = vmatprep.mubr.f32.mxu0 0.0
        %3573 = vmatmul.mubr.f32.gmra.mrb[0].mxu0 %v3495
        %v3574 = vpop.f32.mrb[0].mxu0
        %v3575 = vadd.f32 0.0, %v3574
        %v3576 = vpop.f32.mrb[0].mxu0
        %3577 = vmatprep.mubr.f32.mxu0 0.0
        %3578 = vmatmul.mubr.f32.gmra.mrb[0].mxu0 %v3498
        %v3579 = vpop.f32.mrb[0].mxu0
        %v3580 = vadd.f32 0.0, %v3579
        %v3581 = vpop.f32.mrb[0].mxu0
        %3582 = vmatprep.mubr.f32.mxu0 0.0
        %3583 = vmatmul.mubr.f32.gmra.mrb[0].mxu0 %v3501
        %v3584 = vpop.f32.mrb[0].mxu0
        %v3585 = vadd.f32 0.0, %v3584
        %v3586 = vpop.f32.mrb[0].mxu0
        %3587 = vdwg.mxu0
        %v3588 = vld [vmem:[%s12] sm:$0xff]
        %v3589 = vld [vmem:[%s12 + $0x8] sm:$0xff]
        %v3590 = vld [vmem:[%s12 + $0x10] sm:$0xff]
        %v3591 = vld [vmem:[%s12 + $0x18] sm:$0xff]
        %v3593 = vsel %vm2278, %v3588, 0
        %v3596 = vsel %vm2278, %v3589, 0
        %v3599 = vsel %vm2278, %v3590, 0
        %v3602 = vsel %vm2278, %v3591, 0
        %3604 = vmatprep.subr.mxu0 0.0
        %3605 = vmatpush1.msra.mxu0 %v3479
        %3606 = vmatprep.subr.mxu0 0.0
        %3607 = vmatpush1.msra.mxu0 %v3480
        %3608 = vmatprep.subr.mxu0 0.0
        %3609 = vmatpush1.msra.mxu0 %v3481
        %3610 = vmatprep.subr.mxu0 0.0
        %3611 = vmatpush1.msra.mxu0 %v3482
        %3612 = vmatprep.subr.mxu0 0.0
        %3613 = vmatpush1.msra.mxu0 %v3483
        %3614 = vmatprep.subr.mxu0 0.0
        %3615 = vmatpush1.msra.mxu0 %v3484
        %3616 = vmatprep.subr.mxu0 0.0
        %3617 = vmatpush1.msra.mxu0 %v3485
        %3618 = vmatprep.subr.mxu0 0.0
        %3619 = vmatpush1.msra.mxu0 %v3486
        %3620 = vmatprep.subr.mxu0 0.0
        %3621 = vmatpush1.msra.mxu0 0.0
        %3622 = vmatprep.subr.mxu0 0.0
        %3623 = vmatpush1.msra.mxu0 0.0
        %3624 = vmatprep.subr.mxu0 0.0
        %3625 = vmatpush1.msra.mxu0 0.0
        %3626 = vmatprep.subr.mxu0 0.0
        %3627 = vmatpush1.msra.mxu0 0.0
        %3628 = vmatprep.subr.mxu0 0.0
        %3629 = vmatpush1.msra.mxu0 0.0
        %3630 = vmatprep.subr.mxu0 0.0
        %3631 = vmatpush1.msra.mxu0 0.0
        %3632 = vmatprep.subr.mxu0 0.0
        %3633 = vmatpush1.msra.mxu0 0.0
        %3634 = vmatprep.subr.mxu0 0.0
        %3635 = vmatpush1.msra.mxu0 0.0
        %3636 = vmatprep.subr.mxu0 0.0
        %3637 = vmatpush1.msra.mxu0 0.0
        %3638 = vmatprep.subr.mxu0 0.0
        %3639 = vmatpush1.msra.mxu0 0.0
        %3640 = vmatprep.subr.mxu0 0.0
        %3641 = vmatpush1.msra.mxu0 0.0
        %3642 = vmatprep.subr.mxu0 0.0
        %3643 = vmatpush1.msra.mxu0 0.0
        %3644 = vmatprep.subr.mxu0 0.0
        %3645 = vmatpush1.msra.mxu0 0.0
        %3646 = vmatprep.subr.mxu0 0.0
        %3647 = vmatpush1.msra.mxu0 0.0
        %3648 = vmatprep.subr.mxu0 0.0
        %3649 = vmatpush1.msra.mxu0 0.0
        %3650 = vmatprep.subr.mxu0 0.0
        %3651 = vmatpush1.msra.mxu0 0.0
        %3652 = vmatprep.subr.mxu0 0.0
        %3653 = vmatpush1.msra.mxu0 0.0
        %3654 = vmatprep.subr.mxu0 0.0
        %3655 = vmatpush1.msra.mxu0 0.0
        %3656 = vmatprep.subr.mxu0 0.0
        %3657 = vmatpush1.msra.mxu0 0.0
        %3658 = vmatprep.subr.mxu0 0.0
        %3659 = vmatpush1.msra.mxu0 0.0
        %3660 = vmatprep.subr.mxu0 0.0
        %3661 = vmatpush1.msra.mxu0 0.0
        %3662 = vmatprep.subr.mxu0 0.0
        %3663 = vmatpush1.msra.mxu0 0.0
        %3664 = vmatprep.subr.mxu0 0.0
        %3665 = vmatpush1.msra.mxu0 0.0
        %3666 = vmatprep.subr.mxu0 0.0
        %3667 = vmatpush1.msra.mxu0 0.0
        %3668 = vmatprep.mubr.f32.mxu0 0.0
        %3669 = vmatmul.mubr.f32.gmra.mrb[0].mxu0 %v3593
        %v3670 = vpop.f32.mrb[0].mxu0
        %v3671 = vadd.f32 0.0, %v3670
        %v3672 = vpop.f32.mrb[0].mxu0
        %3673 = vmatprep.mubr.f32.mxu0 0.0
        %3674 = vmatmul.mubr.f32.gmra.mrb[0].mxu0 %v3596
        %v3675 = vpop.f32.mrb[0].mxu0
        %v3676 = vadd.f32 0.0, %v3675
        %v3677 = vpop.f32.mrb[0].mxu0
        %3678 = vmatprep.mubr.f32.mxu0 0.0
        %3679 = vmatmul.mubr.f32.gmra.mrb[0].mxu0 %v3599
        %v3680 = vpop.f32.mrb[0].mxu0
        %v3681 = vadd.f32 0.0, %v3680
        %v3682 = vpop.f32.mrb[0].mxu0
        %3683 = vmatprep.mubr.f32.mxu0 0.0
        %3684 = vmatmul.mubr.f32.gmra.mrb[0].mxu0 %v3602
        %v3685 = vpop.f32.mrb[0].mxu0
        %v3686 = vadd.f32 0.0, %v3685
        %v3687 = vpop.f32.mrb[0].mxu0
        %3688 = vdwg.mxu0
        %v3689 = vmax.f32 %v3570, %v3671
        %v3690 = vmax.f32 %v3575, %v3676
        %v3691 = vmax.f32 %v3580, %v3681
        %v3692 = vmax.f32 %v3585, %v3686
        %v3697 = vcombine.high %v3689, %v3689
        %v3698 = vcombine.high %v3690, %v3690
        %v3699 = vcombine.high %v3691, %v3691
        %v3700 = vcombine.high %v3692, %v3692
        %v3701 = vld [vmem:[%s14] sm:$0x1]
        %v3702 = vld [vmem:[%s13] sm:$0xff]
        %v3703 = vld [vmem:[%s13 + $0x8] sm:$0xff]
        %v3704 = vld [vmem:[%s13 + $0x10] sm:$0xff]
        %v3705 = vld [vmem:[%s13 + $0x18] sm:$0xff]
        %v3706 = vld [vmem:[%s13 + $0x20] sm:$0xff]
        %v3707 = vld [vmem:[%s13 + $0x28] sm:$0xff]
        %v3708 = vld [vmem:[%s13 + $0x30] sm:$0xff]
        %v3709 = vld [vmem:[%s13 + $0x38] sm:$0xff]
        %v3710 = vlaneseq
        %v3711 = vshrl.u32 %v3710, 7
        %v3712 = vsub.s32 0, %v3711
        %v3713 = vrot.slane %v3689, %v3712
        %v3714 = vlaneseq
        %v3715 = vshrl.u32 %v3714, 7
        %v3716 = vsub.s32 0, %v3715
        %v3717 = vrot.slane %v3697, %v3716
        %v3718 = vlaneseq
        %v3719 = vshrl.u32 %v3718, 7
        %v3720 = vsub.s32 0, %v3719
        %v3721 = vrot.slane %v3690, %v3720
        %v3722 = vlaneseq
        %v3723 = vshrl.u32 %v3722, 7
        %v3724 = vsub.s32 0, %v3723
        %v3725 = vrot.slane %v3698, %v3724
        %v3726 = vlaneseq
        %v3727 = vshrl.u32 %v3726, 7
        %v3728 = vsub.s32 0, %v3727
        %v3729 = vrot.slane %v3691, %v3728
        %v3730 = vlaneseq
        %v3731 = vshrl.u32 %v3730, 7
        %v3732 = vsub.s32 0, %v3731
        %v3733 = vrot.slane %v3699, %v3732
        %v3734 = vlaneseq
        %v3735 = vshrl.u32 %v3734, 7
        %v3736 = vsub.s32 0, %v3735
        %v3737 = vrot.slane %v3692, %v3736
        %v3738 = vlaneseq
        %v3739 = vshrl.u32 %v3738, 7
        %v3740 = vsub.s32 0, %v3739
        %v3741 = vrot.slane %v3700, %v3740
        %vm3742 = vcmask 1041409
        %v3743 = vsel %vm3742, %v3717, %v3713
        %vm3744 = vcmask 1042434
        %v3745 = vsel %vm3744, %v3721, %v3743
        %vm3746 = vcmask 1043459
        %v3747 = vsel %vm3746, %v3725, %v3745
        %vm3748 = vcmask 1044484
        %v3749 = vsel %vm3748, %v3729, %v3747
        %vm3750 = vcmask 1045509
        %v3751 = vsel %vm3750, %v3733, %v3749
        %vm3752 = vcmask 1046534
        %v3753 = vsel %vm3752, %v3737, %v3751
        %vm3754 = vcmask 1047559
        %v3755 = vsel %vm3754, %v3741, %v3753
        %v3756 = vsel %vm2278, %v3755, 0
        %3758 = vmatprep.subr.mxu0 0.0
        %3759 = vmatpush1.msra.mxu0 %v3702
        %3760 = vmatprep.subr.mxu0 0.0
        %3761 = vmatpush1.msra.mxu0 %v3703
        %3762 = vmatprep.subr.mxu0 0.0
        %3763 = vmatpush1.msra.mxu0 %v3704
        %3764 = vmatprep.subr.mxu0 0.0
        %3765 = vmatpush1.msra.mxu0 %v3705
        %3766 = vmatprep.subr.mxu0 0.0
        %3767 = vmatpush1.msra.mxu0 %v3706
        %3768 = vmatprep.subr.mxu0 0.0
        %3769 = vmatpush1.msra.mxu0 %v3707
        %3770 = vmatprep.subr.mxu0 0.0
        %3771 = vmatpush1.msra.mxu0 %v3708
        %3772 = vmatprep.subr.mxu0 0.0
        %3773 = vmatpush1.msra.mxu0 %v3709
        %3774 = vmatprep.subr.mxu0 0.0
        %3775 = vmatpush1.msra.mxu0 0.0
        %3776 = vmatprep.subr.mxu0 0.0
        %3777 = vmatpush1.msra.mxu0 0.0
        %3778 = vmatprep.subr.mxu0 0.0
        %3779 = vmatpush1.msra.mxu0 0.0
        %3780 = vmatprep.subr.mxu0 0.0
        %3781 = vmatpush1.msra.mxu0 0.0
        %3782 = vmatprep.subr.mxu0 0.0
        %3783 = vmatpush1.msra.mxu0 0.0
        %3784 = vmatprep.subr.mxu0 0.0
        %3785 = vmatpush1.msra.mxu0 0.0
        %3786 = vmatprep.subr.mxu0 0.0
        %3787 = vmatpush1.msra.mxu0 0.0
        %3788 = vmatprep.subr.mxu0 0.0
        %3789 = vmatpush1.msra.mxu0 0.0
        %3790 = vmatprep.subr.mxu0 0.0
        %3791 = vmatpush1.msra.mxu0 0.0
        %3792 = vmatprep.subr.mxu0 0.0
        %3793 = vmatpush1.msra.mxu0 0.0
        %3794 = vmatprep.subr.mxu0 0.0
        %3795 = vmatpush1.msra.mxu0 0.0
        %3796 = vmatprep.subr.mxu0 0.0
        %3797 = vmatpush1.msra.mxu0 0.0
        %3798 = vmatprep.subr.mxu0 0.0
        %3799 = vmatpush1.msra.mxu0 0.0
        %3800 = vmatprep.subr.mxu0 0.0
        %3801 = vmatpush1.msra.mxu0 0.0
        %3802 = vmatprep.subr.mxu0 0.0
        %3803 = vmatpush1.msra.mxu0 0.0
        %3804 = vmatprep.subr.mxu0 0.0
        %3805 = vmatpush1.msra.mxu0 0.0
        %3806 = vmatprep.subr.mxu0 0.0
        %3807 = vmatpush1.msra.mxu0 0.0
        %3808 = vmatprep.subr.mxu0 0.0
        %3809 = vmatpush1.msra.mxu0 0.0
        %3810 = vmatprep.subr.mxu0 0.0
        %3811 = vmatpush1.msra.mxu0 0.0
        %3812 = vmatprep.subr.mxu0 0.0
        %3813 = vmatpush1.msra.mxu0 0.0
        %3814 = vmatprep.subr.mxu0 0.0
        %3815 = vmatpush1.msra.mxu0 0.0
        %3816 = vmatprep.subr.mxu0 0.0
        %3817 = vmatpush1.msra.mxu0 0.0
        %3818 = vmatprep.subr.mxu0 0.0
        %3819 = vmatpush1.msra.mxu0 0.0
        %3820 = vmatprep.subr.mxu0 0.0
        %3821 = vmatpush1.msra.mxu0 0.0
        %3822 = vmatprep.mubr.f32.mxu0 0.0
        %3823 = vmatmul.mubr.f32.gmra.mrb[0].mxu0 %v3756
        %v3824 = vpop.f32.mrb[0].mxu0
        %v3825 = vadd.f32 0.0, %v3824
        %v3826 = vpop.f32.mrb[0].mxu0
        %3827 = vdwg.mxu0
        %v3829 = vlaneseq
        %v3830 = vshrl.u32 %v3829, 7
        %v3831 = vsub.s32 0, %v3830
        %v3832 = vrot.slane %v3701, %v3831
        %v3834 = vadd.f32 %v3832, %v3825
        %s3835 = scalar_lea.vmem %s13, 64
        %v3836 = vld [vmem:[%s3835] sm:$0xff]
        %v3837 = vld [vmem:[%s3835 + $0x8] sm:$0xff]
        %v3838 = vld [vmem:[%s3835 + $0x10] sm:$0xff]
        %v3839 = vld [vmem:[%s3835 + $0x18] sm:$0xff]
        %v3840 = vld [vmem:[%s3835 + $0x20] sm:$0xff]
        %v3841 = vld [vmem:[%s3835 + $0x28] sm:$0xff]
        %v3842 = vld [vmem:[%s3835 + $0x30] sm:$0xff]
        %v3843 = vld [vmem:[%s3835 + $0x38] sm:$0xff]
        %v3844 = vlaneseq
        %v3845 = vshrl.u32 %v3844, 7
        %v3846 = vsub.s32 1, %v3845
        %v3847 = vrot.slane %v3689, %v3846
        %v3848 = vlaneseq
        %v3849 = vshrl.u32 %v3848, 7
        %v3850 = vsub.s32 1, %v3849
        %v3851 = vrot.slane %v3697, %v3850
        %v3852 = vlaneseq
        %v3853 = vshrl.u32 %v3852, 7
        %v3854 = vsub.s32 1, %v3853
        %v3855 = vrot.slane %v3690, %v3854
        %v3856 = vlaneseq
        %v3857 = vshrl.u32 %v3856, 7
        %v3858 = vsub.s32 1, %v3857
        %v3859 = vrot.slane %v3698, %v3858
        %v3860 = vlaneseq
        %v3861 = vshrl.u32 %v3860, 7
        %v3862 = vsub.s32 1, %v3861
        %v3863 = vrot.slane %v3691, %v3862
        %v3864 = vlaneseq
        %v3865 = vshrl.u32 %v3864, 7
        %v3866 = vsub.s32 1, %v3865
        %v3867 = vrot.slane %v3699, %v3866
        %v3868 = vlaneseq
        %v3869 = vshrl.u32 %v3868, 7
        %v3870 = vsub.s32 1, %v3869
        %v3871 = vrot.slane %v3692, %v3870
        %v3872 = vlaneseq
        %v3873 = vshrl.u32 %v3872, 7
        %v3874 = vsub.s32 1, %v3873
        %v3875 = vrot.slane %v3700, %v3874
        %v3876 = vsel %vm3742, %v3851, %v3847
        %v3877 = vsel %vm3744, %v3855, %v3876
        %v3878 = vsel %vm3746, %v3859, %v3877
        %v3879 = vsel %vm3748, %v3863, %v3878
        %v3880 = vsel %vm3750, %v3867, %v3879
        %v3881 = vsel %vm3752, %v3871, %v3880
        %v3882 = vsel %vm3754, %v3875, %v3881
        %v3883 = vsel %vm2278, %v3882, 0
        %3885 = vmatprep.subr.mxu0 0.0
        %3886 = vmatpush1.msra.mxu0 %v3836
        %3887 = vmatprep.subr.mxu0 0.0
        %3888 = vmatpush1.msra.mxu0 %v3837
        %3889 = vmatprep.subr.mxu0 0.0
        %3890 = vmatpush1.msra.mxu0 %v3838
        %3891 = vmatprep.subr.mxu0 0.0
        %3892 = vmatpush1.msra.mxu0 %v3839
        %3893 = vmatprep.subr.mxu0 0.0
        %3894 = vmatpush1.msra.mxu0 %v3840
        %3895 = vmatprep.subr.mxu0 0.0
        %3896 = vmatpush1.msra.mxu0 %v3841
        %3897 = vmatprep.subr.mxu0 0.0
        %3898 = vmatpush1.msra.mxu0 %v3842
        %3899 = vmatprep.subr.mxu0 0.0
        %3900 = vmatpush1.msra.mxu0 %v3843
        %3901 = vmatprep.subr.mxu0 0.0
        %3902 = vmatpush1.msra.mxu0 0.0
        %3903 = vmatprep.subr.mxu0 0.0
        %3904 = vmatpush1.msra.mxu0 0.0
        %3905 = vmatprep.subr.mxu0 0.0
        %3906 = vmatpush1.msra.mxu0 0.0
        %3907 = vmatprep.subr.mxu0 0.0
        %3908 = vmatpush1.msra.mxu0 0.0
        %3909 = vmatprep.subr.mxu0 0.0
        %3910 = vmatpush1.msra.mxu0 0.0
        %3911 = vmatprep.subr.mxu0 0.0
        %3912 = vmatpush1.msra.mxu0 0.0
        %3913 = vmatprep.subr.mxu0 0.0
        %3914 = vmatpush1.msra.mxu0 0.0
        %3915 = vmatprep.subr.mxu0 0.0
        %3916 = vmatpush1.msra.mxu0 0.0
        %3917 = vmatprep.subr.mxu0 0.0
        %3918 = vmatpush1.msra.mxu0 0.0
        %3919 = vmatprep.subr.mxu0 0.0
        %3920 = vmatpush1.msra.mxu0 0.0
        %3921 = vmatprep.subr.mxu0 0.0
        %3922 = vmatpush1.msra.mxu0 0.0
        %3923 = vmatprep.subr.mxu0 0.0
        %3924 = vmatpush1.msra.mxu0 0.0
        %3925 = vmatprep.subr.mxu0 0.0
        %3926 = vmatpush1.msra.mxu0 0.0
        %3927 = vmatprep.subr.mxu0 0.0
        %3928 = vmatpush1.msra.mxu0 0.0
        %3929 = vmatprep.subr.mxu0 0.0
        %3930 = vmatpush1.msra.mxu0 0.0
        %3931 = vmatprep.subr.mxu0 0.0
        %3932 = vmatpush1.msra.mxu0 0.0
        %3933 = vmatprep.subr.mxu0 0.0
        %3934 = vmatpush1.msra.mxu0 0.0
        %3935 = vmatprep.subr.mxu0 0.0
        %3936 = vmatpush1.msra.mxu0 0.0
        %3937 = vmatprep.subr.mxu0 0.0
        %3938 = vmatpush1.msra.mxu0 0.0
        %3939 = vmatprep.subr.mxu0 0.0
        %3940 = vmatpush1.msra.mxu0 0.0
        %3941 = vmatprep.subr.mxu0 0.0
        %3942 = vmatpush1.msra.mxu0 0.0
        %3943 = vmatprep.subr.mxu0 0.0
        %3944 = vmatpush1.msra.mxu0 0.0
        %3945 = vmatprep.subr.mxu0 0.0
        %3946 = vmatpush1.msra.mxu0 0.0
        %3947 = vmatprep.subr.mxu0 0.0
        %3948 = vmatpush1.msra.mxu0 0.0
        %3949 = vmatprep.mubr.f32.mxu0 0.0
        %3950 = vmatmul.mubr.f32.gmra.mrb[0].mxu0 %v3883
        %v3951 = vpop.f32.mrb[0].mxu0
        %v3952 = vadd.f32 0.0, %v3951
        %v3953 = vpop.f32.mrb[0].mxu0
        %3954 = vdwg.mxu0
        %v3955 = vadd.f32 %v3834, %v3952
        %s3956 = scalar_lea.vmem %s13, 128
        %v3957 = vld [vmem:[%s3956] sm:$0xff]
        %v3958 = vld [vmem:[%s3956 + $0x8] sm:$0xff]
        %v3959 = vld [vmem:[%s3956 + $0x10] sm:$0xff]
        %v3960 = vld [vmem:[%s3956 + $0x18] sm:$0xff]
        %v3961 = vld [vmem:[%s3956 + $0x20] sm:$0xff]
        %v3962 = vld [vmem:[%s3956 + $0x28] sm:$0xff]
        %v3963 = vld [vmem:[%s3956 + $0x30] sm:$0xff]
        %v3964 = vld [vmem:[%s3956 + $0x38] sm:$0xff]
        %v3965 = vlaneseq
        %v3966 = vshrl.u32 %v3965, 7
        %v3967 = vsub.s32 2, %v3966
        %v3968 = vrot.slane %v3689, %v3967
        %v3969 = vlaneseq
        %v3970 = vshrl.u32 %v3969, 7
        %v3971 = vsub.s32 2, %v3970
        %v3972 = vrot.slane %v3697, %v3971
        %v3973 = vlaneseq
        %v3974 = vshrl.u32 %v3973, 7
        %v3975 = vsub.s32 2, %v3974
        %v3976 = vrot.slane %v3690, %v3975
        %v3977 = vlaneseq
        %v3978 = vshrl.u32 %v3977, 7
        %v3979 = vsub.s32 2, %v3978
        %v3980 = vrot.slane %v3698, %v3979
        %v3981 = vlaneseq
        %v3982 = vshrl.u32 %v3981, 7
        %v3983 = vsub.s32 2, %v3982
        %v3984 = vrot.slane %v3691, %v3983
        %v3985 = vlaneseq
        %v3986 = vshrl.u32 %v3985, 7
        %v3987 = vsub.s32 2, %v3986
        %v3988 = vrot.slane %v3699, %v3987
        %v3989 = vlaneseq
        %v3990 = vshrl.u32 %v3989, 7
        %v3991 = vsub.s32 2, %v3990
        %v3992 = vrot.slane %v3692, %v3991
        %v3993 = vlaneseq
        %v3994 = vshrl.u32 %v3993, 7
        %v3995 = vsub.s32 2, %v3994
        %v3996 = vrot.slane %v3700, %v3995
        %v3997 = vsel %vm3742, %v3972, %v3968
        %v3998 = vsel %vm3744, %v3976, %v3997
        %v3999 = vsel %vm3746, %v3980, %v3998
        %v4000 = vsel %vm3748, %v3984, %v3999
        %v4001 = vsel %vm3750, %v3988, %v4000
        %v4002 = vsel %vm3752, %v3992, %v4001
        %v4003 = vsel %vm3754, %v3996, %v4002
        %v4004 = vsel %vm2278, %v4003, 0
        %4006 = vmatprep.subr.mxu0 0.0
        %4007 = vmatpush1.msra.mxu0 %v3957
        %4008 = vmatprep.subr.mxu0 0.0
        %4009 = vmatpush1.msra.mxu0 %v3958
        %4010 = vmatprep.subr.mxu0 0.0
        %4011 = vmatpush1.msra.mxu0 %v3959
        %4012 = vmatprep.subr.mxu0 0.0
        %4013 = vmatpush1.msra.mxu0 %v3960
        %4014 = vmatprep.subr.mxu0 0.0
        %4015 = vmatpush1.msra.mxu0 %v3961
        %4016 = vmatprep.subr.mxu0 0.0
        %4017 = vmatpush1.msra.mxu0 %v3962
        %4018 = vmatprep.subr.mxu0 0.0
        %4019 = vmatpush1.msra.mxu0 %v3963
        %4020 = vmatprep.subr.mxu0 0.0
        %4021 = vmatpush1.msra.mxu0 %v3964
        %4022 = vmatprep.subr.mxu0 0.0
        %4023 = vmatpush1.msra.mxu0 0.0
        %4024 = vmatprep.subr.mxu0 0.0
        %4025 = vmatpush1.msra.mxu0 0.0
        %4026 = vmatprep.subr.mxu0 0.0
        %4027 = vmatpush1.msra.mxu0 0.0
        %4028 = vmatprep.subr.mxu0 0.0
        %4029 = vmatpush1.msra.mxu0 0.0
        %4030 = vmatprep.subr.mxu0 0.0
        %4031 = vmatpush1.msra.mxu0 0.0
        %4032 = vmatprep.subr.mxu0 0.0
        %4033 = vmatpush1.msra.mxu0 0.0
        %4034 = vmatprep.subr.mxu0 0.0
        %4035 = vmatpush1.msra.mxu0 0.0
        %4036 = vmatprep.subr.mxu0 0.0
        %4037 = vmatpush1.msra.mxu0 0.0
        %4038 = vmatprep.subr.mxu0 0.0
        %4039 = vmatpush1.msra.mxu0 0.0
        %4040 = vmatprep.subr.mxu0 0.0
        %4041 = vmatpush1.msra.mxu0 0.0
        %4042 = vmatprep.subr.mxu0 0.0
        %4043 = vmatpush1.msra.mxu0 0.0
        %4044 = vmatprep.subr.mxu0 0.0
        %4045 = vmatpush1.msra.mxu0 0.0
        %4046 = vmatprep.subr.mxu0 0.0
        %4047 = vmatpush1.msra.mxu0 0.0
        %4048 = vmatprep.subr.mxu0 0.0
        %4049 = vmatpush1.msra.mxu0 0.0
        %4050 = vmatprep.subr.mxu0 0.0
        %4051 = vmatpush1.msra.mxu0 0.0
        %4052 = vmatprep.subr.mxu0 0.0
        %4053 = vmatpush1.msra.mxu0 0.0
        %4054 = vmatprep.subr.mxu0 0.0
        %4055 = vmatpush1.msra.mxu0 0.0
        %4056 = vmatprep.subr.mxu0 0.0
        %4057 = vmatpush1.msra.mxu0 0.0
        %4058 = vmatprep.subr.mxu0 0.0
        %4059 = vmatpush1.msra.mxu0 0.0
        %4060 = vmatprep.subr.mxu0 0.0
        %4061 = vmatpush1.msra.mxu0 0.0
        %4062 = vmatprep.subr.mxu0 0.0
        %4063 = vmatpush1.msra.mxu0 0.0
        %4064 = vmatprep.subr.mxu0 0.0
        %4065 = vmatpush1.msra.mxu0 0.0
        %4066 = vmatprep.subr.mxu0 0.0
        %4067 = vmatpush1.msra.mxu0 0.0
        %4068 = vmatprep.subr.mxu0 0.0
        %4069 = vmatpush1.msra.mxu0 0.0
        %4070 = vmatprep.mubr.f32.mxu0 0.0
        %4071 = vmatmul.mubr.f32.gmra.mrb[0].mxu0 %v4004
        %v4072 = vpop.f32.mrb[0].mxu0
        %v4073 = vadd.f32 0.0, %v4072
        %v4074 = vpop.f32.mrb[0].mxu0
        %4075 = vdwg.mxu0
        %v4076 = vadd.f32 %v3955, %v4073
        %s4077 = scalar_lea.vmem %s13, 192
        %v4078 = vld [vmem:[%s4077] sm:$0xff]
        %v4079 = vld [vmem:[%s4077 + $0x8] sm:$0xff]
        %v4080 = vld [vmem:[%s4077 + $0x10] sm:$0xff]
        %v4081 = vld [vmem:[%s4077 + $0x18] sm:$0xff]
        %v4082 = vld [vmem:[%s4077 + $0x20] sm:$0xff]
        %v4083 = vld [vmem:[%s4077 + $0x28] sm:$0xff]
        %v4084 = vld [vmem:[%s4077 + $0x30] sm:$0xff]
        %v4085 = vld [vmem:[%s4077 + $0x38] sm:$0xff]
        %v4086 = vlaneseq
        %v4087 = vshrl.u32 %v4086, 7
        %v4088 = vsub.s32 3, %v4087
        %v4089 = vrot.slane %v3689, %v4088
        %v4090 = vlaneseq
        %v4091 = vshrl.u32 %v4090, 7
        %v4092 = vsub.s32 3, %v4091
        %v4093 = vrot.slane %v3697, %v4092
        %v4094 = vlaneseq
        %v4095 = vshrl.u32 %v4094, 7
        %v4096 = vsub.s32 3, %v4095
        %v4097 = vrot.slane %v3690, %v4096
        %v4098 = vlaneseq
        %v4099 = vshrl.u32 %v4098, 7
        %v4100 = vsub.s32 3, %v4099
        %v4101 = vrot.slane %v3698, %v4100
        %v4102 = vlaneseq
        %v4103 = vshrl.u32 %v4102, 7
        %v4104 = vsub.s32 3, %v4103
        %v4105 = vrot.slane %v3691, %v4104
        %v4106 = vlaneseq
        %v4107 = vshrl.u32 %v4106, 7
        %v4108 = vsub.s32 3, %v4107
        %v4109 = vrot.slane %v3699, %v4108
        %v4110 = vlaneseq
        %v4111 = vshrl.u32 %v4110, 7
        %v4112 = vsub.s32 3, %v4111
        %v4113 = vrot.slane %v3692, %v4112
        %v4114 = vlaneseq
        %v4115 = vshrl.u32 %v4114, 7
        %v4116 = vsub.s32 3, %v4115
        %v4117 = vrot.slane %v3700, %v4116
        %v4118 = vsel %vm3742, %v4093, %v4089
        %v4119 = vsel %vm3744, %v4097, %v4118
        %v4120 = vsel %vm3746, %v4101, %v4119
        %v4121 = vsel %vm3748, %v4105, %v4120
        %v4122 = vsel %vm3750, %v4109, %v4121
        %v4123 = vsel %vm3752, %v4113, %v4122
        %v4124 = vsel %vm3754, %v4117, %v4123
        %v4125 = vsel %vm2278, %v4124, 0
        %4127 = vmatprep.subr.mxu0 0.0
        %4128 = vmatpush1.msra.mxu0 %v4078
        %4129 = vmatprep.subr.mxu0 0.0
        %4130 = vmatpush1.msra.mxu0 %v4079
        %4131 = vmatprep.subr.mxu0 0.0
        %4132 = vmatpush1.msra.mxu0 %v4080
        %4133 = vmatprep.subr.mxu0 0.0
        %4134 = vmatpush1.msra.mxu0 %v4081
        %4135 = vmatprep.subr.mxu0 0.0
        %4136 = vmatpush1.msra.mxu0 %v4082
        %4137 = vmatprep.subr.mxu0 0.0
        %4138 = vmatpush1.msra.mxu0 %v4083
        %4139 = vmatprep.subr.mxu0 0.0
        %4140 = vmatpush1.msra.mxu0 %v4084
        %4141 = vmatprep.subr.mxu0 0.0
        %4142 = vmatpush1.msra.mxu0 %v4085
        %4143 = vmatprep.subr.mxu0 0.0
        %4144 = vmatpush1.msra.mxu0 0.0
        %4145 = vmatprep.subr.mxu0 0.0
        %4146 = vmatpush1.msra.mxu0 0.0
        %4147 = vmatprep.subr.mxu0 0.0
        %4148 = vmatpush1.msra.mxu0 0.0
        %4149 = vmatprep.subr.mxu0 0.0
        %4150 = vmatpush1.msra.mxu0 0.0
        %4151 = vmatprep.subr.mxu0 0.0
        %4152 = vmatpush1.msra.mxu0 0.0
        %4153 = vmatprep.subr.mxu0 0.0
        %4154 = vmatpush1.msra.mxu0 0.0
        %4155 = vmatprep.subr.mxu0 0.0
        %4156 = vmatpush1.msra.mxu0 0.0
        %4157 = vmatprep.subr.mxu0 0.0
        %4158 = vmatpush1.msra.mxu0 0.0
        %4159 = vmatprep.subr.mxu0 0.0
        %4160 = vmatpush1.msra.mxu0 0.0
        %4161 = vmatprep.subr.mxu0 0.0
        %4162 = vmatpush1.msra.mxu0 0.0
        %4163 = vmatprep.subr.mxu0 0.0
        %4164 = vmatpush1.msra.mxu0 0.0
        %4165 = vmatprep.subr.mxu0 0.0
        %4166 = vmatpush1.msra.mxu0 0.0
        %4167 = vmatprep.subr.mxu0 0.0
        %4168 = vmatpush1.msra.mxu0 0.0
        %4169 = vmatprep.subr.mxu0 0.0
        %4170 = vmatpush1.msra.mxu0 0.0
        %4171 = vmatprep.subr.mxu0 0.0
        %4172 = vmatpush1.msra.mxu0 0.0
        %4173 = vmatprep.subr.mxu0 0.0
        %4174 = vmatpush1.msra.mxu0 0.0
        %4175 = vmatprep.subr.mxu0 0.0
        %4176 = vmatpush1.msra.mxu0 0.0
        %4177 = vmatprep.subr.mxu0 0.0
        %4178 = vmatpush1.msra.mxu0 0.0
        %4179 = vmatprep.subr.mxu0 0.0
        %4180 = vmatpush1.msra.mxu0 0.0
        %4181 = vmatprep.subr.mxu0 0.0
        %4182 = vmatpush1.msra.mxu0 0.0
        %4183 = vmatprep.subr.mxu0 0.0
        %4184 = vmatpush1.msra.mxu0 0.0
        %4185 = vmatprep.subr.mxu0 0.0
        %4186 = vmatpush1.msra.mxu0 0.0
        %4187 = vmatprep.subr.mxu0 0.0
        %4188 = vmatpush1.msra.mxu0 0.0
        %4189 = vmatprep.subr.mxu0 0.0
        %4190 = vmatpush1.msra.mxu0 0.0
        %4191 = vmatprep.mubr.f32.mxu0 0.0
        %4192 = vmatmul.mubr.f32.gmra.mrb[0].mxu0 %v4125
        %v4193 = vpop.f32.mrb[0].mxu0
        %v4194 = vadd.f32 0.0, %v4193
        %v4195 = vpop.f32.mrb[0].mxu0
        %4196 = vdwg.mxu0
        %v4197 = vadd.f32 %v4076, %v4194
        %v4198 = vmax.f32 %v4197, 0.0
        %v4199 = vld [vmem:[%s15] sm:$0xff]
        %v4200 = vld [vmem:[%s15 + $0x8] sm:$0xff]
        %v4201 = vld [vmem:[%s15 + $0x10] sm:$0xff]
        %v4202 = vld [vmem:[%s15 + $0x18] sm:$0xff]
        %v4203 = vld [vmem:[%s15 + $0x20] sm:$0xff]
        %v4204 = vld [vmem:[%s15 + $0x28] sm:$0xff]
        %v4205 = vld [vmem:[%s15 + $0x30] sm:$0xff]
        %v4206 = vld [vmem:[%s15 + $0x38] sm:$0xff]
        %v4207 = vld [vmem:[%s15 + $0x40] sm:$0xff]
        %v4208 = vld [vmem:[%s15 + $0x48] sm:$0xff]
        %v4209 = vld [vmem:[%s15 + $0x50] sm:$0xff]
        %v4210 = vld [vmem:[%s15 + $0x58] sm:$0xff]
        %v4211 = vld [vmem:[%s15 + $0x60] sm:$0xff]
        %v4212 = vld [vmem:[%s15 + $0x68] sm:$0xff]
        %v4213 = vld [vmem:[%s15 + $0x70] sm:$0xff]
        %v4214 = vld [vmem:[%s16] sm:$0x1]
        %v4216 = vlaneseq
        %v4217 = vshrl.u32 %v4216, 7
        %v4218 = vsub.s32 0, %v4217
        %v4219 = vrot.slane %v4214, %v4218
        %vm4221 = vcmask 982016
        %v4223 = vsel %vm4221, %v4198, 0
        %4225 = vmatprep.subr.mxu0 0.0
        %4226 = vmatpush1.msra.mxu0 %v4199
        %4227 = vmatprep.subr.mxu0 0.0
        %4228 = vmatpush1.msra.mxu0 %v4200
        %4229 = vmatprep.subr.mxu0 0.0
        %4230 = vmatpush1.msra.mxu0 %v4201
        %4231 = vmatprep.subr.mxu0 0.0
        %4232 = vmatpush1.msra.mxu0 %v4202
        %4233 = vmatprep.subr.mxu0 0.0
        %4234 = vmatpush1.msra.mxu0 %v4203
        %4235 = vmatprep.subr.mxu0 0.0
        %4236 = vmatpush1.msra.mxu0 %v4204
        %4237 = vmatprep.subr.mxu0 0.0
        %4238 = vmatpush1.msra.mxu0 %v4205
        %4239 = vmatprep.subr.mxu0 0.0
        %4240 = vmatpush1.msra.mxu0 %v4206
        %4241 = vmatprep.subr.mxu0 0.0
        %4242 = vmatpush1.msra.mxu0 %v4207
        %4243 = vmatprep.subr.mxu0 0.0
        %4244 = vmatpush1.msra.mxu0 %v4208
        %4245 = vmatprep.subr.mxu0 0.0
        %4246 = vmatpush1.msra.mxu0 %v4209
        %4247 = vmatprep.subr.mxu0 0.0
        %4248 = vmatpush1.msra.mxu0 %v4210
        %4249 = vmatprep.subr.mxu0 0.0
        %4250 = vmatpush1.msra.mxu0 %v4211
        %4251 = vmatprep.subr.mxu0 0.0
        %4252 = vmatpush1.msra.mxu0 %v4212
        %4253 = vmatprep.subr.mxu0 0.0
        %4254 = vmatpush1.msra.mxu0 %v4213
        %4255 = vmatprep.subr.mxu0 0.0
        %4256 = vmatpush1.msra.mxu0 0.0
        %4257 = vmatprep.subr.mxu0 0.0
        %4258 = vmatpush1.msra.mxu0 0.0
        %4259 = vmatprep.subr.mxu0 0.0
        %4260 = vmatpush1.msra.mxu0 0.0
        %4261 = vmatprep.subr.mxu0 0.0
        %4262 = vmatpush1.msra.mxu0 0.0
        %4263 = vmatprep.subr.mxu0 0.0
        %4264 = vmatpush1.msra.mxu0 0.0
        %4265 = vmatprep.subr.mxu0 0.0
        %4266 = vmatpush1.msra.mxu0 0.0
        %4267 = vmatprep.subr.mxu0 0.0
        %4268 = vmatpush1.msra.mxu0 0.0
        %4269 = vmatprep.subr.mxu0 0.0
        %4270 = vmatpush1.msra.mxu0 0.0
        %4271 = vmatprep.subr.mxu0 0.0
        %4272 = vmatpush1.msra.mxu0 0.0
        %4273 = vmatprep.subr.mxu0 0.0
        %4274 = vmatpush1.msra.mxu0 0.0
        %4275 = vmatprep.subr.mxu0 0.0
        %4276 = vmatpush1.msra.mxu0 0.0
        %4277 = vmatprep.subr.mxu0 0.0
        %4278 = vmatpush1.msra.mxu0 0.0
        %4279 = vmatprep.subr.mxu0 0.0
        %4280 = vmatpush1.msra.mxu0 0.0
        %4281 = vmatprep.subr.mxu0 0.0
        %4282 = vmatpush1.msra.mxu0 0.0
        %4283 = vmatprep.subr.mxu0 0.0
        %4284 = vmatpush1.msra.mxu0 0.0
        %4285 = vmatprep.subr.mxu0 0.0
        %4286 = vmatpush1.msra.mxu0 0.0
        %4287 = vmatprep.subr.mxu0 0.0
        %4288 = vmatpush1.msra.mxu0 0.0
        %4289 = vmatprep.mubr.f32.mxu0 0.0
        %4290 = vmatmul.mubr.f32.gmra.mrb[0].mxu0 %v4223
        %v4291 = vpop.f32.mrb[0].mxu0
        %v4292 = vadd.f32 %v4219, %v4291
        %v4293 = vpop.f32.mrb[0].mxu0
        %4294 = vdwg.mxu0
        %v4295 = vmax.f32 %v4292, 0.0
        %v4296 = vld [vmem:[#allocation10] sm:$0xff]
        %v4297 = vld [vmem:[#allocation10 + $0x8] sm:$0xff]
        %v4298 = vld [vmem:[#allocation10 + $0x10] sm:$0xff]
        %v4299 = vld [vmem:[#allocation10 + $0x18] sm:$0xff]
        %v4300 = vld [vmem:[#allocation10 + $0x20] sm:$0xff]
        %v4301 = vld [vmem:[#allocation10 + $0x28] sm:$0xff]
        %v4302 = vld [vmem:[#allocation10 + $0x30] sm:$0xff]
        %v4303 = vld [vmem:[#allocation10 + $0x38] sm:$0xff]
        %v4304 = vld [vmem:[#allocation10 + $0x40] sm:$0xff]
        %v4305 = vld [vmem:[#allocation10 + $0x48] sm:$0xff]
        %v4306 = vld [vmem:[#allocation10 + $0x50] sm:$0xf]
        %v4307 = vld [vmem:[%s18] sm:$0x1]
        %v4309 = vlaneseq
        %v4310 = vshrl.u32 %v4309, 7
        %v4311 = vsub.s32 0, %v4310
        %v4312 = vrot.slane %v4307, %v4311
        %vm4314 = vcmask 687104
        %v4316 = vsel %vm4314, %v4295, 0
        %v4319 = vsel %vm1487, %v4306, 0
        %4321 = vmatprep.subr.mxu0 0.0
        %4322 = vmatpush1.msra.mxu0 %v4296
        %4323 = vmatprep.subr.mxu0 0.0
        %4324 = vmatpush1.msra.mxu0 %v4297
        %4325 = vmatprep.subr.mxu0 0.0
        %4326 = vmatpush1.msra.mxu0 %v4298
        %4327 = vmatprep.subr.mxu0 0.0
        %4328 = vmatpush1.msra.mxu0 %v4299
        %4329 = vmatprep.subr.mxu0 0.0
        %4330 = vmatpush1.msra.mxu0 %v4300
        %4331 = vmatprep.subr.mxu0 0.0
        %4332 = vmatpush1.msra.mxu0 %v4301
        %4333 = vmatprep.subr.mxu0 0.0
        %4334 = vmatpush1.msra.mxu0 %v4302
        %4335 = vmatprep.subr.mxu0 0.0
        %4336 = vmatpush1.msra.mxu0 %v4303
        %4337 = vmatprep.subr.mxu0 0.0
        %4338 = vmatpush1.msra.mxu0 %v4304
        %4339 = vmatprep.subr.mxu0 0.0
        %4340 = vmatpush1.msra.mxu0 %v4305
        %4341 = vmatprep.subr.mxu0 0.0
        %4342 = vmatpush1.msra.mxu0 %v4319
        %4343 = vmatprep.subr.mxu0 0.0
        %4344 = vmatpush1.msra.mxu0 0.0
        %4345 = vmatprep.subr.mxu0 0.0
        %4346 = vmatpush1.msra.mxu0 0.0
        %4347 = vmatprep.subr.mxu0 0.0
        %4348 = vmatpush1.msra.mxu0 0.0
        %4349 = vmatprep.subr.mxu0 0.0
        %4350 = vmatpush1.msra.mxu0 0.0
        %4351 = vmatprep.subr.mxu0 0.0
        %4352 = vmatpush1.msra.mxu0 0.0
        %4353 = vmatprep.subr.mxu0 0.0
        %4354 = vmatpush1.msra.mxu0 0.0
        %4355 = vmatprep.subr.mxu0 0.0
        %4356 = vmatpush1.msra.mxu0 0.0
        %4357 = vmatprep.subr.mxu0 0.0
        %4358 = vmatpush1.msra.mxu0 0.0
        %4359 = vmatprep.subr.mxu0 0.0
        %4360 = vmatpush1.msra.mxu0 0.0
        %4361 = vmatprep.subr.mxu0 0.0
        %4362 = vmatpush1.msra.mxu0 0.0
        %4363 = vmatprep.subr.mxu0 0.0
        %4364 = vmatpush1.msra.mxu0 0.0
        %4365 = vmatprep.subr.mxu0 0.0
        %4366 = vmatpush1.msra.mxu0 0.0
        %4367 = vmatprep.subr.mxu0 0.0
        %4368 = vmatpush1.msra.mxu0 0.0
        %4369 = vmatprep.subr.mxu0 0.0
        %4370 = vmatpush1.msra.mxu0 0.0
        %4371 = vmatprep.subr.mxu0 0.0
        %4372 = vmatpush1.msra.mxu0 0.0
        %4373 = vmatprep.subr.mxu0 0.0
        %4374 = vmatpush1.msra.mxu0 0.0
        %4375 = vmatprep.subr.mxu0 0.0
        %4376 = vmatpush1.msra.mxu0 0.0
        %4377 = vmatprep.subr.mxu0 0.0
        %4378 = vmatpush1.msra.mxu0 0.0
        %4379 = vmatprep.subr.mxu0 0.0
        %4380 = vmatpush1.msra.mxu0 0.0
        %4381 = vmatprep.subr.mxu0 0.0
        %4382 = vmatpush1.msra.mxu0 0.0
        %4383 = vmatprep.subr.mxu0 0.0
        %4384 = vmatpush1.msra.mxu0 0.0
        %4385 = vmatprep.mubr.f32.mxu0 0.0
        %4386 = vmatmul.mubr.f32.gmra.mrb[0].mxu0 %v4316
        %v4387 = vpop.f32.mrb[0].mxu0
        %v4388 = vadd.f32 %v4312, %v4387
        %v4389 = vpop.f32.mrb[0].mxu0
        %4390 = vdwg.mxu0
        %4391 = vst [vmem:[%s657] sm:$0xff] %v4388
        %s4392 = sand.u32 %s448, 1
        %s4393 = scalar_lea.sflag [#allocation6], %s4392
        %s4394 = sand.u32 %s448, 1
        %s4395 = smul.addr %s4394, 8
        %s4396 = scalar_lea.vmem [#allocation12], %s4395
        // Predicated region
        $region113: #{lenet_forward.1} parent=95 // pred_check
          %p4397 = pneg %p458
        $region114: #{lenet_forward.1} parent=95 // pred_check_branch
          %4399 = sbr.rel (%p4397) target = $region116
        $region115: #{lenet_forward.1} parent=95 // pred_region
          %s4401 = ssub.s32 128, 128
          %4402 = vsyncadd %s4393, %s4401
          %s4403 = smul.addr %s36, 128
          %s4404 = scalar_lea.hbm %s19, %s4403
          %s4406 = sshll.u32 %s4396, 4
          %s4407 = int_to_ptr.vmem [resolvable:$true] %s4406
          %4409 = dma.vmem_to_hbm [thread:$0]  %s4407, 128, %s4404, %s4393
        $region116: #{lenet_forward.1} parent=95 // pred_fallthru
          _
      $region96: #{lenet_forward.1} parent=5 // pred_fallthru
        _
      %p4410 = scmp.le.s32.totalorder 2, %s31
      // Predicated region
      $region117: #{lenet_forward.1} parent=5 // pred_check
        %p4411 = pneg %p4410
      $region118: #{lenet_forward.1} parent=5 // pred_check_branch
        %4413 = sbr.rel (%p4411) target = $region120
      $region119: #{lenet_forward.1} parent=5 // pred_region
        %s4414 = ssub.s32 %s31, 2
        // Predicated region
        $region121: #{lenet_forward.1} parent=119 // pred_check
          %p4415 = pneg %p464
        $region122: #{lenet_forward.1} parent=119 // pred_check_branch
          %4417 = sbr.rel (%p4415) target = $region124
        $region123: #{lenet_forward.1} parent=119 // pred_region
          %s4418 = sand.u32 %s449, 1
          %s4419 = scalar_lea.sflag [#allocation6], %s4418
          %s4420 = sand.u32 %s449, 1
          %s4421 = smul.addr %s4420, 8
          %s4422 = scalar_lea.vmem [#allocation12], %s4421
          %4423 = dma.done %s4419, 128
        $region124: #{lenet_forward.1} parent=119 // pred_fallthru
          _
      $region120: #{lenet_forward.1} parent=5 // pred_fallthru
        _
    $region6: #{lenet_forward.1} parent=1 // loop_footer
      %s35 = sadd.s32 1, %s31
    $region7: #{lenet_forward.1} parent=1 // loop_footer_branch
      %30 = sbr.rel target = $region3
    $region8: #{lenet_forward.1} parent=1 // loop_exit
      _
    %4424 = vsyncpa [#allocation5], 1
    %s4425 = scalar_lea.sflag [#allocation5], 1
    %4426 = vsyncpa %s4425, 1
    %4427 = vsyncpa [#allocation8], 1
    %4428 = vsyncpa [#allocation11], 1
    %4429 = vsyncpa [#allocation6], 1
    %s4430 = scalar_lea.sflag [#allocation6], 1
    %4431 = vsyncpa %s4430, 1

</llo_original>
